<compile_context>
chip_gen: v7x
topology: tpu7x:2x2x1
jax: 0.10.0
libtpu: 0.0.40
codegen_flags: <defaults>
</compile_context>

<pallas_src>
import functools

import jax
import jax.numpy as jnp
from jax import lax
from jax.experimental import pallas as pl
from jax.experimental.pallas import tpu as pltpu

BN_EPS = 1e-5

_PHASES = ((0, 0), (0, 1), (1, 0), (1, 1))      # (row parity, col parity)
# conv2 (k=3, stride=2, pad=1) tap -> (parity phase, slice start) into the
# 9x9 zero-top/left-padded phase buffers of x1:
#   di=0 reads phase 1 shifted up/left by one (zero border), di=1 reads
#   phase 0, di=2 reads phase 1.
_TAP_PHASE = (1, 0, 1)
_TAP_START = (0, 1, 1)


# ----------------------------------------------------------------------------
# In-kernel helpers
# ----------------------------------------------------------------------------
def _mish(y):
    # mish(y) = y * tanh(softplus(y)); tanh(log(u)) = (u^2-1)/(u^2+1), u=1+e^y.
    # One EUP exp + one approx reciprocal instead of exp+log+tanh.
    u = 1.0 + jnp.exp(jnp.minimum(y, 20.0))      # clamp: for y>20 mish(y)≈y
    u2 = u * u
    return y * (u2 - 1.0) * pl.reciprocal(u2 + 1.0, approx=True)


def _downsample1_kernel(cols1_ref, w1_ref, b1_ref, w2_ref, b2_ref,
                        w34_ref, b34_ref, w5_ref, b5_ref, w6_ref, b6_ref,
                        w7_ref, b7_ref, w8a_ref, w8b_ref, b8_ref,
                        o_ref, x1ph_ref, x5p_ref):
    f32 = jnp.float32
    hw = o_ref.shape[1]                 # spatial positions after conv2 (8*8)
    s = x5p_ref.shape[0] - 2            # output spatial side (8)
    c1 = w1_ref.shape[1]                # 32
    c2 = w2_ref.shape[2]                # 64
    c5 = w5_ref.shape[1]                # 32
    c6 = w6_ref.shape[2]                # 64
    half = w34_ref.shape[1] // 2        # 64

    # Padded scratch borders must read as zero (scratch is not auto-zeroed).
    x1ph_ref[...] = jnp.zeros_like(x1ph_ref)
    x5p_ref[...] = jnp.zeros_like(x5p_ref)

    # ---- conv1: 3x3 s1, 3->32.  One K=27 matmul per output parity phase,
    # stored phase-major so conv2's stride-2 taps are contiguous slices. ----
    b1 = b1_ref[...]
    for ph in range(4):
        y = jnp.dot(cols1_ref[0, ph], w1_ref[...], preferred_element_type=f32)
        x1 = _mish(y + b1)                                      # (hw, c1)
        x1ph_ref[ph, 1:s + 1, 1:s + 1, :] = x1.reshape(s, s, c1)

    # ---- conv2: 3x3 s2, 32->64 as 9 shifted dots over the parity phases ----
    acc = jnp.zeros((hw, c2), f32)
    for di in range(3):
        for dj in range(3):
            ph = 2 * _TAP_PHASE[di] + _TAP_PHASE[dj]
            r0, c0 = _TAP_START[di], _TAP_START[dj]
            slab = x1ph_ref[ph, r0:r0 + s, c0:c0 + s, :]        # (s, s, c1)
            acc = acc + jnp.dot(slab.reshape(hw, c1), w2_ref[3 * di + dj],
                                preferred_element_type=f32)
    x2 = _mish(acc + b2_ref[...])                               # (hw, 64)

    # ---- conv3 + conv4 fused: one lane-dense 64->128 1x1 matmul ----
    y34 = _mish(jnp.dot(x2, w34_ref[...], preferred_element_type=f32)
                + b34_ref[...])                                 # (hw, 128)
    x3 = y34[:, :half]
    x4 = y34[:, half:]

    # ---- conv5: 1x1, 64->32 ----
    x5 = _mish(jnp.dot(x4, w5_ref[...], preferred_element_type=f32)
               + b5_ref[...])                                   # (hw, 32)

    # ---- conv6: 3x3 s1, 32->64 (9 shifted dots on padded scratch) + x4 ----
    x5p_ref[1:s + 1, 1:s + 1, :] = x5.reshape(s, s, c5)
    acc6 = jnp.zeros((hw, c6), f32)
    for di in range(3):
        for dj in range(3):
            slab = x5p_ref[di:di + s, dj:dj + s, :]             # (s, s, c5)
            acc6 = acc6 + jnp.dot(slab.reshape(hw, c5), w6_ref[3 * di + dj],
                                  preferred_element_type=f32)
    x6 = _mish(acc6 + b6_ref[...]) + x4                         # residual

    # ---- conv7: 1x1, 64->64 ----
    x7 = _mish(jnp.dot(x6, w7_ref[...], preferred_element_type=f32)
               + b7_ref[...])

    # ---- conv8: 1x1 on cat([x7, x3]) expressed as a split dot ----
    y8 = (jnp.dot(x7, w8a_ref[...], preferred_element_type=f32)
          + jnp.dot(x3, w8b_ref[...], preferred_element_type=f32)
          + b8_ref[...])
    o_ref[0] = _mish(y8).astype(o_ref.dtype)


# ----------------------------------------------------------------------------
# Wrapper-side argument preparation (all tiny XLA glue on the raw input)
# ----------------------------------------------------------------------------
def _fold_bn(p):
    """Fold eval-mode BN scale into conv weights; return (w_eff, bias)."""
    return p["w"] * p["scale"], p["bias"]


def _conv1_phase_cols(x_nhwc):
    """Patch gather for conv1, ordered per output parity phase.

    Returns (N, 4, ho*wo, 9*Cin); phases in _PHASES order, rows in (i, j)
    row-major order over the stride-2 sub-grid, channels ordered (di, dj, cin)
    to match w1.reshape(9*Cin, Cout).
    """
    n, h, w, cin = x_nhwc.shape
    ho, wo = h // 2, w // 2
    xp = jnp.pad(x_nhwc, ((0, 0), (1, 1), (1, 1), (0, 0)))
    phases = []
    for (p, q) in _PHASES:
        taps = [xp[:, p + di:p + di + 2 * ho:2, q + dj:q + dj + 2 * wo:2, :]
                for di in range(3) for dj in range(3)]
        phases.append(
            jnp.concatenate(taps, axis=-1).reshape(n, ho * wo, 9 * cin))
    return jnp.stack(phases, axis=1)


def _prep_kernel_args(x_nhwc, params):
    cols1 = _conv1_phase_cols(x_nhwc)                           # (N,4,64,27)

    w1, b1 = _fold_bn(params["conv1"]); w1 = w1.reshape(-1, w1.shape[-1])
    w2, b2 = _fold_bn(params["conv2"]); w2 = w2.reshape(9, 32, 64)
    w3, b3 = _fold_bn(params["conv3"])
    w4, b4 = _fold_bn(params["conv4"])
    w34 = jnp.concatenate([w3.reshape(64, 64), w4.reshape(64, 64)], axis=1)
    b34 = jnp.concatenate([b3, b4])
    w5, b5 = _fold_bn(params["conv5"]); w5 = w5.reshape(64, 32)
    w6, b6 = _fold_bn(params["conv6"]); w6 = w6.reshape(9, 32, 64)
    w7, b7 = _fold_bn(params["conv7"]); w7 = w7.reshape(64, 64)
    w8, b8 = _fold_bn(params["conv8"]); w8 = w8.reshape(128, 64)
    w8a, w8b = w8[:64], w8[64:]

    def row(v):
        return v.reshape(1, -1)

    return (cols1, w1, row(b1), w2, row(b2), w34, row(b34), w5, row(b5),
            w6, row(b6), w7, row(b7), w8a, w8b, row(b8))


# ----------------------------------------------------------------------------
# DownSample1 forward: one fused pallas_call
# ----------------------------------------------------------------------------
@jax.jit
def downsample1_forward(x_nchw, params):
    x = jnp.transpose(x_nchw, (0, 2, 3, 1)).astype(jnp.float32)  # NCHW->NHWC
    n, h, w, _ = x.shape
    ho, wo = h // 2, w // 2
    args = _prep_kernel_args(x, params)

    def full_spec(a):
        nd = a.ndim
        return pl.BlockSpec(a.shape, lambda b, _nd=nd: (0,) * _nd)

    in_specs = [pl.BlockSpec((1, 4, ho * wo, args[0].shape[-1]),
                             lambda b: (b, 0, 0, 0))]
    in_specs += [full_spec(a) for a in args[1:]]

    out = pl.pallas_call(
        _downsample1_kernel,
        out_shape=jax.ShapeDtypeStruct((n, ho * wo, 64), jnp.float32),
        grid=(n,),
        in_specs=in_specs,
        out_specs=pl.BlockSpec((1, ho * wo, 64), lambda b: (b, 0, 0)),
        scratch_shapes=[
            pltpu.VMEM((4, ho + 1, wo + 1, 32), jnp.float32),  # x1 parity phases
            pltpu.VMEM((ho + 2, wo + 2, 32), jnp.float32),     # padded x5
        ],
        compiler_params=pltpu.CompilerParams(
            dimension_semantics=("parallel",)),
    )(*args)

    out = out.reshape(n, ho, wo, 64)
    return jnp.transpose(out, (0, 3, 1, 2))                      # NHWC->NCHW


# ----------------------------------------------------------------------------
# Deterministic synthetic parameters (BN in eval mode, folded to scale/bias)
# ----------------------------------------------------------------------------
LAYER_DEFS = {
    "conv1": (3, 32, 3, 1),
    "conv2": (32, 64, 3, 2),
    "conv3": (64, 64, 1, 1),
    "conv4": (64, 64, 1, 1),
    "conv5": (64, 32, 1, 1),
    "conv6": (32, 64, 3, 1),
    "conv7": (64, 64, 1, 1),
    "conv8": (128, 64, 1, 1),
}


def init_layer(key, cin, cout, k):
    kw, kg, kb, km, kv = jax.random.split(key, 5)
    w = jax.random.normal(kw, (k, k, cin, cout), jnp.float32) * 0.05
    gamma = 1.0 + 0.1 * jax.random.normal(kg, (cout,), jnp.float32)
    beta = 0.1 * jax.random.normal(kb, (cout,), jnp.float32)
    mean = 0.1 * jax.random.normal(km, (cout,), jnp.float32)
    var = jax.random.uniform(kv, (cout,), jnp.float32, 0.5, 1.5)
    scale = gamma / jnp.sqrt(var + BN_EPS)
    bias = beta - mean * scale
    return {"w": w, "scale": scale, "bias": bias}


def init_params(seed=42):
    base = jax.random.PRNGKey(seed)
    return {name: init_layer(jax.random.fold_in(base, i), cin, cout, k)
            for i, (name, (cin, cout, k, _)) in enumerate(LAYER_DEFS.items())}


# ----------------------------------------------------------------------------
# Pure-JAX reference (correctness check)
# ----------------------------------------------------------------------------
def _ref_layer(x_nhwc, p, k, stride, residual=None):
    pad = (k - 1) // 2
    y = lax.conv_general_dilated(
        x_nhwc, p["w"], (stride, stride), [(pad, pad), (pad, pad)],
        dimension_numbers=("NHWC", "HWIO", "NHWC"))
    y = y * p["scale"] + p["bias"]
    y = y * jnp.tanh(jax.nn.softplus(y))
    return y if residual is None else y + residual


def downsample1_ref(x_nchw, params):
    x = jnp.transpose(x_nchw, (0, 2, 3, 1))
    x1 = _ref_layer(x, params["conv1"], 3, 1)
    x2 = _ref_layer(x1, params["conv2"], 3, 2)
    x3 = _ref_layer(x2, params["conv3"], 1, 1)
    x4 = _ref_layer(x2, params["conv4"], 1, 1)
    x5 = _ref_layer(x4, params["conv5"], 1, 1)
    x6 = _ref_layer(x5, params["conv6"], 3, 1, residual=x4)
    x7 = _ref_layer(x6, params["conv7"], 1, 1)
    x7 = jnp.concatenate([x7, x3], axis=-1)
    x8 = _ref_layer(x7, params["conv8"], 1, 1)
    return jnp.transpose(x8, (0, 3, 1, 2))


if __name__ == "__main__":
    key = jax.random.PRNGKey(0)
    x = jax.random.normal(key, (2, 3, 16, 16), jnp.float32)   # NCHW (PyTorch)
    params = init_params(seed=42)

    out = jax.block_until_ready(downsample1_forward(x, params))
    assert out.shape == (2, 64, 8, 8), out.shape

    ref = jax.block_until_ready(downsample1_ref(x, params))
    err = float(jnp.max(jnp.abs(out - ref)))
    # Tolerance covers the approx-reciprocal mish (rel err ~2^-12 per layer).
    tol = 1e-2 + 1e-2 * float(jnp.max(jnp.abs(ref)))
    assert err <= tol, f"max abs error {err} > tol {tol}"

    print("KERNEL_OK")
</pallas_src>

<mosaic_0001>
module attributes {stable_mosaic.version = 11 : i64} {
  func.func @_downsample1_kernel(%arg0: i32, %arg1: memref<1x4x64x27xf32, #tpu.memory_space<vmem>>, %arg2: memref<27x32xf32, #tpu.memory_space<vmem>>, %arg3: memref<1x32xf32, #tpu.memory_space<vmem>>, %arg4: memref<9x32x64xf32, #tpu.memory_space<vmem>>, %arg5: memref<1x64xf32, #tpu.memory_space<vmem>>, %arg6: memref<64x128xf32, #tpu.memory_space<vmem>>, %arg7: memref<1x128xf32, #tpu.memory_space<vmem>>, %arg8: memref<64x32xf32, #tpu.memory_space<vmem>>, %arg9: memref<1x32xf32, #tpu.memory_space<vmem>>, %arg10: memref<9x32x64xf32, #tpu.memory_space<vmem>>, %arg11: memref<1x64xf32, #tpu.memory_space<vmem>>, %arg12: memref<64x64xf32, #tpu.memory_space<vmem>>, %arg13: memref<1x64xf32, #tpu.memory_space<vmem>>, %arg14: memref<64x64xf32, #tpu.memory_space<vmem>>, %arg15: memref<64x64xf32, #tpu.memory_space<vmem>>, %arg16: memref<1x64xf32, #tpu.memory_space<vmem>>, %arg17: memref<1x64x64xf32, #tpu.memory_space<vmem>>, %arg18: memref<4x9x9x32xf32, #tpu.memory_space<vmem>>, %arg19: memref<10x10x32xf32, #tpu.memory_space<vmem>>) attributes {dimension_semantics = [#tpu.dimension_semantics<parallel>], iteration_bounds = array<i64: 2>, scalar_prefetch = 0 : i64, scratch_operands = 2 : i64, tpu.core_type = #tpu.core_type<tc>, window_params = [{transform_indices = @transform_0, window_bounds = array<i64: 1, 4, 64, 27>}, {pipeline_mode = #tpu.pipeline_mode<synchronous>, transform_indices = @transform_1, window_bounds = array<i64: 27, 32>}, {pipeline_mode = #tpu.pipeline_mode<synchronous>, transform_indices = @transform_2, window_bounds = array<i64: 1, 32>}, {pipeline_mode = #tpu.pipeline_mode<synchronous>, transform_indices = @transform_3, window_bounds = array<i64: 9, 32, 64>}, {pipeline_mode = #tpu.pipeline_mode<synchronous>, transform_indices = @transform_4, window_bounds = array<i64: 1, 64>}, {pipeline_mode = #tpu.pipeline_mode<synchronous>, transform_indices = @transform_5, window_bounds = array<i64: 64, 128>}, {pipeline_mode = #tpu.pipeline_mode<synchronous>, transform_indices = @transform_6, window_bounds = array<i64: 1, 128>}, {pipeline_mode = #tpu.pipeline_mode<synchronous>, transform_indices = @transform_7, window_bounds = array<i64: 64, 32>}, {pipeline_mode = #tpu.pipeline_mode<synchronous>, transform_indices = @transform_8, window_bounds = array<i64: 1, 32>}, {pipeline_mode = #tpu.pipeline_mode<synchronous>, transform_indices = @transform_9, window_bounds = array<i64: 9, 32, 64>}, {pipeline_mode = #tpu.pipeline_mode<synchronous>, transform_indices = @transform_10, window_bounds = array<i64: 1, 64>}, {pipeline_mode = #tpu.pipeline_mode<synchronous>, transform_indices = @transform_11, window_bounds = array<i64: 64, 64>}, {pipeline_mode = #tpu.pipeline_mode<synchronous>, transform_indices = @transform_12, window_bounds = array<i64: 1, 64>}, {pipeline_mode = #tpu.pipeline_mode<synchronous>, transform_indices = @transform_13, window_bounds = array<i64: 64, 64>}, {pipeline_mode = #tpu.pipeline_mode<synchronous>, transform_indices = @transform_14, window_bounds = array<i64: 64, 64>}, {pipeline_mode = #tpu.pipeline_mode<synchronous>, transform_indices = @transform_15, window_bounds = array<i64: 1, 64>}, {transform_indices = @transform_16, window_bounds = array<i64: 1, 64, 64>}]} {
    %cst = arith.constant 0.000000e+00 : f32
    %0 = vector.broadcast %cst : f32 to vector<4x9x9x32xf32>
    %c0 = arith.constant 0 : index
    %c0_0 = arith.constant 0 : index
    %c0_1 = arith.constant 0 : index
    %c0_2 = arith.constant 0 : index
    %1 = vector.load %arg18[%c0, %c0_0, %c0_1, %c0_2] : memref<4x9x9x32xf32, #tpu.memory_space<vmem>>, vector<4x9x9x32xf32>
    tpu.vector_store %arg18[%c0, %c0_0, %c0_1, %c0_2], %0 {strides = array<i32>} : memref<4x9x9x32xf32, #tpu.memory_space<vmem>>, vector<4x9x9x32xf32>,
    %cst_3 = arith.constant 0.000000e+00 : f32
    %2 = vector.broadcast %cst_3 : f32 to vector<10x10x32xf32>
    %c0_4 = arith.constant 0 : index
    %c0_5 = arith.constant 0 : index
    %c0_6 = arith.constant 0 : index
    %3 = vector.load %arg19[%c0_4, %c0_5, %c0_6] : memref<10x10x32xf32, #tpu.memory_space<vmem>>, vector<10x10x32xf32>
    tpu.vector_store %arg19[%c0_4, %c0_5, %c0_6], %2 {strides = array<i32>} : memref<10x10x32xf32, #tpu.memory_space<vmem>>, vector<10x10x32xf32>,
    %c0_7 = arith.constant 0 : index
    %c0_8 = arith.constant 0 : index
    %4 = vector.load %arg3[%c0_7, %c0_8] : memref<1x32xf32, #tpu.memory_space<vmem>>, vector<1x32xf32>
    %c0_9 = arith.constant 0 : index
    %c0_10 = arith.constant 0 : index
    %c0_11 = arith.constant 0 : index
    %c0_12 = arith.constant 0 : index
    %5 = vector.load %arg1[%c0_9, %c0_10, %c0_11, %c0_12] : memref<1x4x64x27xf32, #tpu.memory_space<vmem>>, vector<1x1x64x27xf32>
    %6 = vector.shape_cast %5 : vector<1x1x64x27xf32> to vector<64x27xf32>
    %c0_13 = arith.constant 0 : index
    %c0_14 = arith.constant 0 : index
    %7 = vector.load %arg2[%c0_13, %c0_14] : memref<27x32xf32, #tpu.memory_space<vmem>>, vector<27x32xf32>
    %cst_15 = arith.constant dense<0.000000e+00> : vector<64x32xf32>
    %8 = tpu.matmul %6, %7, %cst_15 {dimension_numbers = #tpu.dot_dimension_numbers<[1], [0], [0], [1], [0, 0, 1, 1], [], []>} : vector<64x27xf32>, vector<27x32xf32>, vector<64x32xf32> -> vector<64x32xf32>
    %9 = vector.broadcast %4 : vector<1x32xf32> to vector<64x32xf32>
    %10 = arith.addf %8, %9 : vector<64x32xf32>
    %cst_16 = arith.constant 2.000000e+01 : f32
    %11 = vector.broadcast %cst_16 : f32 to vector<64x32xf32>
    %12 = arith.minimumf %10, %11 : vector<64x32xf32>
    %13 = math.exp %12 : vector<64x32xf32>
    %cst_17 = arith.constant 1.000000e+00 : f32
    %14 = vector.broadcast %cst_17 : f32 to vector<64x32xf32>
    %15 = arith.addf %14, %13 : vector<64x32xf32>
    %16 = arith.mulf %15, %15 : vector<64x32xf32>
    %cst_18 = arith.constant 1.000000e+00 : f32
    %17 = vector.broadcast %cst_18 : f32 to vector<64x32xf32>
    %18 = arith.subf %16, %17 : vector<64x32xf32>
    %19 = arith.mulf %10, %18 : vector<64x32xf32>
    %cst_19 = arith.constant 1.000000e+00 : f32
    %20 = vector.broadcast %cst_19 : f32 to vector<64x32xf32>
    %21 = arith.addf %16, %20 : vector<64x32xf32>
    %22 = tpu.reciprocal %21 {approx = true} : vector<64x32xf32> -> vector<64x32xf32>
    %23 = arith.mulf %19, %22 : vector<64x32xf32>
    %24 = vector.shape_cast %23 : vector<64x32xf32> to vector<8x8x32xf32>
    %c0_20 = arith.constant 0 : index
    %c1 = arith.constant 1 : index
    %c1_21 = arith.constant 1 : index
    %c0_22 = arith.constant 0 : index
    %25 = vector.load %arg18[%c0_20, %c1, %c1_21, %c0_22] : memref<4x9x9x32xf32, #tpu.memory_space<vmem>>, vector<1x8x8x32xf32>
    %26 = vector.shape_cast %25 : vector<1x8x8x32xf32> to vector<8x8x32xf32>
    %27 = vector.shape_cast %24 : vector<8x8x32xf32> to vector<1x8x8x32xf32>
    tpu.vector_store %arg18[%c0_20, %c1, %c1_21, %c0_22], %27 {strides = array<i32>} : memref<4x9x9x32xf32, #tpu.memory_space<vmem>>, vector<1x8x8x32xf32>,
    %c0_23 = arith.constant 0 : index
    %c1_24 = arith.constant 1 : index
    %c0_25 = arith.constant 0 : index
    %c0_26 = arith.constant 0 : index
    %28 = vector.load %arg1[%c0_23, %c1_24, %c0_25, %c0_26] : memref<1x4x64x27xf32, #tpu.memory_space<vmem>>, vector<1x1x64x27xf32>
    %29 = vector.shape_cast %28 : vector<1x1x64x27xf32> to vector<64x27xf32>
    %c0_27 = arith.constant 0 : index
    %c0_28 = arith.constant 0 : index
    %30 = vector.load %arg2[%c0_27, %c0_28] : memref<27x32xf32, #tpu.memory_space<vmem>>, vector<27x32xf32>
    %cst_29 = arith.constant dense<0.000000e+00> : vector<64x32xf32>
    %31 = tpu.matmul %29, %30, %cst_29 {dimension_numbers = #tpu.dot_dimension_numbers<[1], [0], [0], [1], [0, 0, 1, 1], [], []>} : vector<64x27xf32>, vector<27x32xf32>, vector<64x32xf32> -> vector<64x32xf32>
    %32 = vector.broadcast %4 : vector<1x32xf32> to vector<64x32xf32>
    %33 = arith.addf %31, %32 : vector<64x32xf32>
    %cst_30 = arith.constant 2.000000e+01 : f32
    %34 = vector.broadcast %cst_30 : f32 to vector<64x32xf32>
    %35 = arith.minimumf %33, %34 : vector<64x32xf32>
    %36 = math.exp %35 : vector<64x32xf32>
    %cst_31 = arith.constant 1.000000e+00 : f32
    %37 = vector.broadcast %cst_31 : f32 to vector<64x32xf32>
    %38 = arith.addf %37, %36 : vector<64x32xf32>
    %39 = arith.mulf %38, %38 : vector<64x32xf32>
    %cst_32 = arith.constant 1.000000e+00 : f32
    %40 = vector.broadcast %cst_32 : f32 to vector<64x32xf32>
    %41 = arith.subf %39, %40 : vector<64x32xf32>
    %42 = arith.mulf %33, %41 : vector<64x32xf32>
    %cst_33 = arith.constant 1.000000e+00 : f32
    %43 = vector.broadcast %cst_33 : f32 to vector<64x32xf32>
    %44 = arith.addf %39, %43 : vector<64x32xf32>
    %45 = tpu.reciprocal %44 {approx = true} : vector<64x32xf32> -> vector<64x32xf32>
    %46 = arith.mulf %42, %45 : vector<64x32xf32>
    %47 = vector.shape_cast %46 : vector<64x32xf32> to vector<8x8x32xf32>
    %c1_34 = arith.constant 1 : index
    %c1_35 = arith.constant 1 : index
    %c1_36 = arith.constant 1 : index
    %c0_37 = arith.constant 0 : index
    %48 = vector.load %arg18[%c1_34, %c1_35, %c1_36, %c0_37] : memref<4x9x9x32xf32, #tpu.memory_space<vmem>>, vector<1x8x8x32xf32>
    %49 = vector.shape_cast %48 : vector<1x8x8x32xf32> to vector<8x8x32xf32>
    %50 = vector.shape_cast %47 : vector<8x8x32xf32> to vector<1x8x8x32xf32>
    tpu.vector_store %arg18[%c1_34, %c1_35, %c1_36, %c0_37], %50 {strides = array<i32>} : memref<4x9x9x32xf32, #tpu.memory_space<vmem>>, vector<1x8x8x32xf32>,
    %c0_38 = arith.constant 0 : index
    %c2 = arith.constant 2 : index
    %c0_39 = arith.constant 0 : index
    %c0_40 = arith.constant 0 : index
    %51 = vector.load %arg1[%c0_38, %c2, %c0_39, %c0_40] : memref<1x4x64x27xf32, #tpu.memory_space<vmem>>, vector<1x1x64x27xf32>
    %52 = vector.shape_cast %51 : vector<1x1x64x27xf32> to vector<64x27xf32>
    %c0_41 = arith.constant 0 : index
    %c0_42 = arith.constant 0 : index
    %53 = vector.load %arg2[%c0_41, %c0_42] : memref<27x32xf32, #tpu.memory_space<vmem>>, vector<27x32xf32>
    %cst_43 = arith.constant dense<0.000000e+00> : vector<64x32xf32>
    %54 = tpu.matmul %52, %53, %cst_43 {dimension_numbers = #tpu.dot_dimension_numbers<[1], [0], [0], [1], [0, 0, 1, 1], [], []>} : vector<64x27xf32>, vector<27x32xf32>, vector<64x32xf32> -> vector<64x32xf32>
    %55 = vector.broadcast %4 : vector<1x32xf32> to vector<64x32xf32>
    %56 = arith.addf %54, %55 : vector<64x32xf32>
    %cst_44 = arith.constant 2.000000e+01 : f32
    %57 = vector.broadcast %cst_44 : f32 to vector<64x32xf32>
    %58 = arith.minimumf %56, %57 : vector<64x32xf32>
    %59 = math.exp %58 : vector<64x32xf32>
    %cst_45 = arith.constant 1.000000e+00 : f32
    %60 = vector.broadcast %cst_45 : f32 to vector<64x32xf32>
    %61 = arith.addf %60, %59 : vector<64x32xf32>
    %62 = arith.mulf %61, %61 : vector<64x32xf32>
    %cst_46 = arith.constant 1.000000e+00 : f32
    %63 = vector.broadcast %cst_46 : f32 to vector<64x32xf32>
    %64 = arith.subf %62, %63 : vector<64x32xf32>
    %65 = arith.mulf %56, %64 : vector<64x32xf32>
    %cst_47 = arith.constant 1.000000e+00 : f32
    %66 = vector.broadcast %cst_47 : f32 to vector<64x32xf32>
    %67 = arith.addf %62, %66 : vector<64x32xf32>
    %68 = tpu.reciprocal %67 {approx = true} : vector<64x32xf32> -> vector<64x32xf32>
    %69 = arith.mulf %65, %68 : vector<64x32xf32>
    %70 = vector.shape_cast %69 : vector<64x32xf32> to vector<8x8x32xf32>
    %c2_48 = arith.constant 2 : index
    %c1_49 = arith.constant 1 : index
    %c1_50 = arith.constant 1 : index
    %c0_51 = arith.constant 0 : index
    %71 = vector.load %arg18[%c2_48, %c1_49, %c1_50, %c0_51] : memref<4x9x9x32xf32, #tpu.memory_space<vmem>>, vector<1x8x8x32xf32>
    %72 = vector.shape_cast %71 : vector<1x8x8x32xf32> to vector<8x8x32xf32>
    %73 = vector.shape_cast %70 : vector<8x8x32xf32> to vector<1x8x8x32xf32>
    tpu.vector_store %arg18[%c2_48, %c1_49, %c1_50, %c0_51], %73 {strides = array<i32>} : memref<4x9x9x32xf32, #tpu.memory_space<vmem>>, vector<1x8x8x32xf32>,
    %c0_52 = arith.constant 0 : index
    %c3 = arith.constant 3 : index
    %c0_53 = arith.constant 0 : index
    %c0_54 = arith.constant 0 : index
    %74 = vector.load %arg1[%c0_52, %c3, %c0_53, %c0_54] : memref<1x4x64x27xf32, #tpu.memory_space<vmem>>, vector<1x1x64x27xf32>
    %75 = vector.shape_cast %74 : vector<1x1x64x27xf32> to vector<64x27xf32>
    %c0_55 = arith.constant 0 : index
    %c0_56 = arith.constant 0 : index
    %76 = vector.load %arg2[%c0_55, %c0_56] : memref<27x32xf32, #tpu.memory_space<vmem>>, vector<27x32xf32>
    %cst_57 = arith.constant dense<0.000000e+00> : vector<64x32xf32>
    %77 = tpu.matmul %75, %76, %cst_57 {dimension_numbers = #tpu.dot_dimension_numbers<[1], [0], [0], [1], [0, 0, 1, 1], [], []>} : vector<64x27xf32>, vector<27x32xf32>, vector<64x32xf32> -> vector<64x32xf32>
    %78 = vector.broadcast %4 : vector<1x32xf32> to vector<64x32xf32>
    %79 = arith.addf %77, %78 : vector<64x32xf32>
    %cst_58 = arith.constant 2.000000e+01 : f32
    %80 = vector.broadcast %cst_58 : f32 to vector<64x32xf32>
    %81 = arith.minimumf %79, %80 : vector<64x32xf32>
    %82 = math.exp %81 : vector<64x32xf32>
    %cst_59 = arith.constant 1.000000e+00 : f32
    %83 = vector.broadcast %cst_59 : f32 to vector<64x32xf32>
    %84 = arith.addf %83, %82 : vector<64x32xf32>
    %85 = arith.mulf %84, %84 : vector<64x32xf32>
    %cst_60 = arith.constant 1.000000e+00 : f32
    %86 = vector.broadcast %cst_60 : f32 to vector<64x32xf32>
    %87 = arith.subf %85, %86 : vector<64x32xf32>
    %88 = arith.mulf %79, %87 : vector<64x32xf32>
    %cst_61 = arith.constant 1.000000e+00 : f32
    %89 = vector.broadcast %cst_61 : f32 to vector<64x32xf32>
    %90 = arith.addf %85, %89 : vector<64x32xf32>
    %91 = tpu.reciprocal %90 {approx = true} : vector<64x32xf32> -> vector<64x32xf32>
    %92 = arith.mulf %88, %91 : vector<64x32xf32>
    %93 = vector.shape_cast %92 : vector<64x32xf32> to vector<8x8x32xf32>
    %c3_62 = arith.constant 3 : index
    %c1_63 = arith.constant 1 : index
    %c1_64 = arith.constant 1 : index
    %c0_65 = arith.constant 0 : index
    %94 = vector.load %arg18[%c3_62, %c1_63, %c1_64, %c0_65] : memref<4x9x9x32xf32, #tpu.memory_space<vmem>>, vector<1x8x8x32xf32>
    %95 = vector.shape_cast %94 : vector<1x8x8x32xf32> to vector<8x8x32xf32>
    %96 = vector.shape_cast %93 : vector<8x8x32xf32> to vector<1x8x8x32xf32>
    tpu.vector_store %arg18[%c3_62, %c1_63, %c1_64, %c0_65], %96 {strides = array<i32>} : memref<4x9x9x32xf32, #tpu.memory_space<vmem>>, vector<1x8x8x32xf32>,
    %cst_66 = arith.constant 0.000000e+00 : f32
    %97 = vector.broadcast %cst_66 : f32 to vector<64x64xf32>
    %c3_67 = arith.constant 3 : index
    %c0_68 = arith.constant 0 : index
    %c0_69 = arith.constant 0 : index
    %c0_70 = arith.constant 0 : index
    %98 = vector.load %arg18[%c3_67, %c0_68, %c0_69, %c0_70] : memref<4x9x9x32xf32, #tpu.memory_space<vmem>>, vector<1x8x8x32xf32>
    %99 = vector.shape_cast %98 : vector<1x8x8x32xf32> to vector<8x8x32xf32>
    %100 = vector.shape_cast %99 : vector<8x8x32xf32> to vector<64x32xf32>
    %c0_71 = arith.constant 0 : index
    %c0_72 = arith.constant 0 : index
    %c0_73 = arith.constant 0 : index
    %101 = vector.load %arg4[%c0_71, %c0_72, %c0_73] : memref<9x32x64xf32, #tpu.memory_space<vmem>>, vector<1x32x64xf32>
    %102 = vector.shape_cast %101 : vector<1x32x64xf32> to vector<32x64xf32>
    %cst_74 = arith.constant dense<0.000000e+00> : vector<64x64xf32>
    %103 = tpu.matmul %100, %102, %cst_74 {dimension_numbers = #tpu.dot_dimension_numbers<[1], [0], [0], [1], [0, 0, 1, 1], [], []>} : vector<64x32xf32>, vector<32x64xf32>, vector<64x64xf32> -> vector<64x64xf32>
    %104 = arith.addf %97, %103 : vector<64x64xf32>
    %c2_75 = arith.constant 2 : index
    %c0_76 = arith.constant 0 : index
    %c1_77 = arith.constant 1 : index
    %c0_78 = arith.constant 0 : index
    %105 = vector.load %arg18[%c2_75, %c0_76, %c1_77, %c0_78] : memref<4x9x9x32xf32, #tpu.memory_space<vmem>>, vector<1x8x8x32xf32>
    %106 = vector.shape_cast %105 : vector<1x8x8x32xf32> to vector<8x8x32xf32>
    %107 = vector.shape_cast %106 : vector<8x8x32xf32> to vector<64x32xf32>
    %c1_79 = arith.constant 1 : index
    %c0_80 = arith.constant 0 : index
    %c0_81 = arith.constant 0 : index
    %108 = vector.load %arg4[%c1_79, %c0_80, %c0_81] : memref<9x32x64xf32, #tpu.memory_space<vmem>>, vector<1x32x64xf32>
    %109 = vector.shape_cast %108 : vector<1x32x64xf32> to vector<32x64xf32>
    %cst_82 = arith.constant dense<0.000000e+00> : vector<64x64xf32>
    %110 = tpu.matmul %107, %109, %cst_82 {dimension_numbers = #tpu.dot_dimension_numbers<[1], [0], [0], [1], [0, 0, 1, 1], [], []>} : vector<64x32xf32>, vector<32x64xf32>, vector<64x64xf32> -> vector<64x64xf32>
    %111 = arith.addf %104, %110 : vector<64x64xf32>
    %c3_83 = arith.constant 3 : index
    %c0_84 = arith.constant 0 : index
    %c1_85 = arith.constant 1 : index
    %c0_86 = arith.constant 0 : index
    %112 = vector.load %arg18[%c3_83, %c0_84, %c1_85, %c0_86] : memref<4x9x9x32xf32, #tpu.memory_space<vmem>>, vector<1x8x8x32xf32>
    %113 = vector.shape_cast %112 : vector<1x8x8x32xf32> to vector<8x8x32xf32>
    %114 = vector.shape_cast %113 : vector<8x8x32xf32> to vector<64x32xf32>
    %c2_87 = arith.constant 2 : index
    %c0_88 = arith.constant 0 : index
    %c0_89 = arith.constant 0 : index
    %115 = vector.load %arg4[%c2_87, %c0_88, %c0_89] : memref<9x32x64xf32, #tpu.memory_space<vmem>>, vector<1x32x64xf32>
    %116 = vector.shape_cast %115 : vector<1x32x64xf32> to vector<32x64xf32>
    %cst_90 = arith.constant dense<0.000000e+00> : vector<64x64xf32>
    %117 = tpu.matmul %114, %116, %cst_90 {dimension_numbers = #tpu.dot_dimension_numbers<[1], [0], [0], [1], [0, 0, 1, 1], [], []>} : vector<64x32xf32>, vector<32x64xf32>, vector<64x64xf32> -> vector<64x64xf32>
    %118 = arith.addf %111, %117 : vector<64x64xf32>
    %c1_91 = arith.constant 1 : index
    %c1_92 = arith.constant 1 : index
    %c0_93 = arith.constant 0 : index
    %c0_94 = arith.constant 0 : index
    %119 = vector.load %arg18[%c1_91, %c1_92, %c0_93, %c0_94] : memref<4x9x9x32xf32, #tpu.memory_space<vmem>>, vector<1x8x8x32xf32>
    %120 = vector.shape_cast %119 : vector<1x8x8x32xf32> to vector<8x8x32xf32>
    %121 = vector.shape_cast %120 : vector<8x8x32xf32> to vector<64x32xf32>
    %c3_95 = arith.constant 3 : index
    %c0_96 = arith.constant 0 : index
    %c0_97 = arith.constant 0 : index
    %122 = vector.load %arg4[%c3_95, %c0_96, %c0_97] : memref<9x32x64xf32, #tpu.memory_space<vmem>>, vector<1x32x64xf32>
    %123 = vector.shape_cast %122 : vector<1x32x64xf32> to vector<32x64xf32>
    %cst_98 = arith.constant dense<0.000000e+00> : vector<64x64xf32>
    %124 = tpu.matmul %121, %123, %cst_98 {dimension_numbers = #tpu.dot_dimension_numbers<[1], [0], [0], [1], [0, 0, 1, 1], [], []>} : vector<64x32xf32>, vector<32x64xf32>, vector<64x64xf32> -> vector<64x64xf32>
    %125 = arith.addf %118, %124 : vector<64x64xf32>
    %c0_99 = arith.constant 0 : index
    %c1_100 = arith.constant 1 : index
    %c1_101 = arith.constant 1 : index
    %c0_102 = arith.constant 0 : index
    %126 = vector.load %arg18[%c0_99, %c1_100, %c1_101, %c0_102] : memref<4x9x9x32xf32, #tpu.memory_space<vmem>>, vector<1x8x8x32xf32>
    %127 = vector.shape_cast %126 : vector<1x8x8x32xf32> to vector<8x8x32xf32>
    %128 = vector.shape_cast %127 : vector<8x8x32xf32> to vector<64x32xf32>
    %c4 = arith.constant 4 : index
    %c0_103 = arith.constant 0 : index
    %c0_104 = arith.constant 0 : index
    %129 = vector.load %arg4[%c4, %c0_103, %c0_104] : memref<9x32x64xf32, #tpu.memory_space<vmem>>, vector<1x32x64xf32>
    %130 = vector.shape_cast %129 : vector<1x32x64xf32> to vector<32x64xf32>
    %cst_105 = arith.constant dense<0.000000e+00> : vector<64x64xf32>
    %131 = tpu.matmul %128, %130, %cst_105 {dimension_numbers = #tpu.dot_dimension_numbers<[1], [0], [0], [1], [0, 0, 1, 1], [], []>} : vector<64x32xf32>, vector<32x64xf32>, vector<64x64xf32> -> vector<64x64xf32>
    %132 = arith.addf %125, %131 : vector<64x64xf32>
    %c1_106 = arith.constant 1 : index
    %c1_107 = arith.constant 1 : index
    %c1_108 = arith.constant 1 : index
    %c0_109 = arith.constant 0 : index
    %133 = vector.load %arg18[%c1_106, %c1_107, %c1_108, %c0_109] : memref<4x9x9x32xf32, #tpu.memory_space<vmem>>, vector<1x8x8x32xf32>
    %134 = vector.shape_cast %133 : vector<1x8x8x32xf32> to vector<8x8x32xf32>
    %135 = vector.shape_cast %134 : vector<8x8x32xf32> to vector<64x32xf32>
    %c5 = arith.constant 5 : index
    %c0_110 = arith.constant 0 : index
    %c0_111 = arith.constant 0 : index
    %136 = vector.load %arg4[%c5, %c0_110, %c0_111] : memref<9x32x64xf32, #tpu.memory_space<vmem>>, vector<1x32x64xf32>
    %137 = vector.shape_cast %136 : vector<1x32x64xf32> to vector<32x64xf32>
    %cst_112 = arith.constant dense<0.000000e+00> : vector<64x64xf32>
    %138 = tpu.matmul %135, %137, %cst_112 {dimension_numbers = #tpu.dot_dimension_numbers<[1], [0], [0], [1], [0, 0, 1, 1], [], []>} : vector<64x32xf32>, vector<32x64xf32>, vector<64x64xf32> -> vector<64x64xf32>
    %139 = arith.addf %132, %138 : vector<64x64xf32>
    %c3_113 = arith.constant 3 : index
    %c1_114 = arith.constant 1 : index
    %c0_115 = arith.constant 0 : index
    %c0_116 = arith.constant 0 : index
    %140 = vector.load %arg18[%c3_113, %c1_114, %c0_115, %c0_116] : memref<4x9x9x32xf32, #tpu.memory_space<vmem>>, vector<1x8x8x32xf32>
    %141 = vector.shape_cast %140 : vector<1x8x8x32xf32> to vector<8x8x32xf32>
    %142 = vector.shape_cast %141 : vector<8x8x32xf32> to vector<64x32xf32>
    %c6 = arith.constant 6 : index
    %c0_117 = arith.constant 0 : index
    %c0_118 = arith.constant 0 : index
    %143 = vector.load %arg4[%c6, %c0_117, %c0_118] : memref<9x32x64xf32, #tpu.memory_space<vmem>>, vector<1x32x64xf32>
    %144 = vector.shape_cast %143 : vector<1x32x64xf32> to vector<32x64xf32>
    %cst_119 = arith.constant dense<0.000000e+00> : vector<64x64xf32>
    %145 = tpu.matmul %142, %144, %cst_119 {dimension_numbers = #tpu.dot_dimension_numbers<[1], [0], [0], [1], [0, 0, 1, 1], [], []>} : vector<64x32xf32>, vector<32x64xf32>, vector<64x64xf32> -> vector<64x64xf32>
    %146 = arith.addf %139, %145 : vector<64x64xf32>
    %c2_120 = arith.constant 2 : index
    %c1_121 = arith.constant 1 : index
    %c1_122 = arith.constant 1 : index
    %c0_123 = arith.constant 0 : index
    %147 = vector.load %arg18[%c2_120, %c1_121, %c1_122, %c0_123] : memref<4x9x9x32xf32, #tpu.memory_space<vmem>>, vector<1x8x8x32xf32>
    %148 = vector.shape_cast %147 : vector<1x8x8x32xf32> to vector<8x8x32xf32>
    %149 = vector.shape_cast %148 : vector<8x8x32xf32> to vector<64x32xf32>
    %c7 = arith.constant 7 : index
    %c0_124 = arith.constant 0 : index
    %c0_125 = arith.constant 0 : index
    %150 = vector.load %arg4[%c7, %c0_124, %c0_125] : memref<9x32x64xf32, #tpu.memory_space<vmem>>, vector<1x32x64xf32>
    %151 = vector.shape_cast %150 : vector<1x32x64xf32> to vector<32x64xf32>
    %cst_126 = arith.constant dense<0.000000e+00> : vector<64x64xf32>
    %152 = tpu.matmul %149, %151, %cst_126 {dimension_numbers = #tpu.dot_dimension_numbers<[1], [0], [0], [1], [0, 0, 1, 1], [], []>} : vector<64x32xf32>, vector<32x64xf32>, vector<64x64xf32> -> vector<64x64xf32>
    %153 = arith.addf %146, %152 : vector<64x64xf32>
    %c3_127 = arith.constant 3 : index
    %c1_128 = arith.constant 1 : index
    %c1_129 = arith.constant 1 : index
    %c0_130 = arith.constant 0 : index
    %154 = vector.load %arg18[%c3_127, %c1_128, %c1_129, %c0_130] : memref<4x9x9x32xf32, #tpu.memory_space<vmem>>, vector<1x8x8x32xf32>
    %155 = vector.shape_cast %154 : vector<1x8x8x32xf32> to vector<8x8x32xf32>
    %156 = vector.shape_cast %155 : vector<8x8x32xf32> to vector<64x32xf32>
    %c8 = arith.constant 8 : index
    %c0_131 = arith.constant 0 : index
    %c0_132 = arith.constant 0 : index
    %157 = vector.load %arg4[%c8, %c0_131, %c0_132] : memref<9x32x64xf32, #tpu.memory_space<vmem>>, vector<1x32x64xf32>
    %158 = vector.shape_cast %157 : vector<1x32x64xf32> to vector<32x64xf32>
    %cst_133 = arith.constant dense<0.000000e+00> : vector<64x64xf32>
    %159 = tpu.matmul %156, %158, %cst_133 {dimension_numbers = #tpu.dot_dimension_numbers<[1], [0], [0], [1], [0, 0, 1, 1], [], []>} : vector<64x32xf32>, vector<32x64xf32>, vector<64x64xf32> -> vector<64x64xf32>
    %160 = arith.addf %153, %159 : vector<64x64xf32>
    %c0_134 = arith.constant 0 : index
    %c0_135 = arith.constant 0 : index
    %161 = vector.load %arg5[%c0_134, %c0_135] : memref<1x64xf32, #tpu.memory_space<vmem>>, vector<1x64xf32>
    %162 = vector.broadcast %161 : vector<1x64xf32> to vector<64x64xf32>
    %163 = arith.addf %160, %162 : vector<64x64xf32>
    %cst_136 = arith.constant 2.000000e+01 : f32
    %164 = vector.broadcast %cst_136 : f32 to vector<64x64xf32>
    %165 = arith.minimumf %163, %164 : vector<64x64xf32>
    %166 = math.exp %165 : vector<64x64xf32>
    %cst_137 = arith.constant 1.000000e+00 : f32
    %167 = vector.broadcast %cst_137 : f32 to vector<64x64xf32>
    %168 = arith.addf %167, %166 : vector<64x64xf32>
    %169 = arith.mulf %168, %168 : vector<64x64xf32>
    %cst_138 = arith.constant 1.000000e+00 : f32
    %170 = vector.broadcast %cst_138 : f32 to vector<64x64xf32>
    %171 = arith.subf %169, %170 : vector<64x64xf32>
    %172 = arith.mulf %163, %171 : vector<64x64xf32>
    %cst_139 = arith.constant 1.000000e+00 : f32
    %173 = vector.broadcast %cst_139 : f32 to vector<64x64xf32>
    %174 = arith.addf %169, %173 : vector<64x64xf32>
    %175 = tpu.reciprocal %174 {approx = true} : vector<64x64xf32> -> vector<64x64xf32>
    %176 = arith.mulf %172, %175 : vector<64x64xf32>
    %c0_140 = arith.constant 0 : index
    %c0_141 = arith.constant 0 : index
    %177 = vector.load %arg6[%c0_140, %c0_141] : memref<64x128xf32, #tpu.memory_space<vmem>>, vector<64x128xf32>
    %cst_142 = arith.constant dense<0.000000e+00> : vector<64x128xf32>
    %178 = tpu.matmul %176, %177, %cst_142 {dimension_numbers = #tpu.dot_dimension_numbers<[1], [0], [0], [1], [0, 0, 1, 1], [], []>} : vector<64x64xf32>, vector<64x128xf32>, vector<64x128xf32> -> vector<64x128xf32>
    %c0_143 = arith.constant 0 : index
    %c0_144 = arith.constant 0 : index
    %179 = vector.load %arg7[%c0_143, %c0_144] : memref<1x128xf32, #tpu.memory_space<vmem>>, vector<1x128xf32>
    %180 = vector.broadcast %179 : vector<1x128xf32> to vector<64x128xf32>
    %181 = arith.addf %178, %180 : vector<64x128xf32>
    %cst_145 = arith.constant 2.000000e+01 : f32
    %182 = vector.broadcast %cst_145 : f32 to vector<64x128xf32>
    %183 = arith.minimumf %181, %182 : vector<64x128xf32>
    %184 = math.exp %183 : vector<64x128xf32>
    %cst_146 = arith.constant 1.000000e+00 : f32
    %185 = vector.broadcast %cst_146 : f32 to vector<64x128xf32>
    %186 = arith.addf %185, %184 : vector<64x128xf32>
    %187 = arith.mulf %186, %186 : vector<64x128xf32>
    %cst_147 = arith.constant 1.000000e+00 : f32
    %188 = vector.broadcast %cst_147 : f32 to vector<64x128xf32>
    %189 = arith.subf %187, %188 : vector<64x128xf32>
    %190 = arith.mulf %181, %189 : vector<64x128xf32>
    %cst_148 = arith.constant 1.000000e+00 : f32
    %191 = vector.broadcast %cst_148 : f32 to vector<64x128xf32>
    %192 = arith.addf %187, %191 : vector<64x128xf32>
    %193 = tpu.reciprocal %192 {approx = true} : vector<64x128xf32> -> vector<64x128xf32>
    %194 = arith.mulf %190, %193 : vector<64x128xf32>
    %195 = vector.extract_strided_slice %194 {offsets = [0, 0], sizes = [64, 64], strides = [1, 1]} : vector<64x128xf32> to vector<64x64xf32>
    %196 = vector.extract_strided_slice %194 {offsets = [0, 64], sizes = [64, 64], strides = [1, 1]} : vector<64x128xf32> to vector<64x64xf32>
    %c0_149 = arith.constant 0 : index
    %c0_150 = arith.constant 0 : index
    %197 = vector.load %arg8[%c0_149, %c0_150] : memref<64x32xf32, #tpu.memory_space<vmem>>, vector<64x32xf32>
    %cst_151 = arith.constant dense<0.000000e+00> : vector<64x32xf32>
    %198 = tpu.matmul %196, %197, %cst_151 {dimension_numbers = #tpu.dot_dimension_numbers<[1], [0], [0], [1], [0, 0, 1, 1], [], []>} : vector<64x64xf32>, vector<64x32xf32>, vector<64x32xf32> -> vector<64x32xf32>
    %c0_152 = arith.constant 0 : index
    %c0_153 = arith.constant 0 : index
    %199 = vector.load %arg9[%c0_152, %c0_153] : memref<1x32xf32, #tpu.memory_space<vmem>>, vector<1x32xf32>
    %200 = vector.broadcast %199 : vector<1x32xf32> to vector<64x32xf32>
    %201 = arith.addf %198, %200 : vector<64x32xf32>
    %cst_154 = arith.constant 2.000000e+01 : f32
    %202 = vector.broadcast %cst_154 : f32 to vector<64x32xf32>
    %203 = arith.minimumf %201, %202 : vector<64x32xf32>
    %204 = math.exp %203 : vector<64x32xf32>
    %cst_155 = arith.constant 1.000000e+00 : f32
    %205 = vector.broadcast %cst_155 : f32 to vector<64x32xf32>
    %206 = arith.addf %205, %204 : vector<64x32xf32>
    %207 = arith.mulf %206, %206 : vector<64x32xf32>
    %cst_156 = arith.constant 1.000000e+00 : f32
    %208 = vector.broadcast %cst_156 : f32 to vector<64x32xf32>
    %209 = arith.subf %207, %208 : vector<64x32xf32>
    %210 = arith.mulf %201, %209 : vector<64x32xf32>
    %cst_157 = arith.constant 1.000000e+00 : f32
    %211 = vector.broadcast %cst_157 : f32 to vector<64x32xf32>
    %212 = arith.addf %207, %211 : vector<64x32xf32>
    %213 = tpu.reciprocal %212 {approx = true} : vector<64x32xf32> -> vector<64x32xf32>
    %214 = arith.mulf %210, %213 : vector<64x32xf32>
    %215 = vector.shape_cast %214 : vector<64x32xf32> to vector<8x8x32xf32>
    %c1_158 = arith.constant 1 : index
    %c1_159 = arith.constant 1 : index
    %c0_160 = arith.constant 0 : index
    %216 = vector.load %arg19[%c1_158, %c1_159, %c0_160] : memref<10x10x32xf32, #tpu.memory_space<vmem>>, vector<8x8x32xf32>
    tpu.vector_store %arg19[%c1_158, %c1_159, %c0_160], %215 {strides = array<i32>} : memref<10x10x32xf32, #tpu.memory_space<vmem>>, vector<8x8x32xf32>,
    %cst_161 = arith.constant 0.000000e+00 : f32
    %217 = vector.broadcast %cst_161 : f32 to vector<64x64xf32>
    %c0_162 = arith.constant 0 : index
    %c0_163 = arith.constant 0 : index
    %c0_164 = arith.constant 0 : index
    %218 = vector.load %arg19[%c0_162, %c0_163, %c0_164] : memref<10x10x32xf32, #tpu.memory_space<vmem>>, vector<8x8x32xf32>
    %219 = vector.shape_cast %218 : vector<8x8x32xf32> to vector<64x32xf32>
    %c0_165 = arith.constant 0 : index
    %c0_166 = arith.constant 0 : index
    %c0_167 = arith.constant 0 : index
    %220 = vector.load %arg10[%c0_165, %c0_166, %c0_167] : memref<9x32x64xf32, #tpu.memory_space<vmem>>, vector<1x32x64xf32>
    %221 = vector.shape_cast %220 : vector<1x32x64xf32> to vector<32x64xf32>
    %cst_168 = arith.constant dense<0.000000e+00> : vector<64x64xf32>
    %222 = tpu.matmul %219, %221, %cst_168 {dimension_numbers = #tpu.dot_dimension_numbers<[1], [0], [0], [1], [0, 0, 1, 1], [], []>} : vector<64x32xf32>, vector<32x64xf32>, vector<64x64xf32> -> vector<64x64xf32>
    %223 = arith.addf %217, %222 : vector<64x64xf32>
    %c0_169 = arith.constant 0 : index
    %c1_170 = arith.constant 1 : index
    %c0_171 = arith.constant 0 : index
    %224 = vector.load %arg19[%c0_169, %c1_170, %c0_171] : memref<10x10x32xf32, #tpu.memory_space<vmem>>, vector<8x8x32xf32>
    %225 = vector.shape_cast %224 : vector<8x8x32xf32> to vector<64x32xf32>
    %c1_172 = arith.constant 1 : index
    %c0_173 = arith.constant 0 : index
    %c0_174 = arith.constant 0 : index
    %226 = vector.load %arg10[%c1_172, %c0_173, %c0_174] : memref<9x32x64xf32, #tpu.memory_space<vmem>>, vector<1x32x64xf32>
    %227 = vector.shape_cast %226 : vector<1x32x64xf32> to vector<32x64xf32>
    %cst_175 = arith.constant dense<0.000000e+00> : vector<64x64xf32>
    %228 = tpu.matmul %225, %227, %cst_175 {dimension_numbers = #tpu.dot_dimension_numbers<[1], [0], [0], [1], [0, 0, 1, 1], [], []>} : vector<64x32xf32>, vector<32x64xf32>, vector<64x64xf32> -> vector<64x64xf32>
    %229 = arith.addf %223, %228 : vector<64x64xf32>
    %c0_176 = arith.constant 0 : index
    %c2_177 = arith.constant 2 : index
    %c0_178 = arith.constant 0 : index
    %230 = vector.load %arg19[%c0_176, %c2_177, %c0_178] : memref<10x10x32xf32, #tpu.memory_space<vmem>>, vector<8x8x32xf32>
    %231 = vector.shape_cast %230 : vector<8x8x32xf32> to vector<64x32xf32>
    %c2_179 = arith.constant 2 : index
    %c0_180 = arith.constant 0 : index
    %c0_181 = arith.constant 0 : index
    %232 = vector.load %arg10[%c2_179, %c0_180, %c0_181] : memref<9x32x64xf32, #tpu.memory_space<vmem>>, vector<1x32x64xf32>
    %233 = vector.shape_cast %232 : vector<1x32x64xf32> to vector<32x64xf32>
    %cst_182 = arith.constant dense<0.000000e+00> : vector<64x64xf32>
    %234 = tpu.matmul %231, %233, %cst_182 {dimension_numbers = #tpu.dot_dimension_numbers<[1], [0], [0], [1], [0, 0, 1, 1], [], []>} : vector<64x32xf32>, vector<32x64xf32>, vector<64x64xf32> -> vector<64x64xf32>
    %235 = arith.addf %229, %234 : vector<64x64xf32>
    %c1_183 = arith.constant 1 : index
    %c0_184 = arith.constant 0 : index
    %c0_185 = arith.constant 0 : index
    %236 = vector.load %arg19[%c1_183, %c0_184, %c0_185] : memref<10x10x32xf32, #tpu.memory_space<vmem>>, vector<8x8x32xf32>
    %237 = vector.shape_cast %236 : vector<8x8x32xf32> to vector<64x32xf32>
    %c3_186 = arith.constant 3 : index
    %c0_187 = arith.constant 0 : index
    %c0_188 = arith.constant 0 : index
    %238 = vector.load %arg10[%c3_186, %c0_187, %c0_188] : memref<9x32x64xf32, #tpu.memory_space<vmem>>, vector<1x32x64xf32>
    %239 = vector.shape_cast %238 : vector<1x32x64xf32> to vector<32x64xf32>
    %cst_189 = arith.constant dense<0.000000e+00> : vector<64x64xf32>
    %240 = tpu.matmul %237, %239, %cst_189 {dimension_numbers = #tpu.dot_dimension_numbers<[1], [0], [0], [1], [0, 0, 1, 1], [], []>} : vector<64x32xf32>, vector<32x64xf32>, vector<64x64xf32> -> vector<64x64xf32>
    %241 = arith.addf %235, %240 : vector<64x64xf32>
    %c1_190 = arith.constant 1 : index
    %c1_191 = arith.constant 1 : index
    %c0_192 = arith.constant 0 : index
    %242 = vector.load %arg19[%c1_190, %c1_191, %c0_192] : memref<10x10x32xf32, #tpu.memory_space<vmem>>, vector<8x8x32xf32>
    %243 = vector.shape_cast %242 : vector<8x8x32xf32> to vector<64x32xf32>
    %c4_193 = arith.constant 4 : index
    %c0_194 = arith.constant 0 : index
    %c0_195 = arith.constant 0 : index
    %244 = vector.load %arg10[%c4_193, %c0_194, %c0_195] : memref<9x32x64xf32, #tpu.memory_space<vmem>>, vector<1x32x64xf32>
    %245 = vector.shape_cast %244 : vector<1x32x64xf32> to vector<32x64xf32>
    %cst_196 = arith.constant dense<0.000000e+00> : vector<64x64xf32>
    %246 = tpu.matmul %243, %245, %cst_196 {dimension_numbers = #tpu.dot_dimension_numbers<[1], [0], [0], [1], [0, 0, 1, 1], [], []>} : vector<64x32xf32>, vector<32x64xf32>, vector<64x64xf32> -> vector<64x64xf32>
    %247 = arith.addf %241, %246 : vector<64x64xf32>
    %c1_197 = arith.constant 1 : index
    %c2_198 = arith.constant 2 : index
    %c0_199 = arith.constant 0 : index
    %248 = vector.load %arg19[%c1_197, %c2_198, %c0_199] : memref<10x10x32xf32, #tpu.memory_space<vmem>>, vector<8x8x32xf32>
    %249 = vector.shape_cast %248 : vector<8x8x32xf32> to vector<64x32xf32>
    %c5_200 = arith.constant 5 : index
    %c0_201 = arith.constant 0 : index
    %c0_202 = arith.constant 0 : index
    %250 = vector.load %arg10[%c5_200, %c0_201, %c0_202] : memref<9x32x64xf32, #tpu.memory_space<vmem>>, vector<1x32x64xf32>
    %251 = vector.shape_cast %250 : vector<1x32x64xf32> to vector<32x64xf32>
    %cst_203 = arith.constant dense<0.000000e+00> : vector<64x64xf32>
    %252 = tpu.matmul %249, %251, %cst_203 {dimension_numbers = #tpu.dot_dimension_numbers<[1], [0], [0], [1], [0, 0, 1, 1], [], []>} : vector<64x32xf32>, vector<32x64xf32>, vector<64x64xf32> -> vector<64x64xf32>
    %253 = arith.addf %247, %252 : vector<64x64xf32>
    %c2_204 = arith.constant 2 : index
    %c0_205 = arith.constant 0 : index
    %c0_206 = arith.constant 0 : index
    %254 = vector.load %arg19[%c2_204, %c0_205, %c0_206] : memref<10x10x32xf32, #tpu.memory_space<vmem>>, vector<8x8x32xf32>
    %255 = vector.shape_cast %254 : vector<8x8x32xf32> to vector<64x32xf32>
    %c6_207 = arith.constant 6 : index
    %c0_208 = arith.constant 0 : index
    %c0_209 = arith.constant 0 : index
    %256 = vector.load %arg10[%c6_207, %c0_208, %c0_209] : memref<9x32x64xf32, #tpu.memory_space<vmem>>, vector<1x32x64xf32>
    %257 = vector.shape_cast %256 : vector<1x32x64xf32> to vector<32x64xf32>
    %cst_210 = arith.constant dense<0.000000e+00> : vector<64x64xf32>
    %258 = tpu.matmul %255, %257, %cst_210 {dimension_numbers = #tpu.dot_dimension_numbers<[1], [0], [0], [1], [0, 0, 1, 1], [], []>} : vector<64x32xf32>, vector<32x64xf32>, vector<64x64xf32> -> vector<64x64xf32>
    %259 = arith.addf %253, %258 : vector<64x64xf32>
    %c2_211 = arith.constant 2 : index
    %c1_212 = arith.constant 1 : index
    %c0_213 = arith.constant 0 : index
    %260 = vector.load %arg19[%c2_211, %c1_212, %c0_213] : memref<10x10x32xf32, #tpu.memory_space<vmem>>, vector<8x8x32xf32>
    %261 = vector.shape_cast %260 : vector<8x8x32xf32> to vector<64x32xf32>
    %c7_214 = arith.constant 7 : index
    %c0_215 = arith.constant 0 : index
    %c0_216 = arith.constant 0 : index
    %262 = vector.load %arg10[%c7_214, %c0_215, %c0_216] : memref<9x32x64xf32, #tpu.memory_space<vmem>>, vector<1x32x64xf32>
    %263 = vector.shape_cast %262 : vector<1x32x64xf32> to vector<32x64xf32>
    %cst_217 = arith.constant dense<0.000000e+00> : vector<64x64xf32>
    %264 = tpu.matmul %261, %263, %cst_217 {dimension_numbers = #tpu.dot_dimension_numbers<[1], [0], [0], [1], [0, 0, 1, 1], [], []>} : vector<64x32xf32>, vector<32x64xf32>, vector<64x64xf32> -> vector<64x64xf32>
    %265 = arith.addf %259, %264 : vector<64x64xf32>
    %c2_218 = arith.constant 2 : index
    %c2_219 = arith.constant 2 : index
    %c0_220 = arith.constant 0 : index
    %266 = vector.load %arg19[%c2_218, %c2_219, %c0_220] : memref<10x10x32xf32, #tpu.memory_space<vmem>>, vector<8x8x32xf32>
    %267 = vector.shape_cast %266 : vector<8x8x32xf32> to vector<64x32xf32>
    %c8_221 = arith.constant 8 : index
    %c0_222 = arith.constant 0 : index
    %c0_223 = arith.constant 0 : index
    %268 = vector.load %arg10[%c8_221, %c0_222, %c0_223] : memref<9x32x64xf32, #tpu.memory_space<vmem>>, vector<1x32x64xf32>
    %269 = vector.shape_cast %268 : vector<1x32x64xf32> to vector<32x64xf32>
    %cst_224 = arith.constant dense<0.000000e+00> : vector<64x64xf32>
    %270 = tpu.matmul %267, %269, %cst_224 {dimension_numbers = #tpu.dot_dimension_numbers<[1], [0], [0], [1], [0, 0, 1, 1], [], []>} : vector<64x32xf32>, vector<32x64xf32>, vector<64x64xf32> -> vector<64x64xf32>
    %271 = arith.addf %265, %270 : vector<64x64xf32>
    %c0_225 = arith.constant 0 : index
    %c0_226 = arith.constant 0 : index
    %272 = vector.load %arg11[%c0_225, %c0_226] : memref<1x64xf32, #tpu.memory_space<vmem>>, vector<1x64xf32>
    %273 = vector.broadcast %272 : vector<1x64xf32> to vector<64x64xf32>
    %274 = arith.addf %271, %273 : vector<64x64xf32>
    %cst_227 = arith.constant 2.000000e+01 : f32
    %275 = vector.broadcast %cst_227 : f32 to vector<64x64xf32>
    %276 = arith.minimumf %274, %275 : vector<64x64xf32>
    %277 = math.exp %276 : vector<64x64xf32>
    %cst_228 = arith.constant 1.000000e+00 : f32
    %278 = vector.broadcast %cst_228 : f32 to vector<64x64xf32>
    %279 = arith.addf %278, %277 : vector<64x64xf32>
    %280 = arith.mulf %279, %279 : vector<64x64xf32>
    %cst_229 = arith.constant 1.000000e+00 : f32
    %281 = vector.broadcast %cst_229 : f32 to vector<64x64xf32>
    %282 = arith.subf %280, %281 : vector<64x64xf32>
    %283 = arith.mulf %274, %282 : vector<64x64xf32>
    %cst_230 = arith.constant 1.000000e+00 : f32
    %284 = vector.broadcast %cst_230 : f32 to vector<64x64xf32>
    %285 = arith.addf %280, %284 : vector<64x64xf32>
    %286 = tpu.reciprocal %285 {approx = true} : vector<64x64xf32> -> vector<64x64xf32>
    %287 = arith.mulf %283, %286 : vector<64x64xf32>
    %288 = arith.addf %287, %196 : vector<64x64xf32>
    %c0_231 = arith.constant 0 : index
    %c0_232 = arith.constant 0 : index
    %289 = vector.load %arg12[%c0_231, %c0_232] : memref<64x64xf32, #tpu.memory_space<vmem>>, vector<64x64xf32>
    %cst_233 = arith.constant dense<0.000000e+00> : vector<64x64xf32>
    %290 = tpu.matmul %288, %289, %cst_233 {dimension_numbers = #tpu.dot_dimension_numbers<[1], [0], [0], [1], [0, 0, 1, 1], [], []>} : vector<64x64xf32>, vector<64x64xf32>, vector<64x64xf32> -> vector<64x64xf32>
    %c0_234 = arith.constant 0 : index
    %c0_235 = arith.constant 0 : index
    %291 = vector.load %arg13[%c0_234, %c0_235] : memref<1x64xf32, #tpu.memory_space<vmem>>, vector<1x64xf32>
    %292 = vector.broadcast %291 : vector<1x64xf32> to vector<64x64xf32>
    %293 = arith.addf %290, %292 : vector<64x64xf32>
    %cst_236 = arith.constant 2.000000e+01 : f32
    %294 = vector.broadcast %cst_236 : f32 to vector<64x64xf32>
    %295 = arith.minimumf %293, %294 : vector<64x64xf32>
    %296 = math.exp %295 : vector<64x64xf32>
    %cst_237 = arith.constant 1.000000e+00 : f32
    %297 = vector.broadcast %cst_237 : f32 to vector<64x64xf32>
    %298 = arith.addf %297, %296 : vector<64x64xf32>
    %299 = arith.mulf %298, %298 : vector<64x64xf32>
    %cst_238 = arith.constant 1.000000e+00 : f32
    %300 = vector.broadcast %cst_238 : f32 to vector<64x64xf32>
    %301 = arith.subf %299, %300 : vector<64x64xf32>
    %302 = arith.mulf %293, %301 : vector<64x64xf32>
    %cst_239 = arith.constant 1.000000e+00 : f32
    %303 = vector.broadcast %cst_239 : f32 to vector<64x64xf32>
    %304 = arith.addf %299, %303 : vector<64x64xf32>
    %305 = tpu.reciprocal %304 {approx = true} : vector<64x64xf32> -> vector<64x64xf32>
    %306 = arith.mulf %302, %305 : vector<64x64xf32>
    %c0_240 = arith.constant 0 : index
    %c0_241 = arith.constant 0 : index
    %307 = vector.load %arg14[%c0_240, %c0_241] : memref<64x64xf32, #tpu.memory_space<vmem>>, vector<64x64xf32>
    %cst_242 = arith.constant dense<0.000000e+00> : vector<64x64xf32>
    %308 = tpu.matmul %306, %307, %cst_242 {dimension_numbers = #tpu.dot_dimension_numbers<[1], [0], [0], [1], [0, 0, 1, 1], [], []>} : vector<64x64xf32>, vector<64x64xf32>, vector<64x64xf32> -> vector<64x64xf32>
    %c0_243 = arith.constant 0 : index
    %c0_244 = arith.constant 0 : index
    %309 = vector.load %arg15[%c0_243, %c0_244] : memref<64x64xf32, #tpu.memory_space<vmem>>, vector<64x64xf32>
    %cst_245 = arith.constant dense<0.000000e+00> : vector<64x64xf32>
    %310 = tpu.matmul %195, %309, %cst_245 {dimension_numbers = #tpu.dot_dimension_numbers<[1], [0], [0], [1], [0, 0, 1, 1], [], []>} : vector<64x64xf32>, vector<64x64xf32>, vector<64x64xf32> -> vector<64x64xf32>
    %311 = arith.addf %308, %310 : vector<64x64xf32>
    %c0_246 = arith.constant 0 : index
    %c0_247 = arith.constant 0 : index
    %312 = vector.load %arg16[%c0_246, %c0_247] : memref<1x64xf32, #tpu.memory_space<vmem>>, vector<1x64xf32>
    %313 = vector.broadcast %312 : vector<1x64xf32> to vector<64x64xf32>
    %314 = arith.addf %311, %313 : vector<64x64xf32>
    %cst_248 = arith.constant 2.000000e+01 : f32
    %315 = vector.broadcast %cst_248 : f32 to vector<64x64xf32>
    %316 = arith.minimumf %314, %315 : vector<64x64xf32>
    %317 = math.exp %316 : vector<64x64xf32>
    %cst_249 = arith.constant 1.000000e+00 : f32
    %318 = vector.broadcast %cst_249 : f32 to vector<64x64xf32>
    %319 = arith.addf %318, %317 : vector<64x64xf32>
    %320 = arith.mulf %319, %319 : vector<64x64xf32>
    %cst_250 = arith.constant 1.000000e+00 : f32
    %321 = vector.broadcast %cst_250 : f32 to vector<64x64xf32>
    %322 = arith.subf %320, %321 : vector<64x64xf32>
    %323 = arith.mulf %314, %322 : vector<64x64xf32>
    %cst_251 = arith.constant 1.000000e+00 : f32
    %324 = vector.broadcast %cst_251 : f32 to vector<64x64xf32>
    %325 = arith.addf %320, %324 : vector<64x64xf32>
    %326 = tpu.reciprocal %325 {approx = true} : vector<64x64xf32> -> vector<64x64xf32>
    %327 = arith.mulf %323, %326 : vector<64x64xf32>
    %c0_252 = arith.constant 0 : index
    %c0_253 = arith.constant 0 : index
    %c0_254 = arith.constant 0 : index
    %328 = vector.load %arg17[%c0_252, %c0_253, %c0_254] : memref<1x64x64xf32, #tpu.memory_space<vmem>>, vector<1x64x64xf32>
    %329 = vector.shape_cast %328 : vector<1x64x64xf32> to vector<64x64xf32>
    %330 = vector.shape_cast %327 : vector<64x64xf32> to vector<1x64x64xf32>
    tpu.vector_store %arg17[%c0_252, %c0_253, %c0_254], %330 {strides = array<i32>} : memref<1x64x64xf32, #tpu.memory_space<vmem>>, vector<1x64x64xf32>,
    return
  }
  func.func @transform_0(%arg0: i32) -> (i32, i32, i32, i32) {
    %c0_i32 = arith.constant 0 : i32
    %c0_i32_0 = arith.constant 0 : i32
    %c0_i32_1 = arith.constant 0 : i32
    %c0_i32_2 = arith.constant 0 : i32
    return %arg0, %c0_i32, %c0_i32_0, %c0_i32_1 : i32, i32, i32, i32
  }
  func.func @transform_1(%arg0: i32) -> (i32, i32) {
    %c0_i32 = arith.constant 0 : i32
    %c0_i32_0 = arith.constant 0 : i32
    %c0_i32_1 = arith.constant 0 : i32
    return %c0_i32, %c0_i32_0 : i32, i32
  }
  func.func @transform_2(%arg0: i32) -> (i32, i32) {
    %c0_i32 = arith.constant 0 : i32
    %c0_i32_0 = arith.constant 0 : i32
    %c0_i32_1 = arith.constant 0 : i32
    return %c0_i32, %c0_i32_0 : i32, i32
  }
  func.func @transform_3(%arg0: i32) -> (i32, i32, i32) {
    %c0_i32 = arith.constant 0 : i32
    %c0_i32_0 = arith.constant 0 : i32
    %c0_i32_1 = arith.constant 0 : i32
    %c0_i32_2 = arith.constant 0 : i32
    return %c0_i32, %c0_i32_0, %c0_i32_1 : i32, i32, i32
  }
  func.func @transform_4(%arg0: i32) -> (i32, i32) {
    %c0_i32 = arith.constant 0 : i32
    %c0_i32_0 = arith.constant 0 : i32
    %c0_i32_1 = arith.constant 0 : i32
    return %c0_i32, %c0_i32_0 : i32, i32
  }
  func.func @transform_5(%arg0: i32) -> (i32, i32) {
    %c0_i32 = arith.constant 0 : i32
    %c0_i32_0 = arith.constant 0 : i32
    %c0_i32_1 = arith.constant 0 : i32
    return %c0_i32, %c0_i32_0 : i32, i32
  }
  func.func @transform_6(%arg0: i32) -> (i32, i32) {
    %c0_i32 = arith.constant 0 : i32
    %c0_i32_0 = arith.constant 0 : i32
    %c0_i32_1 = arith.constant 0 : i32
    return %c0_i32, %c0_i32_0 : i32, i32
  }
  func.func @transform_7(%arg0: i32) -> (i32, i32) {
    %c0_i32 = arith.constant 0 : i32
    %c0_i32_0 = arith.constant 0 : i32
    %c0_i32_1 = arith.constant 0 : i32
    return %c0_i32, %c0_i32_0 : i32, i32
  }
  func.func @transform_8(%arg0: i32) -> (i32, i32) {
    %c0_i32 = arith.constant 0 : i32
    %c0_i32_0 = arith.constant 0 : i32
    %c0_i32_1 = arith.constant 0 : i32
    return %c0_i32, %c0_i32_0 : i32, i32
  }
  func.func @transform_9(%arg0: i32) -> (i32, i32, i32) {
    %c0_i32 = arith.constant 0 : i32
    %c0_i32_0 = arith.constant 0 : i32
    %c0_i32_1 = arith.constant 0 : i32
    %c0_i32_2 = arith.constant 0 : i32
    return %c0_i32, %c0_i32_0, %c0_i32_1 : i32, i32, i32
  }
  func.func @transform_10(%arg0: i32) -> (i32, i32) {
    %c0_i32 = arith.constant 0 : i32
    %c0_i32_0 = arith.constant 0 : i32
    %c0_i32_1 = arith.constant 0 : i32
    return %c0_i32, %c0_i32_0 : i32, i32
  }
  func.func @transform_11(%arg0: i32) -> (i32, i32) {
    %c0_i32 = arith.constant 0 : i32
    %c0_i32_0 = arith.constant 0 : i32
    %c0_i32_1 = arith.constant 0 : i32
    return %c0_i32, %c0_i32_0 : i32, i32
  }
  func.func @transform_12(%arg0: i32) -> (i32, i32) {
    %c0_i32 = arith.constant 0 : i32
    %c0_i32_0 = arith.constant 0 : i32
    %c0_i32_1 = arith.constant 0 : i32
    return %c0_i32, %c0_i32_0 : i32, i32
  }
  func.func @transform_13(%arg0: i32) -> (i32, i32) {
    %c0_i32 = arith.constant 0 : i32
    %c0_i32_0 = arith.constant 0 : i32
    %c0_i32_1 = arith.constant 0 : i32
    return %c0_i32, %c0_i32_0 : i32, i32
  }
  func.func @transform_14(%arg0: i32) -> (i32, i32) {
    %c0_i32 = arith.constant 0 : i32
    %c0_i32_0 = arith.constant 0 : i32
    %c0_i32_1 = arith.constant 0 : i32
    return %c0_i32, %c0_i32_0 : i32, i32
  }
  func.func @transform_15(%arg0: i32) -> (i32, i32) {
    %c0_i32 = arith.constant 0 : i32
    %c0_i32_0 = arith.constant 0 : i32
    %c0_i32_1 = arith.constant 0 : i32
    return %c0_i32, %c0_i32_0 : i32, i32
  }
  func.func @transform_16(%arg0: i32) -> (i32, i32, i32) {
    %c0_i32 = arith.constant 0 : i32
    %c0_i32_0 = arith.constant 0 : i32
    %c0_i32_1 = arith.constant 0 : i32
    return %arg0, %c0_i32, %c0_i32_0 : i32, i32, i32
  }
}

</mosaic_0001>

<llo_original>
// kernel: downsample1_forward.1
$region0: #{downsample1_forward.1}
  #allocation0 [shape = 'u32[]', space=smem, size = 0x4, offset = 0x4, fixed_abs, tag = 'smem constant byte address 0x4 - core index']
  #allocation1 [shape = 'u32[144,128]{1,0:T(1,128)}', space=vmem, size = 0x12000, scoped, tag = 'internal scratch']
  #allocation2 [shape = 'f32[4,9,9,32]{3,2,1,0:T(8,128)}', space=vmem, size = 0x48000, scoped, tag = 'scratch operand']
  #allocation3 [shape = 'f32[10,10,32]{2,1,0:T(8,128)}', space=vmem, size = 0x14000, scoped, tag = 'scratch operand']
  %s0 = inlined_call_operand.vmem [shape: f32[2,4,64,27], index: 0, kind: input, shape index: {}]
  %s1 = inlined_call_operand.vmem [shape: f32[27,32], index: 1, kind: input, shape index: {}]
  %s2 = inlined_call_operand.vmem [shape: f32[1,32], index: 2, kind: input, shape index: {}]
  %s3 = inlined_call_operand.vmem [shape: f32[9,32,64], index: 3, kind: input, shape index: {}]
  %s4 = inlined_call_operand.vmem [shape: f32[1,64], index: 4, kind: input, shape index: {}]
  %s5 = inlined_call_operand.vmem [shape: f32[64,128], index: 5, kind: input, shape index: {}]
  %s6 = inlined_call_operand.vmem [shape: f32[1,128], index: 6, kind: input, shape index: {}]
  %s7 = inlined_call_operand.vmem [shape: f32[64,32], index: 7, kind: input, shape index: {}]
  %s8 = inlined_call_operand.vmem [shape: f32[1,32], index: 8, kind: input, shape index: {}]
  %s9 = inlined_call_operand.vmem [shape: f32[9,32,64], index: 9, kind: input, shape index: {}]
  %s10 = inlined_call_operand.vmem [shape: f32[1,64], index: 10, kind: input, shape index: {}]
  %s11 = inlined_call_operand.vmem [shape: f32[64,64], index: 11, kind: input, shape index: {}]
  %s12 = inlined_call_operand.vmem [shape: f32[1,64], index: 12, kind: input, shape index: {}]
  %s13 = inlined_call_operand.vmem [shape: f32[64,64], index: 13, kind: input, shape index: {}]
  %s14 = inlined_call_operand.vmem [shape: f32[64,64], index: 14, kind: input, shape index: {}]
  %s15 = inlined_call_operand.vmem [shape: f32[1,64], index: 15, kind: input, shape index: {}]
  %s16 = inlined_call_operand.hbm [shape: f32[2,64,64], index: 16, kind: output, shape index: {}]
  %s17 = sld [smem:[#allocation0]]
  $region97: #{downsample1_forward.1} parent=0
    _
  %s19 = ssub.s32 1, %s17
  %s20 = scalar_select 0, %s19, %s17
  $region1: #{downsample1_forward.1} parent=0
    #allocation4 [shape = 'u8[65536]{0}', space=vmem, size = 0x10000, scoped, tag = 'output window, operand 0']
    #allocation5 [shape = 's32[2]{0}', space=sflag, size = 0x8, scoped, tag = 'scoped memory for downsample1_forward.1']
    %21 = vsyncpa [#allocation5], 0
    %s22 = scalar_lea.sflag [#allocation5], 1
    %23 = vsyncpa %s22, 0
    loop: start=0, step=1, limit=4
    $region2: #{downsample1_forward.1} parent=1 // loop_pre_header
      _
    $region3: #{downsample1_forward.1} parent=1 // loop_header
      %s25 = sphi 0, %s29
      %p26 = scmp.ge.s32.totalorder %s25, 4
      %s35 = sphi 0, %s37
      %s38 = sphi 0, %s35
      %s39 = sphi 0, %s38
      %s55 = sphi 0, %s39
      %s59 = sphi 0, %s59
      %s61 = sphi 0, %s59
      %s62 = sphi 0, %s61
      %s76 = sphi 0, %s62
      %s80 = sphi 0, %s80
      %s82 = sphi 0, %s80
      %s83 = sphi 0, %s82
      %s97 = sphi 0, %s83
      %s101 = sphi 0, %s101
      %s103 = sphi 0, %s101
      %s104 = sphi 0, %s103
      %s118 = sphi 0, %s104
      %s122 = sphi 0, %s122
      %s124 = sphi 0, %s122
      %s125 = sphi 0, %s124
      %s139 = sphi 0, %s125
      %s143 = sphi 0, %s143
      %s145 = sphi 0, %s143
      %s146 = sphi 0, %s145
      %s160 = sphi 0, %s146
      %s164 = sphi 0, %s164
      %s166 = sphi 0, %s164
      %s167 = sphi 0, %s166
      %s181 = sphi 0, %s167
      %s185 = sphi 0, %s185
      %s187 = sphi 0, %s185
      %s188 = sphi 0, %s187
      %s202 = sphi 0, %s188
      %s206 = sphi 0, %s206
      %s208 = sphi 0, %s206
      %s209 = sphi 0, %s208
      %s223 = sphi 0, %s209
      %s227 = sphi 0, %s227
      %s229 = sphi 0, %s227
      %s230 = sphi 0, %s229
      %s244 = sphi 0, %s230
      %s248 = sphi 0, %s248
      %s250 = sphi 0, %s248
      %s251 = sphi 0, %s250
      %s265 = sphi 0, %s251
      %s269 = sphi 0, %s269
      %s271 = sphi 0, %s269
      %s272 = sphi 0, %s271
      %s286 = sphi 0, %s272
      %s290 = sphi 0, %s290
      %s292 = sphi 0, %s290
      %s293 = sphi 0, %s292
      %s307 = sphi 0, %s293
      %s311 = sphi 0, %s311
      %s313 = sphi 0, %s311
      %s314 = sphi 0, %s313
      %s328 = sphi 0, %s314
      %s332 = sphi 0, %s332
      %s334 = sphi 0, %s332
      %s335 = sphi 0, %s334
      %s349 = sphi 0, %s335
      %s353 = sphi 0, %s353
      %s355 = sphi 0, %s353
      %s356 = sphi 0, %s355
      %s370 = sphi 0, %s356
      %s376 = sphi 0, %s378
      %s379 = sphi 0, %s376
      %s380 = sphi 0, %s379
      %s396 = sphi 0, %s380
    $region4: #{downsample1_forward.1} parent=1 // loop_header_branch
      %28 = sbr.rel (%p26) target = $region8
    $region5: #{downsample1_forward.1} parent=1 // loop_body
      %s30 = ssub.s32 %s25, 1
      %s31 = ssub.s32 %s25, 2
      %s32 = sadd.s32 %s25, 1
      %s33 = ssub.s32 %s25, %s32
      %p34 = scmp.eq.s32.totalorder %s33, 0
      %s36 = sadd.s32 %s35, 1
      %s37 = scalar_select %p34, %s35, %s36
      %p40 = pneg %p34
      %p41 = scmp.eq.s32.totalorder %s25, 1
      %p42 = por %p40, %p41
      %p43 = scmp.ne.s32.totalorder %s35, %s38
      %p44 = scmp.eq.s32.totalorder %s25, 0
      %p45 = por %p43, %p44
      %p46 = scmp.ne.s32.totalorder %s35, %s38
      %p47 = scmp.eq.s32.totalorder %s30, 1
      %p48 = por %p46, %p47
      %p49 = scmp.ne.s32.totalorder %s38, %s39
      %p50 = scmp.eq.s32.totalorder %s30, 0
      %p51 = por %p49, %p50
      %p52 = scmp.ne.s32.totalorder %s38, %s39
      %p53 = scmp.eq.s32.totalorder %s31, 1
      %p54 = por %p52, %p53
      %p56 = scmp.ne.s32.totalorder %s39, %s55
      %p57 = scmp.eq.s32.totalorder %s31, 0
      %p58 = por %p56, %p57
      %s60 = sadd.s32 %s59, 1
      %p63 = scmp.eq.s32.totalorder %s25, 1
      %p64 = scmp.ne.s32.totalorder %s59, %s61
      %p65 = scmp.eq.s32.totalorder %s25, 0
      %p66 = por %p64, %p65
      %p67 = scmp.ne.s32.totalorder %s59, %s61
      %p68 = scmp.eq.s32.totalorder %s30, 1
      %p69 = por %p67, %p68
      %p70 = scmp.ne.s32.totalorder %s61, %s62
      %p71 = scmp.eq.s32.totalorder %s30, 0
      %p72 = por %p70, %p71
      %p73 = scmp.ne.s32.totalorder %s61, %s62
      %p74 = scmp.eq.s32.totalorder %s31, 1
      %p75 = por %p73, %p74
      %p77 = scmp.ne.s32.totalorder %s62, %s76
      %p78 = scmp.eq.s32.totalorder %s31, 0
      %p79 = por %p77, %p78
      %s81 = sadd.s32 %s80, 1
      %p84 = scmp.eq.s32.totalorder %s25, 1
      %p85 = scmp.ne.s32.totalorder %s80, %s82
      %p86 = scmp.eq.s32.totalorder %s25, 0
      %p87 = por %p85, %p86
      %p88 = scmp.ne.s32.totalorder %s80, %s82
      %p89 = scmp.eq.s32.totalorder %s30, 1
      %p90 = por %p88, %p89
      %p91 = scmp.ne.s32.totalorder %s82, %s83
      %p92 = scmp.eq.s32.totalorder %s30, 0
      %p93 = por %p91, %p92
      %p94 = scmp.ne.s32.totalorder %s82, %s83
      %p95 = scmp.eq.s32.totalorder %s31, 1
      %p96 = por %p94, %p95
      %p98 = scmp.ne.s32.totalorder %s83, %s97
      %p99 = scmp.eq.s32.totalorder %s31, 0
      %p100 = por %p98, %p99
      %s102 = sadd.s32 %s101, 1
      %p105 = scmp.eq.s32.totalorder %s25, 1
      %p106 = scmp.ne.s32.totalorder %s101, %s103
      %p107 = scmp.eq.s32.totalorder %s25, 0
      %p108 = por %p106, %p107
      %p109 = scmp.ne.s32.totalorder %s101, %s103
      %p110 = scmp.eq.s32.totalorder %s30, 1
      %p111 = por %p109, %p110
      %p112 = scmp.ne.s32.totalorder %s103, %s104
      %p113 = scmp.eq.s32.totalorder %s30, 0
      %p114 = por %p112, %p113
      %p115 = scmp.ne.s32.totalorder %s103, %s104
      %p116 = scmp.eq.s32.totalorder %s31, 1
      %p117 = por %p115, %p116
      %p119 = scmp.ne.s32.totalorder %s104, %s118
      %p120 = scmp.eq.s32.totalorder %s31, 0
      %p121 = por %p119, %p120
      %s123 = sadd.s32 %s122, 1
      %p126 = scmp.eq.s32.totalorder %s25, 1
      %p127 = scmp.ne.s32.totalorder %s122, %s124
      %p128 = scmp.eq.s32.totalorder %s25, 0
      %p129 = por %p127, %p128
      %p130 = scmp.ne.s32.totalorder %s122, %s124
      %p131 = scmp.eq.s32.totalorder %s30, 1
      %p132 = por %p130, %p131
      %p133 = scmp.ne.s32.totalorder %s124, %s125
      %p134 = scmp.eq.s32.totalorder %s30, 0
      %p135 = por %p133, %p134
      %p136 = scmp.ne.s32.totalorder %s124, %s125
      %p137 = scmp.eq.s32.totalorder %s31, 1
      %p138 = por %p136, %p137
      %p140 = scmp.ne.s32.totalorder %s125, %s139
      %p141 = scmp.eq.s32.totalorder %s31, 0
      %p142 = por %p140, %p141
      %s144 = sadd.s32 %s143, 1
      %p147 = scmp.eq.s32.totalorder %s25, 1
      %p148 = scmp.ne.s32.totalorder %s143, %s145
      %p149 = scmp.eq.s32.totalorder %s25, 0
      %p150 = por %p148, %p149
      %p151 = scmp.ne.s32.totalorder %s143, %s145
      %p152 = scmp.eq.s32.totalorder %s30, 1
      %p153 = por %p151, %p152
      %p154 = scmp.ne.s32.totalorder %s145, %s146
      %p155 = scmp.eq.s32.totalorder %s30, 0
      %p156 = por %p154, %p155
      %p157 = scmp.ne.s32.totalorder %s145, %s146
      %p158 = scmp.eq.s32.totalorder %s31, 1
      %p159 = por %p157, %p158
      %p161 = scmp.ne.s32.totalorder %s146, %s160
      %p162 = scmp.eq.s32.totalorder %s31, 0
      %p163 = por %p161, %p162
      %s165 = sadd.s32 %s164, 1
      %p168 = scmp.eq.s32.totalorder %s25, 1
      %p169 = scmp.ne.s32.totalorder %s164, %s166
      %p170 = scmp.eq.s32.totalorder %s25, 0
      %p171 = por %p169, %p170
      %p172 = scmp.ne.s32.totalorder %s164, %s166
      %p173 = scmp.eq.s32.totalorder %s30, 1
      %p174 = por %p172, %p173
      %p175 = scmp.ne.s32.totalorder %s166, %s167
      %p176 = scmp.eq.s32.totalorder %s30, 0
      %p177 = por %p175, %p176
      %p178 = scmp.ne.s32.totalorder %s166, %s167
      %p179 = scmp.eq.s32.totalorder %s31, 1
      %p180 = por %p178, %p179
      %p182 = scmp.ne.s32.totalorder %s167, %s181
      %p183 = scmp.eq.s32.totalorder %s31, 0
      %p184 = por %p182, %p183
      %s186 = sadd.s32 %s185, 1
      %p189 = scmp.eq.s32.totalorder %s25, 1
      %p190 = scmp.ne.s32.totalorder %s185, %s187
      %p191 = scmp.eq.s32.totalorder %s25, 0
      %p192 = por %p190, %p191
      %p193 = scmp.ne.s32.totalorder %s185, %s187
      %p194 = scmp.eq.s32.totalorder %s30, 1
      %p195 = por %p193, %p194
      %p196 = scmp.ne.s32.totalorder %s187, %s188
      %p197 = scmp.eq.s32.totalorder %s30, 0
      %p198 = por %p196, %p197
      %p199 = scmp.ne.s32.totalorder %s187, %s188
      %p200 = scmp.eq.s32.totalorder %s31, 1
      %p201 = por %p199, %p200
      %p203 = scmp.ne.s32.totalorder %s188, %s202
      %p204 = scmp.eq.s32.totalorder %s31, 0
      %p205 = por %p203, %p204
      %s207 = sadd.s32 %s206, 1
      %p210 = scmp.eq.s32.totalorder %s25, 1
      %p211 = scmp.ne.s32.totalorder %s206, %s208
      %p212 = scmp.eq.s32.totalorder %s25, 0
      %p213 = por %p211, %p212
      %p214 = scmp.ne.s32.totalorder %s206, %s208
      %p215 = scmp.eq.s32.totalorder %s30, 1
      %p216 = por %p214, %p215
      %p217 = scmp.ne.s32.totalorder %s208, %s209
      %p218 = scmp.eq.s32.totalorder %s30, 0
      %p219 = por %p217, %p218
      %p220 = scmp.ne.s32.totalorder %s208, %s209
      %p221 = scmp.eq.s32.totalorder %s31, 1
      %p222 = por %p220, %p221
      %p224 = scmp.ne.s32.totalorder %s209, %s223
      %p225 = scmp.eq.s32.totalorder %s31, 0
      %p226 = por %p224, %p225
      %s228 = sadd.s32 %s227, 1
      %p231 = scmp.eq.s32.totalorder %s25, 1
      %p232 = scmp.ne.s32.totalorder %s227, %s229
      %p233 = scmp.eq.s32.totalorder %s25, 0
      %p234 = por %p232, %p233
      %p235 = scmp.ne.s32.totalorder %s227, %s229
      %p236 = scmp.eq.s32.totalorder %s30, 1
      %p237 = por %p235, %p236
      %p238 = scmp.ne.s32.totalorder %s229, %s230
      %p239 = scmp.eq.s32.totalorder %s30, 0
      %p240 = por %p238, %p239
      %p241 = scmp.ne.s32.totalorder %s229, %s230
      %p242 = scmp.eq.s32.totalorder %s31, 1
      %p243 = por %p241, %p242
      %p245 = scmp.ne.s32.totalorder %s230, %s244
      %p246 = scmp.eq.s32.totalorder %s31, 0
      %p247 = por %p245, %p246
      %s249 = sadd.s32 %s248, 1
      %p252 = scmp.eq.s32.totalorder %s25, 1
      %p253 = scmp.ne.s32.totalorder %s248, %s250
      %p254 = scmp.eq.s32.totalorder %s25, 0
      %p255 = por %p253, %p254
      %p256 = scmp.ne.s32.totalorder %s248, %s250
      %p257 = scmp.eq.s32.totalorder %s30, 1
      %p258 = por %p256, %p257
      %p259 = scmp.ne.s32.totalorder %s250, %s251
      %p260 = scmp.eq.s32.totalorder %s30, 0
      %p261 = por %p259, %p260
      %p262 = scmp.ne.s32.totalorder %s250, %s251
      %p263 = scmp.eq.s32.totalorder %s31, 1
      %p264 = por %p262, %p263
      %p266 = scmp.ne.s32.totalorder %s251, %s265
      %p267 = scmp.eq.s32.totalorder %s31, 0
      %p268 = por %p266, %p267
      %s270 = sadd.s32 %s269, 1
      %p273 = scmp.eq.s32.totalorder %s25, 1
      %p274 = scmp.ne.s32.totalorder %s269, %s271
      %p275 = scmp.eq.s32.totalorder %s25, 0
      %p276 = por %p274, %p275
      %p277 = scmp.ne.s32.totalorder %s269, %s271
      %p278 = scmp.eq.s32.totalorder %s30, 1
      %p279 = por %p277, %p278
      %p280 = scmp.ne.s32.totalorder %s271, %s272
      %p281 = scmp.eq.s32.totalorder %s30, 0
      %p282 = por %p280, %p281
      %p283 = scmp.ne.s32.totalorder %s271, %s272
      %p284 = scmp.eq.s32.totalorder %s31, 1
      %p285 = por %p283, %p284
      %p287 = scmp.ne.s32.totalorder %s272, %s286
      %p288 = scmp.eq.s32.totalorder %s31, 0
      %p289 = por %p287, %p288
      %s291 = sadd.s32 %s290, 1
      %p294 = scmp.eq.s32.totalorder %s25, 1
      %p295 = scmp.ne.s32.totalorder %s290, %s292
      %p296 = scmp.eq.s32.totalorder %s25, 0
      %p297 = por %p295, %p296
      %p298 = scmp.ne.s32.totalorder %s290, %s292
      %p299 = scmp.eq.s32.totalorder %s30, 1
      %p300 = por %p298, %p299
      %p301 = scmp.ne.s32.totalorder %s292, %s293
      %p302 = scmp.eq.s32.totalorder %s30, 0
      %p303 = por %p301, %p302
      %p304 = scmp.ne.s32.totalorder %s292, %s293
      %p305 = scmp.eq.s32.totalorder %s31, 1
      %p306 = por %p304, %p305
      %p308 = scmp.ne.s32.totalorder %s293, %s307
      %p309 = scmp.eq.s32.totalorder %s31, 0
      %p310 = por %p308, %p309
      %s312 = sadd.s32 %s311, 1
      %p315 = scmp.eq.s32.totalorder %s25, 1
      %p316 = scmp.ne.s32.totalorder %s311, %s313
      %p317 = scmp.eq.s32.totalorder %s25, 0
      %p318 = por %p316, %p317
      %p319 = scmp.ne.s32.totalorder %s311, %s313
      %p320 = scmp.eq.s32.totalorder %s30, 1
      %p321 = por %p319, %p320
      %p322 = scmp.ne.s32.totalorder %s313, %s314
      %p323 = scmp.eq.s32.totalorder %s30, 0
      %p324 = por %p322, %p323
      %p325 = scmp.ne.s32.totalorder %s313, %s314
      %p326 = scmp.eq.s32.totalorder %s31, 1
      %p327 = por %p325, %p326
      %p329 = scmp.ne.s32.totalorder %s314, %s328
      %p330 = scmp.eq.s32.totalorder %s31, 0
      %p331 = por %p329, %p330
      %s333 = sadd.s32 %s332, 1
      %p336 = scmp.eq.s32.totalorder %s25, 1
      %p337 = scmp.ne.s32.totalorder %s332, %s334
      %p338 = scmp.eq.s32.totalorder %s25, 0
      %p339 = por %p337, %p338
      %p340 = scmp.ne.s32.totalorder %s332, %s334
      %p341 = scmp.eq.s32.totalorder %s30, 1
      %p342 = por %p340, %p341
      %p343 = scmp.ne.s32.totalorder %s334, %s335
      %p344 = scmp.eq.s32.totalorder %s30, 0
      %p345 = por %p343, %p344
      %p346 = scmp.ne.s32.totalorder %s334, %s335
      %p347 = scmp.eq.s32.totalorder %s31, 1
      %p348 = por %p346, %p347
      %p350 = scmp.ne.s32.totalorder %s335, %s349
      %p351 = scmp.eq.s32.totalorder %s31, 0
      %p352 = por %p350, %p351
      %s354 = sadd.s32 %s353, 1
      %p357 = scmp.eq.s32.totalorder %s25, 1
      %p358 = scmp.ne.s32.totalorder %s353, %s355
      %p359 = scmp.eq.s32.totalorder %s25, 0
      %p360 = por %p358, %p359
      %p361 = scmp.ne.s32.totalorder %s353, %s355
      %p362 = scmp.eq.s32.totalorder %s30, 1
      %p363 = por %p361, %p362
      %p364 = scmp.ne.s32.totalorder %s355, %s356
      %p365 = scmp.eq.s32.totalorder %s30, 0
      %p366 = por %p364, %p365
      %p367 = scmp.ne.s32.totalorder %s355, %s356
      %p368 = scmp.eq.s32.totalorder %s31, 1
      %p369 = por %p367, %p368
      %p371 = scmp.ne.s32.totalorder %s356, %s370
      %p372 = scmp.eq.s32.totalorder %s31, 0
      %p373 = por %p371, %p372
      %s374 = ssub.s32 %s25, %s32
      %p375 = scmp.eq.s32.totalorder %s374, 0
      %s377 = sadd.s32 %s376, 1
      %s378 = scalar_select %p375, %s376, %s377
      %p381 = pneg %p375
      %p382 = scmp.eq.s32.totalorder %s25, 1
      %p383 = por %p381, %p382
      %p384 = scmp.ne.s32.totalorder %s376, %s379
      %p385 = scmp.eq.s32.totalorder %s25, 0
      %p386 = por %p384, %p385
      %p387 = scmp.ne.s32.totalorder %s376, %s379
      %p388 = scmp.eq.s32.totalorder %s30, 1
      %p389 = por %p387, %p388
      %p390 = scmp.ne.s32.totalorder %s379, %s380
      %p391 = scmp.eq.s32.totalorder %s30, 0
      %p392 = por %p390, %p391
      %p393 = scmp.ne.s32.totalorder %s379, %s380
      %p394 = scmp.eq.s32.totalorder %s31, 1
      %p395 = por %p393, %p394
      %p397 = scmp.ne.s32.totalorder %s380, %s396
      %p398 = scmp.eq.s32.totalorder %s31, 0
      %p399 = por %p397, %p398
      %p400 = scmp.le.s32.totalorder 1, %s25
      %p401 = scmp.lt.s32.totalorder %s25, 3
      %p402 = pnand %p400, %p401
      %p403 = pneg %p402
      // Predicated region
      $region9: #{downsample1_forward.1} parent=5 // pred_check
        _
      $region10: #{downsample1_forward.1} parent=5 // pred_check_branch
        %405 = sbr.rel (%p402) target = $region12
      $region11: #{downsample1_forward.1} parent=5 // pred_region
        %s406 = ssub.s32 %s25, 1
        // Predicated region
        $region13: #{downsample1_forward.1} parent=11 // pred_check
          %p407 = pneg %p72
        $region14: #{downsample1_forward.1} parent=11 // pred_check_branch
          %409 = sbr.rel (%p407) target = $region16
        $region15: #{downsample1_forward.1} parent=11 // pred_region
          _
        $region16: #{downsample1_forward.1} parent=11 // pred_fallthru
          _
        // Predicated region
        $region17: #{downsample1_forward.1} parent=11 // pred_check
          %p410 = pneg %p93
        $region18: #{downsample1_forward.1} parent=11 // pred_check_branch
          %412 = sbr.rel (%p410) target = $region20
        $region19: #{downsample1_forward.1} parent=11 // pred_region
          _
        $region20: #{downsample1_forward.1} parent=11 // pred_fallthru
          _
        // Predicated region
        $region21: #{downsample1_forward.1} parent=11 // pred_check
          %p413 = pneg %p114
        $region22: #{downsample1_forward.1} parent=11 // pred_check_branch
          %415 = sbr.rel (%p413) target = $region24
        $region23: #{downsample1_forward.1} parent=11 // pred_region
          _
        $region24: #{downsample1_forward.1} parent=11 // pred_fallthru
          _
        // Predicated region
        $region25: #{downsample1_forward.1} parent=11 // pred_check
          %p416 = pneg %p135
        $region26: #{downsample1_forward.1} parent=11 // pred_check_branch
          %418 = sbr.rel (%p416) target = $region28
        $region27: #{downsample1_forward.1} parent=11 // pred_region
          _
        $region28: #{downsample1_forward.1} parent=11 // pred_fallthru
          _
        // Predicated region
        $region29: #{downsample1_forward.1} parent=11 // pred_check
          %p419 = pneg %p156
        $region30: #{downsample1_forward.1} parent=11 // pred_check_branch
          %421 = sbr.rel (%p419) target = $region32
        $region31: #{downsample1_forward.1} parent=11 // pred_region
          _
        $region32: #{downsample1_forward.1} parent=11 // pred_fallthru
          _
        // Predicated region
        $region33: #{downsample1_forward.1} parent=11 // pred_check
          %p422 = pneg %p177
        $region34: #{downsample1_forward.1} parent=11 // pred_check_branch
          %424 = sbr.rel (%p422) target = $region36
        $region35: #{downsample1_forward.1} parent=11 // pred_region
          _
        $region36: #{downsample1_forward.1} parent=11 // pred_fallthru
          _
        // Predicated region
        $region37: #{downsample1_forward.1} parent=11 // pred_check
          %p425 = pneg %p198
        $region38: #{downsample1_forward.1} parent=11 // pred_check_branch
          %427 = sbr.rel (%p425) target = $region40
        $region39: #{downsample1_forward.1} parent=11 // pred_region
          _
        $region40: #{downsample1_forward.1} parent=11 // pred_fallthru
          _
        // Predicated region
        $region41: #{downsample1_forward.1} parent=11 // pred_check
          %p428 = pneg %p219
        $region42: #{downsample1_forward.1} parent=11 // pred_check_branch
          %430 = sbr.rel (%p428) target = $region44
        $region43: #{downsample1_forward.1} parent=11 // pred_region
          _
        $region44: #{downsample1_forward.1} parent=11 // pred_fallthru
          _
        // Predicated region
        $region45: #{downsample1_forward.1} parent=11 // pred_check
          %p431 = pneg %p240
        $region46: #{downsample1_forward.1} parent=11 // pred_check_branch
          %433 = sbr.rel (%p431) target = $region48
        $region47: #{downsample1_forward.1} parent=11 // pred_region
          _
        $region48: #{downsample1_forward.1} parent=11 // pred_fallthru
          _
        // Predicated region
        $region49: #{downsample1_forward.1} parent=11 // pred_check
          %p434 = pneg %p261
        $region50: #{downsample1_forward.1} parent=11 // pred_check_branch
          %436 = sbr.rel (%p434) target = $region52
        $region51: #{downsample1_forward.1} parent=11 // pred_region
          _
        $region52: #{downsample1_forward.1} parent=11 // pred_fallthru
          _
        // Predicated region
        $region53: #{downsample1_forward.1} parent=11 // pred_check
          %p437 = pneg %p282
        $region54: #{downsample1_forward.1} parent=11 // pred_check_branch
          %439 = sbr.rel (%p437) target = $region56
        $region55: #{downsample1_forward.1} parent=11 // pred_region
          _
        $region56: #{downsample1_forward.1} parent=11 // pred_fallthru
          _
        // Predicated region
        $region57: #{downsample1_forward.1} parent=11 // pred_check
          %p440 = pneg %p303
        $region58: #{downsample1_forward.1} parent=11 // pred_check_branch
          %442 = sbr.rel (%p440) target = $region60
        $region59: #{downsample1_forward.1} parent=11 // pred_region
          _
        $region60: #{downsample1_forward.1} parent=11 // pred_fallthru
          _
        // Predicated region
        $region61: #{downsample1_forward.1} parent=11 // pred_check
          %p443 = pneg %p324
        $region62: #{downsample1_forward.1} parent=11 // pred_check_branch
          %445 = sbr.rel (%p443) target = $region64
        $region63: #{downsample1_forward.1} parent=11 // pred_region
          _
        $region64: #{downsample1_forward.1} parent=11 // pred_fallthru
          _
        // Predicated region
        $region65: #{downsample1_forward.1} parent=11 // pred_check
          %p446 = pneg %p345
        $region66: #{downsample1_forward.1} parent=11 // pred_check_branch
          %448 = sbr.rel (%p446) target = $region68
        $region67: #{downsample1_forward.1} parent=11 // pred_region
          _
        $region68: #{downsample1_forward.1} parent=11 // pred_fallthru
          _
        // Predicated region
        $region69: #{downsample1_forward.1} parent=11 // pred_check
          %p449 = pneg %p366
        $region70: #{downsample1_forward.1} parent=11 // pred_check_branch
          %451 = sbr.rel (%p449) target = $region72
        $region71: #{downsample1_forward.1} parent=11 // pred_region
          _
        $region72: #{downsample1_forward.1} parent=11 // pred_fallthru
          _
      $region12: #{downsample1_forward.1} parent=5 // pred_fallthru
        _
      %p452 = scmp.lt.s32.totalorder %s25, 2
      // Predicated region
      $region73: #{downsample1_forward.1} parent=5 // pred_check
        %p453 = pneg %p452
      $region74: #{downsample1_forward.1} parent=5 // pred_check_branch
        %455 = sbr.rel (%p453) target = $region76
      $region75: #{downsample1_forward.1} parent=5 // pred_region
        // Predicated region
        $region77: #{downsample1_forward.1} parent=75 // pred_check
          %p456 = pneg %p45
        $region78: #{downsample1_forward.1} parent=75 // pred_check_branch
          %458 = sbr.rel (%p456) target = $region80
        $region79: #{downsample1_forward.1} parent=75 // pred_region
          %p459 = scmp.lt.s32.totalorder %s25, 1
          %s460 = scalar_select %p459, %s25, 1
          %s461 = smul.addr %s460, 32
          %s462 = smul.addr %s461, 8
          %s463 = scalar_lea.vmem %s0, %s462
        $region80: #{downsample1_forward.1} parent=75 // pred_fallthru
          _
      $region76: #{downsample1_forward.1} parent=5 // pred_fallthru
        _
      %p464 = scmp.le.s32.totalorder 1, %s25
      %p465 = scmp.lt.s32.totalorder %s25, 3
      %p466 = pnand %p464, %p465
      %p467 = pneg %p466
      // Predicated region
      $region81: #{downsample1_forward.1} parent=5 // pred_check
        _
      $region82: #{downsample1_forward.1} parent=5 // pred_check_branch
        %469 = sbr.rel (%p466) target = $region84
      $region83: #{downsample1_forward.1} parent=5 // pred_region
        %s470 = ssub.s32 %s25, 1
        %p471 = scmp.lt.s32.totalorder %s30, 1
        %s472 = scalar_select %p471, %s30, 1
        %s473 = smul.addr %s472, 32
        %s474 = smul.addr %s473, 8
        %s475 = scalar_lea.vmem %s0, %s474
        %p476 = pneg %p51
        %p477 = pneg %p48
        %p478 = pneg %p72
        %p479 = pneg %p69
        %p480 = pneg %p93
        %p481 = pneg %p90
        %p482 = pneg %p114
        %p483 = pneg %p111
        %p484 = pneg %p135
        %p485 = pneg %p132
        %p486 = pneg %p156
        %p487 = pneg %p153
        %p488 = pneg %p177
        %p489 = pneg %p174
        %p490 = pneg %p198
        %p491 = pneg %p195
        %p492 = pneg %p219
        %p493 = pneg %p216
        %p494 = pneg %p240
        %p495 = pneg %p237
        %p496 = pneg %p261
        %p497 = pneg %p258
        %p498 = pneg %p282
        %p499 = pneg %p279
        %p500 = pneg %p303
        %p501 = pneg %p300
        %p502 = pneg %p324
        %p503 = pneg %p321
        %p504 = pneg %p345
        %p505 = pneg %p342
        %p506 = pneg %p366
        %p507 = pneg %p363
        %p508 = pneg %p392
        %p509 = pneg %p389
        %s510 = sand.u32 %s379, 1
        %s511 = scalar_lea.sflag [#allocation5], %s510
        %s512 = sand.u32 %s379, 1
        %s513 = smul.addr %s512, 64
        %s514 = scalar_lea.vmem [#allocation4], %s513
        %p515 = scmp.lt.s32.totalorder %s30, 1
        %s516 = scalar_select %p515, %s30, 1
        %s517 = smul.addr %s516, 32
        %s518 = smul.addr %s517, 8
        %s519 = scalar_lea.vmem %s0, %s518
        %vm520 = vcmask 261120
        %521 = vst.msk [vmem:[#allocation2] sm:$0xff] %vm520, 0.0
        %vm522 = vcmask 253952
        %523 = vst.msk [vmem:[#allocation2 + $0x8] sm:$0x1] %vm522, 0.0
        %524 = vst.msk [vmem:[#allocation2 + $0x10] sm:$0xff] %vm520, 0.0
        %525 = vst.msk [vmem:[#allocation2 + $0x18] sm:$0x1] %vm522, 0.0
        %526 = vst.msk [vmem:[#allocation2 + $0x20] sm:$0xff] %vm520, 0.0
        %527 = vst.msk [vmem:[#allocation2 + $0x28] sm:$0x1] %vm522, 0.0
        %528 = vst.msk [vmem:[#allocation2 + $0x30] sm:$0xff] %vm520, 0.0
        %529 = vst.msk [vmem:[#allocation2 + $0x38] sm:$0x1] %vm522, 0.0
        %530 = vst.msk [vmem:[#allocation2 + $0x40] sm:$0xff] %vm520, 0.0
        %531 = vst.msk [vmem:[#allocation2 + $0x48] sm:$0x1] %vm522, 0.0
        %532 = vst.msk [vmem:[#allocation2 + $0x50] sm:$0xff] %vm520, 0.0
        %533 = vst.msk [vmem:[#allocation2 + $0x58] sm:$0x1] %vm522, 0.0
        %534 = vst.msk [vmem:[#allocation2 + $0x60] sm:$0xff] %vm520, 0.0
        %535 = vst.msk [vmem:[#allocation2 + $0x68] sm:$0x1] %vm522, 0.0
        %536 = vst.msk [vmem:[#allocation2 + $0x70] sm:$0xff] %vm520, 0.0
        %537 = vst.msk [vmem:[#allocation2 + $0x78] sm:$0x1] %vm522, 0.0
        %538 = vst.msk [vmem:[#allocation2 + $0x80] sm:$0xff] %vm520, 0.0
        %539 = vst.msk [vmem:[#allocation2 + $0x88] sm:$0x1] %vm522, 0.0
        %540 = vst.msk [vmem:[#allocation2 + $0x90] sm:$0xff] %vm520, 0.0
        %541 = vst.msk [vmem:[#allocation2 + $0x98] sm:$0x1] %vm522, 0.0
        %542 = vst.msk [vmem:[#allocation2 + $0xa0] sm:$0xff] %vm520, 0.0
        %543 = vst.msk [vmem:[#allocation2 + $0xa8] sm:$0x1] %vm522, 0.0
        %544 = vst.msk [vmem:[#allocation2 + $0xb0] sm:$0xff] %vm520, 0.0
        %545 = vst.msk [vmem:[#allocation2 + $0xb8] sm:$0x1] %vm522, 0.0
        %546 = vst.msk [vmem:[#allocation2 + $0xc0] sm:$0xff] %vm520, 0.0
        %547 = vst.msk [vmem:[#allocation2 + $0xc8] sm:$0x1] %vm522, 0.0
        %548 = vst.msk [vmem:[#allocation2 + $0xd0] sm:$0xff] %vm520, 0.0
        %549 = vst.msk [vmem:[#allocation2 + $0xd8] sm:$0x1] %vm522, 0.0
        %550 = vst.msk [vmem:[#allocation2 + $0xe0] sm:$0xff] %vm520, 0.0
        %551 = vst.msk [vmem:[#allocation2 + $0xe8] sm:$0x1] %vm522, 0.0
        %552 = vst.msk [vmem:[#allocation2 + $0xf0] sm:$0xff] %vm520, 0.0
        %553 = vst.msk [vmem:[#allocation2 + $0xf8] sm:$0x1] %vm522, 0.0
        %554 = vst.msk [vmem:[#allocation2 + $0x100] sm:$0xff] %vm520, 0.0
        %555 = vst.msk [vmem:[#allocation2 + $0x108] sm:$0x1] %vm522, 0.0
        %556 = vst.msk [vmem:[#allocation2 + $0x110] sm:$0xff] %vm520, 0.0
        %557 = vst.msk [vmem:[#allocation2 + $0x118] sm:$0x1] %vm522, 0.0
        %558 = vst.msk [vmem:[#allocation2 + $0x120] sm:$0xff] %vm520, 0.0
        %559 = vst.msk [vmem:[#allocation2 + $0x128] sm:$0x1] %vm522, 0.0
        %560 = vst.msk [vmem:[#allocation2 + $0x130] sm:$0xff] %vm520, 0.0
        %561 = vst.msk [vmem:[#allocation2 + $0x138] sm:$0x1] %vm522, 0.0
        %562 = vst.msk [vmem:[#allocation2 + $0x140] sm:$0xff] %vm520, 0.0
        %563 = vst.msk [vmem:[#allocation2 + $0x148] sm:$0x1] %vm522, 0.0
        %564 = vst.msk [vmem:[#allocation2 + $0x150] sm:$0xff] %vm520, 0.0
        %565 = vst.msk [vmem:[#allocation2 + $0x158] sm:$0x1] %vm522, 0.0
        %566 = vst.msk [vmem:[#allocation2 + $0x160] sm:$0xff] %vm520, 0.0
        %567 = vst.msk [vmem:[#allocation2 + $0x168] sm:$0x1] %vm522, 0.0
        %568 = vst.msk [vmem:[#allocation2 + $0x170] sm:$0xff] %vm520, 0.0
        %569 = vst.msk [vmem:[#allocation2 + $0x178] sm:$0x1] %vm522, 0.0
        %570 = vst.msk [vmem:[#allocation2 + $0x180] sm:$0xff] %vm520, 0.0
        %571 = vst.msk [vmem:[#allocation2 + $0x188] sm:$0x1] %vm522, 0.0
        %572 = vst.msk [vmem:[#allocation2 + $0x190] sm:$0xff] %vm520, 0.0
        %573 = vst.msk [vmem:[#allocation2 + $0x198] sm:$0x1] %vm522, 0.0
        %574 = vst.msk [vmem:[#allocation2 + $0x1a0] sm:$0xff] %vm520, 0.0
        %575 = vst.msk [vmem:[#allocation2 + $0x1a8] sm:$0x1] %vm522, 0.0
        %576 = vst.msk [vmem:[#allocation2 + $0x1b0] sm:$0xff] %vm520, 0.0
        %577 = vst.msk [vmem:[#allocation2 + $0x1b8] sm:$0x1] %vm522, 0.0
        %578 = vst.msk [vmem:[#allocation2 + $0x1c0] sm:$0xff] %vm520, 0.0
        %579 = vst.msk [vmem:[#allocation2 + $0x1c8] sm:$0x1] %vm522, 0.0
        %580 = vst.msk [vmem:[#allocation2 + $0x1d0] sm:$0xff] %vm520, 0.0
        %581 = vst.msk [vmem:[#allocation2 + $0x1d8] sm:$0x1] %vm522, 0.0
        %582 = vst.msk [vmem:[#allocation2 + $0x1e0] sm:$0xff] %vm520, 0.0
        %583 = vst.msk [vmem:[#allocation2 + $0x1e8] sm:$0x1] %vm522, 0.0
        %584 = vst.msk [vmem:[#allocation2 + $0x1f0] sm:$0xff] %vm520, 0.0
        %585 = vst.msk [vmem:[#allocation2 + $0x1f8] sm:$0x1] %vm522, 0.0
        %586 = vst.msk [vmem:[#allocation2 + $0x200] sm:$0xff] %vm520, 0.0
        %587 = vst.msk [vmem:[#allocation2 + $0x208] sm:$0x1] %vm522, 0.0
        %588 = vst.msk [vmem:[#allocation2 + $0x210] sm:$0xff] %vm520, 0.0
        %589 = vst.msk [vmem:[#allocation2 + $0x218] sm:$0x1] %vm522, 0.0
        %590 = vst.msk [vmem:[#allocation2 + $0x220] sm:$0xff] %vm520, 0.0
        %591 = vst.msk [vmem:[#allocation2 + $0x228] sm:$0x1] %vm522, 0.0
        %592 = vst.msk [vmem:[#allocation2 + $0x230] sm:$0xff] %vm520, 0.0
        %593 = vst.msk [vmem:[#allocation2 + $0x238] sm:$0x1] %vm522, 0.0
        %594 = vst.msk [vmem:[#allocation3] sm:$0xff] %vm520, 0.0
        %vm595 = vcmask 254976
        %596 = vst.msk [vmem:[#allocation3 + $0x8] sm:$0x3] %vm595, 0.0
        %597 = vst.msk [vmem:[#allocation3 + $0x10] sm:$0xff] %vm520, 0.0
        %598 = vst.msk [vmem:[#allocation3 + $0x18] sm:$0x3] %vm595, 0.0
        %599 = vst.msk [vmem:[#allocation3 + $0x20] sm:$0xff] %vm520, 0.0
        %600 = vst.msk [vmem:[#allocation3 + $0x28] sm:$0x3] %vm595, 0.0
        %601 = vst.msk [vmem:[#allocation3 + $0x30] sm:$0xff] %vm520, 0.0
        %602 = vst.msk [vmem:[#allocation3 + $0x38] sm:$0x3] %vm595, 0.0
        %603 = vst.msk [vmem:[#allocation3 + $0x40] sm:$0xff] %vm520, 0.0
        %604 = vst.msk [vmem:[#allocation3 + $0x48] sm:$0x3] %vm595, 0.0
        %605 = vst.msk [vmem:[#allocation3 + $0x50] sm:$0xff] %vm520, 0.0
        %606 = vst.msk [vmem:[#allocation3 + $0x58] sm:$0x3] %vm595, 0.0
        %607 = vst.msk [vmem:[#allocation3 + $0x60] sm:$0xff] %vm520, 0.0
        %608 = vst.msk [vmem:[#allocation3 + $0x68] sm:$0x3] %vm595, 0.0
        %609 = vst.msk [vmem:[#allocation3 + $0x70] sm:$0xff] %vm520, 0.0
        %610 = vst.msk [vmem:[#allocation3 + $0x78] sm:$0x3] %vm595, 0.0
        %611 = vst.msk [vmem:[#allocation3 + $0x80] sm:$0xff] %vm520, 0.0
        %612 = vst.msk [vmem:[#allocation3 + $0x88] sm:$0x3] %vm595, 0.0
        %613 = vst.msk [vmem:[#allocation3 + $0x90] sm:$0xff] %vm520, 0.0
        %614 = vst.msk [vmem:[#allocation3 + $0x98] sm:$0x3] %vm595, 0.0
        %v615 = vld [vmem:[%s2] sm:$0x1]
        %v616 = vld [vmem:[%s519] sm:$0xff]
        %v617 = vld [vmem:[%s519 + $0x8] sm:$0xff]
        %v618 = vld [vmem:[%s519 + $0x10] sm:$0xff]
        %v619 = vld [vmem:[%s519 + $0x18] sm:$0xff]
        %v620 = vld [vmem:[%s519 + $0x20] sm:$0xff]
        %v621 = vld [vmem:[%s519 + $0x28] sm:$0xff]
        %v622 = vld [vmem:[%s519 + $0x30] sm:$0xff]
        %v623 = vld [vmem:[%s519 + $0x38] sm:$0xff]
        %v624 = vld [vmem:[%s1] sm:$0xff]
        %v625 = vld [vmem:[%s1 + $0x8] sm:$0xff]
        %v626 = vld [vmem:[%s1 + $0x10] sm:$0xff]
        %v627 = vld [vmem:[%s1 + $0x18] sm:$0x7]
        %v629 = vlaneseq
        %v630 = vshrl.u32 %v629, 7
        %v631 = vsub.s32 0, %v630
        %v632 = vrot.slane %v615, %v631
        %vm634 = vcmask 220160
        %v636 = vsel %vm634, %v616, 0
        %v639 = vsel %vm634, %v617, 0
        %v642 = vsel %vm634, %v618, 0
        %v645 = vsel %vm634, %v619, 0
        %v648 = vsel %vm634, %v620, 0
        %v651 = vsel %vm634, %v621, 0
        %v654 = vsel %vm634, %v622, 0
        %v657 = vsel %vm634, %v623, 0
        %vm659 = vcmask 1042432
        %v661 = vsel %vm659, %v627, 0
        %663 = vmatprep.subr.mxu0 0.0
        %664 = vmatpush1.msra.mxu0 %v624
        %665 = vmatprep.subr.mxu0 0.0
        %666 = vmatpush1.msra.mxu0 %v625
        %667 = vmatprep.subr.mxu0 0.0
        %668 = vmatpush1.msra.mxu0 %v626
        %669 = vmatprep.subr.mxu0 0.0
        %670 = vmatpush1.msra.mxu0 %v661
        %671 = vmatprep.subr.mxu0 0.0
        %672 = vmatpush1.msra.mxu0 0.0
        %673 = vmatprep.subr.mxu0 0.0
        %674 = vmatpush1.msra.mxu0 0.0
        %675 = vmatprep.subr.mxu0 0.0
        %676 = vmatpush1.msra.mxu0 0.0
        %677 = vmatprep.subr.mxu0 0.0
        %678 = vmatpush1.msra.mxu0 0.0
        %679 = vmatprep.subr.mxu0 0.0
        %680 = vmatpush1.msra.mxu0 0.0
        %681 = vmatprep.subr.mxu0 0.0
        %682 = vmatpush1.msra.mxu0 0.0
        %683 = vmatprep.subr.mxu0 0.0
        %684 = vmatpush1.msra.mxu0 0.0
        %685 = vmatprep.subr.mxu0 0.0
        %686 = vmatpush1.msra.mxu0 0.0
        %687 = vmatprep.subr.mxu0 0.0
        %688 = vmatpush1.msra.mxu0 0.0
        %689 = vmatprep.subr.mxu0 0.0
        %690 = vmatpush1.msra.mxu0 0.0
        %691 = vmatprep.subr.mxu0 0.0
        %692 = vmatpush1.msra.mxu0 0.0
        %693 = vmatprep.subr.mxu0 0.0
        %694 = vmatpush1.msra.mxu0 0.0
        %695 = vmatprep.subr.mxu0 0.0
        %696 = vmatpush1.msra.mxu0 0.0
        %697 = vmatprep.subr.mxu0 0.0
        %698 = vmatpush1.msra.mxu0 0.0
        %699 = vmatprep.subr.mxu0 0.0
        %700 = vmatpush1.msra.mxu0 0.0
        %701 = vmatprep.subr.mxu0 0.0
        %702 = vmatpush1.msra.mxu0 0.0
        %703 = vmatprep.subr.mxu0 0.0
        %704 = vmatpush1.msra.mxu0 0.0
        %705 = vmatprep.subr.mxu0 0.0
        %706 = vmatpush1.msra.mxu0 0.0
        %707 = vmatprep.subr.mxu0 0.0
        %708 = vmatpush1.msra.mxu0 0.0
        %709 = vmatprep.subr.mxu0 0.0
        %710 = vmatpush1.msra.mxu0 0.0
        %711 = vmatprep.subr.mxu0 0.0
        %712 = vmatpush1.msra.mxu0 0.0
        %713 = vmatprep.subr.mxu0 0.0
        %714 = vmatpush1.msra.mxu0 0.0
        %715 = vmatprep.subr.mxu0 0.0
        %716 = vmatpush1.msra.mxu0 0.0
        %717 = vmatprep.subr.mxu0 0.0
        %718 = vmatpush1.msra.mxu0 0.0
        %719 = vmatprep.subr.mxu0 0.0
        %720 = vmatpush1.msra.mxu0 0.0
        %721 = vmatprep.subr.mxu0 0.0
        %722 = vmatpush1.msra.mxu0 0.0
        %723 = vmatprep.subr.mxu0 0.0
        %724 = vmatpush1.msra.mxu0 0.0
        %725 = vmatprep.subr.mxu0 0.0
        %726 = vmatpush1.msra.mxu0 0.0
        %727 = vmatprep.mubr.f32.mxu0 0.0
        %728 = vmatmul.mubr.f32.gmra.mrb[0].mxu0 %v636
        %v729 = vpop.f32.mrb[0].mxu0
        %v730 = vadd.f32 %v632, %v729
        %v731 = vpop.f32.mrb[0].mxu0
        %732 = vmatprep.mubr.f32.mxu0 0.0
        %733 = vmatmul.mubr.f32.gmra.mrb[0].mxu0 %v639
        %v734 = vpop.f32.mrb[0].mxu0
        %v735 = vadd.f32 %v632, %v734
        %v736 = vpop.f32.mrb[0].mxu0
        %737 = vmatprep.mubr.f32.mxu0 0.0
        %738 = vmatmul.mubr.f32.gmra.mrb[0].mxu0 %v642
        %v739 = vpop.f32.mrb[0].mxu0
        %v740 = vadd.f32 %v632, %v739
        %v741 = vpop.f32.mrb[0].mxu0
        %742 = vmatprep.mubr.f32.mxu0 0.0
        %743 = vmatmul.mubr.f32.gmra.mrb[0].mxu0 %v645
        %v744 = vpop.f32.mrb[0].mxu0
        %v745 = vadd.f32 %v632, %v744
        %v746 = vpop.f32.mrb[0].mxu0
        %747 = vmatprep.mubr.f32.mxu0 0.0
        %748 = vmatmul.mubr.f32.gmra.mrb[0].mxu0 %v648
        %v749 = vpop.f32.mrb[0].mxu0
        %v750 = vadd.f32 %v632, %v749
        %v751 = vpop.f32.mrb[0].mxu0
        %752 = vmatprep.mubr.f32.mxu0 0.0
        %753 = vmatmul.mubr.f32.gmra.mrb[0].mxu0 %v651
        %v754 = vpop.f32.mrb[0].mxu0
        %v755 = vadd.f32 %v632, %v754
        %v756 = vpop.f32.mrb[0].mxu0
        %757 = vmatprep.mubr.f32.mxu0 0.0
        %758 = vmatmul.mubr.f32.gmra.mrb[0].mxu0 %v654
        %v759 = vpop.f32.mrb[0].mxu0
        %v760 = vadd.f32 %v632, %v759
        %v761 = vpop.f32.mrb[0].mxu0
        %762 = vmatprep.mubr.f32.mxu0 0.0
        %763 = vmatmul.mubr.f32.gmra.mrb[0].mxu0 %v657
        %v764 = vpop.f32.mrb[0].mxu0
        %v765 = vadd.f32 %v632, %v764
        %v766 = vpop.f32.mrb[0].mxu0
        %767 = vdwg.mxu0
        %v768 = vmin.f32 %v730, 20.0
        %v769 = vmin.f32 %v735, 20.0
        %v770 = vmin.f32 %v740, 20.0
        %v771 = vmin.f32 %v745, 20.0
        %v772 = vmin.f32 %v750, 20.0
        %v773 = vmin.f32 %v755, 20.0
        %v774 = vmin.f32 %v760, 20.0
        %v775 = vmin.f32 %v765, 20.0
        %v776 = vmul.f32 %v768, 1.442695
        %v777 = vpow.pop %v776
        %v778 = vmul.f32 %v769, 1.442695
        %v779 = vpow.pop %v778
        %v780 = vmul.f32 %v770, 1.442695
        %v781 = vpow.pop %v780
        %v782 = vmul.f32 %v771, 1.442695
        %v783 = vpow.pop %v782
        %v784 = vmul.f32 %v772, 1.442695
        %v785 = vpow.pop %v784
        %v786 = vmul.f32 %v773, 1.442695
        %v787 = vpow.pop %v786
        %v788 = vmul.f32 %v774, 1.442695
        %v789 = vpow.pop %v788
        %v790 = vmul.f32 %v775, 1.442695
        %v791 = vpow.pop %v790
        %v792 = vadd.f32 %v777, 1.0
        %v793 = vadd.f32 %v779, 1.0
        %v794 = vadd.f32 %v781, 1.0
        %v795 = vadd.f32 %v783, 1.0
        %v796 = vadd.f32 %v785, 1.0
        %v797 = vadd.f32 %v787, 1.0
        %v798 = vadd.f32 %v789, 1.0
        %v799 = vadd.f32 %v791, 1.0
        %v800 = vmul.f32 %v792, %v792
        %v801 = vmul.f32 %v793, %v793
        %v802 = vmul.f32 %v794, %v794
        %v803 = vmul.f32 %v795, %v795
        %v804 = vmul.f32 %v796, %v796
        %v805 = vmul.f32 %v797, %v797
        %v806 = vmul.f32 %v798, %v798
        %v807 = vmul.f32 %v799, %v799
        %v808 = vsub.f32 %v800, 1.0
        %v809 = vsub.f32 %v801, 1.0
        %v810 = vsub.f32 %v802, 1.0
        %v811 = vsub.f32 %v803, 1.0
        %v812 = vsub.f32 %v804, 1.0
        %v813 = vsub.f32 %v805, 1.0
        %v814 = vsub.f32 %v806, 1.0
        %v815 = vsub.f32 %v807, 1.0
        %v816 = vmul.f32 %v730, %v808
        %v817 = vmul.f32 %v735, %v809
        %v818 = vmul.f32 %v740, %v810
        %v819 = vmul.f32 %v745, %v811
        %v820 = vmul.f32 %v750, %v812
        %v821 = vmul.f32 %v755, %v813
        %v822 = vmul.f32 %v760, %v814
        %v823 = vmul.f32 %v765, %v815
        %v824 = vadd.f32 %v800, 1.0
        %v825 = vadd.f32 %v801, 1.0
        %v826 = vadd.f32 %v802, 1.0
        %v827 = vadd.f32 %v803, 1.0
        %v828 = vadd.f32 %v804, 1.0
        %v829 = vadd.f32 %v805, 1.0
        %v830 = vadd.f32 %v806, 1.0
        %v831 = vadd.f32 %v807, 1.0
        %v832 = vrcp.pop %v824
        %v833 = vrcp.pop %v825
        %v834 = vrcp.pop %v826
        %v835 = vrcp.pop %v827
        %v836 = vrcp.pop %v828
        %v837 = vrcp.pop %v829
        %v838 = vrcp.pop %v830
        %v839 = vrcp.pop %v831
        %v840 = vmul.f32 %v816, %v832
        %v841 = vmul.f32 %v817, %v833
        %v842 = vmul.f32 %v818, %v834
        %v843 = vmul.f32 %v819, %v835
        %v844 = vmul.f32 %v820, %v836
        %v845 = vmul.f32 %v821, %v837
        %v846 = vmul.f32 %v822, %v838
        %v847 = vmul.f32 %v823, %v839
        %s848 = scalar_lea.vmem [#allocation2], 16
        %849 = vst.msk [vmem:[%s848 + $0x1] sm:$0xff] %vm520, %v840
        %850 = vst.msk [vmem:[%s848 + $0x11] sm:$0xff] %vm520, %v841
        %851 = vst.msk [vmem:[%s848 + $0x21] sm:$0xff] %vm520, %v842
        %852 = vst.msk [vmem:[%s848 + $0x31] sm:$0xff] %vm520, %v843
        %853 = vst.msk [vmem:[%s848 + $0x41] sm:$0xff] %vm520, %v844
        %854 = vst.msk [vmem:[%s848 + $0x51] sm:$0xff] %vm520, %v845
        %855 = vst.msk [vmem:[%s848 + $0x61] sm:$0xff] %vm520, %v846
        %856 = vst.msk [vmem:[%s848 + $0x71] sm:$0xff] %vm520, %v847
        %s857 = scalar_lea.vmem %s519, 64
        %v858 = vld [vmem:[%s857] sm:$0xff]
        %v859 = vld [vmem:[%s857 + $0x8] sm:$0xff]
        %v860 = vld [vmem:[%s857 + $0x10] sm:$0xff]
        %v861 = vld [vmem:[%s857 + $0x18] sm:$0xff]
        %v862 = vld [vmem:[%s857 + $0x20] sm:$0xff]
        %v863 = vld [vmem:[%s857 + $0x28] sm:$0xff]
        %v864 = vld [vmem:[%s857 + $0x30] sm:$0xff]
        %v865 = vld [vmem:[%s857 + $0x38] sm:$0xff]
        %v866 = vld [vmem:[%s1] sm:$0xff]
        %v867 = vld [vmem:[%s1 + $0x8] sm:$0xff]
        %v868 = vld [vmem:[%s1 + $0x10] sm:$0xff]
        %v869 = vld [vmem:[%s1 + $0x18] sm:$0x7]
        %v871 = vsel %vm634, %v858, 0
        %v874 = vsel %vm634, %v859, 0
        %v877 = vsel %vm634, %v860, 0
        %v880 = vsel %vm634, %v861, 0
        %v883 = vsel %vm634, %v862, 0
        %v886 = vsel %vm634, %v863, 0
        %v889 = vsel %vm634, %v864, 0
        %v892 = vsel %vm634, %v865, 0
        %v895 = vsel %vm659, %v869, 0
        %897 = vmatprep.subr.mxu0 0.0
        %898 = vmatpush1.msra.mxu0 %v866
        %899 = vmatprep.subr.mxu0 0.0
        %900 = vmatpush1.msra.mxu0 %v867
        %901 = vmatprep.subr.mxu0 0.0
        %902 = vmatpush1.msra.mxu0 %v868
        %903 = vmatprep.subr.mxu0 0.0
        %904 = vmatpush1.msra.mxu0 %v895
        %905 = vmatprep.subr.mxu0 0.0
        %906 = vmatpush1.msra.mxu0 0.0
        %907 = vmatprep.subr.mxu0 0.0
        %908 = vmatpush1.msra.mxu0 0.0
        %909 = vmatprep.subr.mxu0 0.0
        %910 = vmatpush1.msra.mxu0 0.0
        %911 = vmatprep.subr.mxu0 0.0
        %912 = vmatpush1.msra.mxu0 0.0
        %913 = vmatprep.subr.mxu0 0.0
        %914 = vmatpush1.msra.mxu0 0.0
        %915 = vmatprep.subr.mxu0 0.0
        %916 = vmatpush1.msra.mxu0 0.0
        %917 = vmatprep.subr.mxu0 0.0
        %918 = vmatpush1.msra.mxu0 0.0
        %919 = vmatprep.subr.mxu0 0.0
        %920 = vmatpush1.msra.mxu0 0.0
        %921 = vmatprep.subr.mxu0 0.0
        %922 = vmatpush1.msra.mxu0 0.0
        %923 = vmatprep.subr.mxu0 0.0
        %924 = vmatpush1.msra.mxu0 0.0
        %925 = vmatprep.subr.mxu0 0.0
        %926 = vmatpush1.msra.mxu0 0.0
        %927 = vmatprep.subr.mxu0 0.0
        %928 = vmatpush1.msra.mxu0 0.0
        %929 = vmatprep.subr.mxu0 0.0
        %930 = vmatpush1.msra.mxu0 0.0
        %931 = vmatprep.subr.mxu0 0.0
        %932 = vmatpush1.msra.mxu0 0.0
        %933 = vmatprep.subr.mxu0 0.0
        %934 = vmatpush1.msra.mxu0 0.0
        %935 = vmatprep.subr.mxu0 0.0
        %936 = vmatpush1.msra.mxu0 0.0
        %937 = vmatprep.subr.mxu0 0.0
        %938 = vmatpush1.msra.mxu0 0.0
        %939 = vmatprep.subr.mxu0 0.0
        %940 = vmatpush1.msra.mxu0 0.0
        %941 = vmatprep.subr.mxu0 0.0
        %942 = vmatpush1.msra.mxu0 0.0
        %943 = vmatprep.subr.mxu0 0.0
        %944 = vmatpush1.msra.mxu0 0.0
        %945 = vmatprep.subr.mxu0 0.0
        %946 = vmatpush1.msra.mxu0 0.0
        %947 = vmatprep.subr.mxu0 0.0
        %948 = vmatpush1.msra.mxu0 0.0
        %949 = vmatprep.subr.mxu0 0.0
        %950 = vmatpush1.msra.mxu0 0.0
        %951 = vmatprep.subr.mxu0 0.0
        %952 = vmatpush1.msra.mxu0 0.0
        %953 = vmatprep.subr.mxu0 0.0
        %954 = vmatpush1.msra.mxu0 0.0
        %955 = vmatprep.subr.mxu0 0.0
        %956 = vmatpush1.msra.mxu0 0.0
        %957 = vmatprep.subr.mxu0 0.0
        %958 = vmatpush1.msra.mxu0 0.0
        %959 = vmatprep.subr.mxu0 0.0
        %960 = vmatpush1.msra.mxu0 0.0
        %961 = vmatprep.mubr.f32.mxu0 0.0
        %962 = vmatmul.mubr.f32.gmra.mrb[0].mxu0 %v871
        %v963 = vpop.f32.mrb[0].mxu0
        %v964 = vadd.f32 %v632, %v963
        %v965 = vpop.f32.mrb[0].mxu0
        %966 = vmatprep.mubr.f32.mxu0 0.0
        %967 = vmatmul.mubr.f32.gmra.mrb[0].mxu0 %v874
        %v968 = vpop.f32.mrb[0].mxu0
        %v969 = vadd.f32 %v632, %v968
        %v970 = vpop.f32.mrb[0].mxu0
        %971 = vmatprep.mubr.f32.mxu0 0.0
        %972 = vmatmul.mubr.f32.gmra.mrb[0].mxu0 %v877
        %v973 = vpop.f32.mrb[0].mxu0
        %v974 = vadd.f32 %v632, %v973
        %v975 = vpop.f32.mrb[0].mxu0
        %976 = vmatprep.mubr.f32.mxu0 0.0
        %977 = vmatmul.mubr.f32.gmra.mrb[0].mxu0 %v880
        %v978 = vpop.f32.mrb[0].mxu0
        %v979 = vadd.f32 %v632, %v978
        %v980 = vpop.f32.mrb[0].mxu0
        %981 = vmatprep.mubr.f32.mxu0 0.0
        %982 = vmatmul.mubr.f32.gmra.mrb[0].mxu0 %v883
        %v983 = vpop.f32.mrb[0].mxu0
        %v984 = vadd.f32 %v632, %v983
        %v985 = vpop.f32.mrb[0].mxu0
        %986 = vmatprep.mubr.f32.mxu0 0.0
        %987 = vmatmul.mubr.f32.gmra.mrb[0].mxu0 %v886
        %v988 = vpop.f32.mrb[0].mxu0
        %v989 = vadd.f32 %v632, %v988
        %v990 = vpop.f32.mrb[0].mxu0
        %991 = vmatprep.mubr.f32.mxu0 0.0
        %992 = vmatmul.mubr.f32.gmra.mrb[0].mxu0 %v889
        %v993 = vpop.f32.mrb[0].mxu0
        %v994 = vadd.f32 %v632, %v993
        %v995 = vpop.f32.mrb[0].mxu0
        %996 = vmatprep.mubr.f32.mxu0 0.0
        %997 = vmatmul.mubr.f32.gmra.mrb[0].mxu0 %v892
        %v998 = vpop.f32.mrb[0].mxu0
        %v999 = vadd.f32 %v632, %v998
        %v1000 = vpop.f32.mrb[0].mxu0
        %1001 = vdwg.mxu0
        %v1002 = vmin.f32 %v964, 20.0
        %v1003 = vmin.f32 %v969, 20.0
        %v1004 = vmin.f32 %v974, 20.0
        %v1005 = vmin.f32 %v979, 20.0
        %v1006 = vmin.f32 %v984, 20.0
        %v1007 = vmin.f32 %v989, 20.0
        %v1008 = vmin.f32 %v994, 20.0
        %v1009 = vmin.f32 %v999, 20.0
        %v1010 = vmul.f32 %v1002, 1.442695
        %v1011 = vpow.pop %v1010
        %v1012 = vmul.f32 %v1003, 1.442695
        %v1013 = vpow.pop %v1012
        %v1014 = vmul.f32 %v1004, 1.442695
        %v1015 = vpow.pop %v1014
        %v1016 = vmul.f32 %v1005, 1.442695
        %v1017 = vpow.pop %v1016
        %v1018 = vmul.f32 %v1006, 1.442695
        %v1019 = vpow.pop %v1018
        %v1020 = vmul.f32 %v1007, 1.442695
        %v1021 = vpow.pop %v1020
        %v1022 = vmul.f32 %v1008, 1.442695
        %v1023 = vpow.pop %v1022
        %v1024 = vmul.f32 %v1009, 1.442695
        %v1025 = vpow.pop %v1024
        %v1026 = vadd.f32 %v1011, 1.0
        %v1027 = vadd.f32 %v1013, 1.0
        %v1028 = vadd.f32 %v1015, 1.0
        %v1029 = vadd.f32 %v1017, 1.0
        %v1030 = vadd.f32 %v1019, 1.0
        %v1031 = vadd.f32 %v1021, 1.0
        %v1032 = vadd.f32 %v1023, 1.0
        %v1033 = vadd.f32 %v1025, 1.0
        %v1034 = vmul.f32 %v1026, %v1026
        %v1035 = vmul.f32 %v1027, %v1027
        %v1036 = vmul.f32 %v1028, %v1028
        %v1037 = vmul.f32 %v1029, %v1029
        %v1038 = vmul.f32 %v1030, %v1030
        %v1039 = vmul.f32 %v1031, %v1031
        %v1040 = vmul.f32 %v1032, %v1032
        %v1041 = vmul.f32 %v1033, %v1033
        %v1042 = vsub.f32 %v1034, 1.0
        %v1043 = vsub.f32 %v1035, 1.0
        %v1044 = vsub.f32 %v1036, 1.0
        %v1045 = vsub.f32 %v1037, 1.0
        %v1046 = vsub.f32 %v1038, 1.0
        %v1047 = vsub.f32 %v1039, 1.0
        %v1048 = vsub.f32 %v1040, 1.0
        %v1049 = vsub.f32 %v1041, 1.0
        %v1050 = vmul.f32 %v964, %v1042
        %v1051 = vmul.f32 %v969, %v1043
        %v1052 = vmul.f32 %v974, %v1044
        %v1053 = vmul.f32 %v979, %v1045
        %v1054 = vmul.f32 %v984, %v1046
        %v1055 = vmul.f32 %v989, %v1047
        %v1056 = vmul.f32 %v994, %v1048
        %v1057 = vmul.f32 %v999, %v1049
        %v1058 = vadd.f32 %v1034, 1.0
        %v1059 = vadd.f32 %v1035, 1.0
        %v1060 = vadd.f32 %v1036, 1.0
        %v1061 = vadd.f32 %v1037, 1.0
        %v1062 = vadd.f32 %v1038, 1.0
        %v1063 = vadd.f32 %v1039, 1.0
        %v1064 = vadd.f32 %v1040, 1.0
        %v1065 = vadd.f32 %v1041, 1.0
        %v1066 = vrcp.pop %v1058
        %v1067 = vrcp.pop %v1059
        %v1068 = vrcp.pop %v1060
        %v1069 = vrcp.pop %v1061
        %v1070 = vrcp.pop %v1062
        %v1071 = vrcp.pop %v1063
        %v1072 = vrcp.pop %v1064
        %v1073 = vrcp.pop %v1065
        %v1074 = vmul.f32 %v1050, %v1066
        %v1075 = vmul.f32 %v1051, %v1067
        %v1076 = vmul.f32 %v1052, %v1068
        %v1077 = vmul.f32 %v1053, %v1069
        %v1078 = vmul.f32 %v1054, %v1070
        %v1079 = vmul.f32 %v1055, %v1071
        %v1080 = vmul.f32 %v1056, %v1072
        %v1081 = vmul.f32 %v1057, %v1073
        %s1082 = scalar_lea.vmem [#allocation2], 160
        %1083 = vst.msk [vmem:[%s1082 + $0x1] sm:$0xff] %vm520, %v1074
        %1084 = vst.msk [vmem:[%s1082 + $0x11] sm:$0xff] %vm520, %v1075
        %1085 = vst.msk [vmem:[%s1082 + $0x21] sm:$0xff] %vm520, %v1076
        %1086 = vst.msk [vmem:[%s1082 + $0x31] sm:$0xff] %vm520, %v1077
        %1087 = vst.msk [vmem:[%s1082 + $0x41] sm:$0xff] %vm520, %v1078
        %1088 = vst.msk [vmem:[%s1082 + $0x51] sm:$0xff] %vm520, %v1079
        %1089 = vst.msk [vmem:[%s1082 + $0x61] sm:$0xff] %vm520, %v1080
        %1090 = vst.msk [vmem:[%s1082 + $0x71] sm:$0xff] %vm520, %v1081
        %s1091 = scalar_lea.vmem %s519, 128
        %v1092 = vld [vmem:[%s1091] sm:$0xff]
        %v1093 = vld [vmem:[%s1091 + $0x8] sm:$0xff]
        %v1094 = vld [vmem:[%s1091 + $0x10] sm:$0xff]
        %v1095 = vld [vmem:[%s1091 + $0x18] sm:$0xff]
        %v1096 = vld [vmem:[%s1091 + $0x20] sm:$0xff]
        %v1097 = vld [vmem:[%s1091 + $0x28] sm:$0xff]
        %v1098 = vld [vmem:[%s1091 + $0x30] sm:$0xff]
        %v1099 = vld [vmem:[%s1091 + $0x38] sm:$0xff]
        %v1100 = vld [vmem:[%s1] sm:$0xff]
        %v1101 = vld [vmem:[%s1 + $0x8] sm:$0xff]
        %v1102 = vld [vmem:[%s1 + $0x10] sm:$0xff]
        %v1103 = vld [vmem:[%s1 + $0x18] sm:$0x7]
        %v1105 = vsel %vm634, %v1092, 0
        %v1108 = vsel %vm634, %v1093, 0
        %v1111 = vsel %vm634, %v1094, 0
        %v1114 = vsel %vm634, %v1095, 0
        %v1117 = vsel %vm634, %v1096, 0
        %v1120 = vsel %vm634, %v1097, 0
        %v1123 = vsel %vm634, %v1098, 0
        %v1126 = vsel %vm634, %v1099, 0
        %v1129 = vsel %vm659, %v1103, 0
        %1131 = vmatprep.subr.mxu0 0.0
        %1132 = vmatpush1.msra.mxu0 %v1100
        %1133 = vmatprep.subr.mxu0 0.0
        %1134 = vmatpush1.msra.mxu0 %v1101
        %1135 = vmatprep.subr.mxu0 0.0
        %1136 = vmatpush1.msra.mxu0 %v1102
        %1137 = vmatprep.subr.mxu0 0.0
        %1138 = vmatpush1.msra.mxu0 %v1129
        %1139 = vmatprep.subr.mxu0 0.0
        %1140 = vmatpush1.msra.mxu0 0.0
        %1141 = vmatprep.subr.mxu0 0.0
        %1142 = vmatpush1.msra.mxu0 0.0
        %1143 = vmatprep.subr.mxu0 0.0
        %1144 = vmatpush1.msra.mxu0 0.0
        %1145 = vmatprep.subr.mxu0 0.0
        %1146 = vmatpush1.msra.mxu0 0.0
        %1147 = vmatprep.subr.mxu0 0.0
        %1148 = vmatpush1.msra.mxu0 0.0
        %1149 = vmatprep.subr.mxu0 0.0
        %1150 = vmatpush1.msra.mxu0 0.0
        %1151 = vmatprep.subr.mxu0 0.0
        %1152 = vmatpush1.msra.mxu0 0.0
        %1153 = vmatprep.subr.mxu0 0.0
        %1154 = vmatpush1.msra.mxu0 0.0
        %1155 = vmatprep.subr.mxu0 0.0
        %1156 = vmatpush1.msra.mxu0 0.0
        %1157 = vmatprep.subr.mxu0 0.0
        %1158 = vmatpush1.msra.mxu0 0.0
        %1159 = vmatprep.subr.mxu0 0.0
        %1160 = vmatpush1.msra.mxu0 0.0
        %1161 = vmatprep.subr.mxu0 0.0
        %1162 = vmatpush1.msra.mxu0 0.0
        %1163 = vmatprep.subr.mxu0 0.0
        %1164 = vmatpush1.msra.mxu0 0.0
        %1165 = vmatprep.subr.mxu0 0.0
        %1166 = vmatpush1.msra.mxu0 0.0
        %1167 = vmatprep.subr.mxu0 0.0
        %1168 = vmatpush1.msra.mxu0 0.0
        %1169 = vmatprep.subr.mxu0 0.0
        %1170 = vmatpush1.msra.mxu0 0.0
        %1171 = vmatprep.subr.mxu0 0.0
        %1172 = vmatpush1.msra.mxu0 0.0
        %1173 = vmatprep.subr.mxu0 0.0
        %1174 = vmatpush1.msra.mxu0 0.0
        %1175 = vmatprep.subr.mxu0 0.0
        %1176 = vmatpush1.msra.mxu0 0.0
        %1177 = vmatprep.subr.mxu0 0.0
        %1178 = vmatpush1.msra.mxu0 0.0
        %1179 = vmatprep.subr.mxu0 0.0
        %1180 = vmatpush1.msra.mxu0 0.0
        %1181 = vmatprep.subr.mxu0 0.0
        %1182 = vmatpush1.msra.mxu0 0.0
        %1183 = vmatprep.subr.mxu0 0.0
        %1184 = vmatpush1.msra.mxu0 0.0
        %1185 = vmatprep.subr.mxu0 0.0
        %1186 = vmatpush1.msra.mxu0 0.0
        %1187 = vmatprep.subr.mxu0 0.0
        %1188 = vmatpush1.msra.mxu0 0.0
        %1189 = vmatprep.subr.mxu0 0.0
        %1190 = vmatpush1.msra.mxu0 0.0
        %1191 = vmatprep.subr.mxu0 0.0
        %1192 = vmatpush1.msra.mxu0 0.0
        %1193 = vmatprep.subr.mxu0 0.0
        %1194 = vmatpush1.msra.mxu0 0.0
        %1195 = vmatprep.mubr.f32.mxu0 0.0
        %1196 = vmatmul.mubr.f32.gmra.mrb[0].mxu0 %v1105
        %v1197 = vpop.f32.mrb[0].mxu0
        %v1198 = vadd.f32 %v632, %v1197
        %v1199 = vpop.f32.mrb[0].mxu0
        %1200 = vmatprep.mubr.f32.mxu0 0.0
        %1201 = vmatmul.mubr.f32.gmra.mrb[0].mxu0 %v1108
        %v1202 = vpop.f32.mrb[0].mxu0
        %v1203 = vadd.f32 %v632, %v1202
        %v1204 = vpop.f32.mrb[0].mxu0
        %1205 = vmatprep.mubr.f32.mxu0 0.0
        %1206 = vmatmul.mubr.f32.gmra.mrb[0].mxu0 %v1111
        %v1207 = vpop.f32.mrb[0].mxu0
        %v1208 = vadd.f32 %v632, %v1207
        %v1209 = vpop.f32.mrb[0].mxu0
        %1210 = vmatprep.mubr.f32.mxu0 0.0
        %1211 = vmatmul.mubr.f32.gmra.mrb[0].mxu0 %v1114
        %v1212 = vpop.f32.mrb[0].mxu0
        %v1213 = vadd.f32 %v632, %v1212
        %v1214 = vpop.f32.mrb[0].mxu0
        %1215 = vmatprep.mubr.f32.mxu0 0.0
        %1216 = vmatmul.mubr.f32.gmra.mrb[0].mxu0 %v1117
        %v1217 = vpop.f32.mrb[0].mxu0
        %v1218 = vadd.f32 %v632, %v1217
        %v1219 = vpop.f32.mrb[0].mxu0
        %1220 = vmatprep.mubr.f32.mxu0 0.0
        %1221 = vmatmul.mubr.f32.gmra.mrb[0].mxu0 %v1120
        %v1222 = vpop.f32.mrb[0].mxu0
        %v1223 = vadd.f32 %v632, %v1222
        %v1224 = vpop.f32.mrb[0].mxu0
        %1225 = vmatprep.mubr.f32.mxu0 0.0
        %1226 = vmatmul.mubr.f32.gmra.mrb[0].mxu0 %v1123
        %v1227 = vpop.f32.mrb[0].mxu0
        %v1228 = vadd.f32 %v632, %v1227
        %v1229 = vpop.f32.mrb[0].mxu0
        %1230 = vmatprep.mubr.f32.mxu0 0.0
        %1231 = vmatmul.mubr.f32.gmra.mrb[0].mxu0 %v1126
        %v1232 = vpop.f32.mrb[0].mxu0
        %v1233 = vadd.f32 %v632, %v1232
        %v1234 = vpop.f32.mrb[0].mxu0
        %1235 = vdwg.mxu0
        %v1236 = vmin.f32 %v1198, 20.0
        %v1237 = vmin.f32 %v1203, 20.0
        %v1238 = vmin.f32 %v1208, 20.0
        %v1239 = vmin.f32 %v1213, 20.0
        %v1240 = vmin.f32 %v1218, 20.0
        %v1241 = vmin.f32 %v1223, 20.0
        %v1242 = vmin.f32 %v1228, 20.0
        %v1243 = vmin.f32 %v1233, 20.0
        %v1244 = vmul.f32 %v1236, 1.442695
        %v1245 = vpow.pop %v1244
        %v1246 = vmul.f32 %v1237, 1.442695
        %v1247 = vpow.pop %v1246
        %v1248 = vmul.f32 %v1238, 1.442695
        %v1249 = vpow.pop %v1248
        %v1250 = vmul.f32 %v1239, 1.442695
        %v1251 = vpow.pop %v1250
        %v1252 = vmul.f32 %v1240, 1.442695
        %v1253 = vpow.pop %v1252
        %v1254 = vmul.f32 %v1241, 1.442695
        %v1255 = vpow.pop %v1254
        %v1256 = vmul.f32 %v1242, 1.442695
        %v1257 = vpow.pop %v1256
        %v1258 = vmul.f32 %v1243, 1.442695
        %v1259 = vpow.pop %v1258
        %v1260 = vadd.f32 %v1245, 1.0
        %v1261 = vadd.f32 %v1247, 1.0
        %v1262 = vadd.f32 %v1249, 1.0
        %v1263 = vadd.f32 %v1251, 1.0
        %v1264 = vadd.f32 %v1253, 1.0
        %v1265 = vadd.f32 %v1255, 1.0
        %v1266 = vadd.f32 %v1257, 1.0
        %v1267 = vadd.f32 %v1259, 1.0
        %v1268 = vmul.f32 %v1260, %v1260
        %v1269 = vmul.f32 %v1261, %v1261
        %v1270 = vmul.f32 %v1262, %v1262
        %v1271 = vmul.f32 %v1263, %v1263
        %v1272 = vmul.f32 %v1264, %v1264
        %v1273 = vmul.f32 %v1265, %v1265
        %v1274 = vmul.f32 %v1266, %v1266
        %v1275 = vmul.f32 %v1267, %v1267
        %v1276 = vsub.f32 %v1268, 1.0
        %v1277 = vsub.f32 %v1269, 1.0
        %v1278 = vsub.f32 %v1270, 1.0
        %v1279 = vsub.f32 %v1271, 1.0
        %v1280 = vsub.f32 %v1272, 1.0
        %v1281 = vsub.f32 %v1273, 1.0
        %v1282 = vsub.f32 %v1274, 1.0
        %v1283 = vsub.f32 %v1275, 1.0
        %v1284 = vmul.f32 %v1198, %v1276
        %v1285 = vmul.f32 %v1203, %v1277
        %v1286 = vmul.f32 %v1208, %v1278
        %v1287 = vmul.f32 %v1213, %v1279
        %v1288 = vmul.f32 %v1218, %v1280
        %v1289 = vmul.f32 %v1223, %v1281
        %v1290 = vmul.f32 %v1228, %v1282
        %v1291 = vmul.f32 %v1233, %v1283
        %v1292 = vadd.f32 %v1268, 1.0
        %v1293 = vadd.f32 %v1269, 1.0
        %v1294 = vadd.f32 %v1270, 1.0
        %v1295 = vadd.f32 %v1271, 1.0
        %v1296 = vadd.f32 %v1272, 1.0
        %v1297 = vadd.f32 %v1273, 1.0
        %v1298 = vadd.f32 %v1274, 1.0
        %v1299 = vadd.f32 %v1275, 1.0
        %v1300 = vrcp.pop %v1292
        %v1301 = vrcp.pop %v1293
        %v1302 = vrcp.pop %v1294
        %v1303 = vrcp.pop %v1295
        %v1304 = vrcp.pop %v1296
        %v1305 = vrcp.pop %v1297
        %v1306 = vrcp.pop %v1298
        %v1307 = vrcp.pop %v1299
        %v1308 = vmul.f32 %v1284, %v1300
        %v1309 = vmul.f32 %v1285, %v1301
        %v1310 = vmul.f32 %v1286, %v1302
        %v1311 = vmul.f32 %v1287, %v1303
        %v1312 = vmul.f32 %v1288, %v1304
        %v1313 = vmul.f32 %v1289, %v1305
        %v1314 = vmul.f32 %v1290, %v1306
        %v1315 = vmul.f32 %v1291, %v1307
        %s1316 = scalar_lea.vmem [#allocation2], 304
        %1317 = vst.msk [vmem:[%s1316 + $0x1] sm:$0xff] %vm520, %v1308
        %1318 = vst.msk [vmem:[%s1316 + $0x11] sm:$0xff] %vm520, %v1309
        %1319 = vst.msk [vmem:[%s1316 + $0x21] sm:$0xff] %vm520, %v1310
        %1320 = vst.msk [vmem:[%s1316 + $0x31] sm:$0xff] %vm520, %v1311
        %1321 = vst.msk [vmem:[%s1316 + $0x41] sm:$0xff] %vm520, %v1312
        %1322 = vst.msk [vmem:[%s1316 + $0x51] sm:$0xff] %vm520, %v1313
        %1323 = vst.msk [vmem:[%s1316 + $0x61] sm:$0xff] %vm520, %v1314
        %1324 = vst.msk [vmem:[%s1316 + $0x71] sm:$0xff] %vm520, %v1315
        %s1325 = scalar_lea.vmem %s519, 192
        %v1326 = vld [vmem:[%s1325] sm:$0xff]
        %v1327 = vld [vmem:[%s1325 + $0x8] sm:$0xff]
        %v1328 = vld [vmem:[%s1325 + $0x10] sm:$0xff]
        %v1329 = vld [vmem:[%s1325 + $0x18] sm:$0xff]
        %v1330 = vld [vmem:[%s1325 + $0x20] sm:$0xff]
        %v1331 = vld [vmem:[%s1325 + $0x28] sm:$0xff]
        %v1332 = vld [vmem:[%s1325 + $0x30] sm:$0xff]
        %v1333 = vld [vmem:[%s1325 + $0x38] sm:$0xff]
        %v1334 = vld [vmem:[%s1] sm:$0xff]
        %v1335 = vld [vmem:[%s1 + $0x8] sm:$0xff]
        %v1336 = vld [vmem:[%s1 + $0x10] sm:$0xff]
        %v1337 = vld [vmem:[%s1 + $0x18] sm:$0x7]
        %v1339 = vsel %vm634, %v1326, 0
        %v1342 = vsel %vm634, %v1327, 0
        %v1345 = vsel %vm634, %v1328, 0
        %v1348 = vsel %vm634, %v1329, 0
        %v1351 = vsel %vm634, %v1330, 0
        %v1354 = vsel %vm634, %v1331, 0
        %v1357 = vsel %vm634, %v1332, 0
        %v1360 = vsel %vm634, %v1333, 0
        %v1363 = vsel %vm659, %v1337, 0
        %1365 = vmatprep.subr.mxu0 0.0
        %1366 = vmatpush1.msra.mxu0 %v1334
        %1367 = vmatprep.subr.mxu0 0.0
        %1368 = vmatpush1.msra.mxu0 %v1335
        %1369 = vmatprep.subr.mxu0 0.0
        %1370 = vmatpush1.msra.mxu0 %v1336
        %1371 = vmatprep.subr.mxu0 0.0
        %1372 = vmatpush1.msra.mxu0 %v1363
        %1373 = vmatprep.subr.mxu0 0.0
        %1374 = vmatpush1.msra.mxu0 0.0
        %1375 = vmatprep.subr.mxu0 0.0
        %1376 = vmatpush1.msra.mxu0 0.0
        %1377 = vmatprep.subr.mxu0 0.0
        %1378 = vmatpush1.msra.mxu0 0.0
        %1379 = vmatprep.subr.mxu0 0.0
        %1380 = vmatpush1.msra.mxu0 0.0
        %1381 = vmatprep.subr.mxu0 0.0
        %1382 = vmatpush1.msra.mxu0 0.0
        %1383 = vmatprep.subr.mxu0 0.0
        %1384 = vmatpush1.msra.mxu0 0.0
        %1385 = vmatprep.subr.mxu0 0.0
        %1386 = vmatpush1.msra.mxu0 0.0
        %1387 = vmatprep.subr.mxu0 0.0
        %1388 = vmatpush1.msra.mxu0 0.0
        %1389 = vmatprep.subr.mxu0 0.0
        %1390 = vmatpush1.msra.mxu0 0.0
        %1391 = vmatprep.subr.mxu0 0.0
        %1392 = vmatpush1.msra.mxu0 0.0
        %1393 = vmatprep.subr.mxu0 0.0
        %1394 = vmatpush1.msra.mxu0 0.0
        %1395 = vmatprep.subr.mxu0 0.0
        %1396 = vmatpush1.msra.mxu0 0.0
        %1397 = vmatprep.subr.mxu0 0.0
        %1398 = vmatpush1.msra.mxu0 0.0
        %1399 = vmatprep.subr.mxu0 0.0
        %1400 = vmatpush1.msra.mxu0 0.0
        %1401 = vmatprep.subr.mxu0 0.0
        %1402 = vmatpush1.msra.mxu0 0.0
        %1403 = vmatprep.subr.mxu0 0.0
        %1404 = vmatpush1.msra.mxu0 0.0
        %1405 = vmatprep.subr.mxu0 0.0
        %1406 = vmatpush1.msra.mxu0 0.0
        %1407 = vmatprep.subr.mxu0 0.0
        %1408 = vmatpush1.msra.mxu0 0.0
        %1409 = vmatprep.subr.mxu0 0.0
        %1410 = vmatpush1.msra.mxu0 0.0
        %1411 = vmatprep.subr.mxu0 0.0
        %1412 = vmatpush1.msra.mxu0 0.0
        %1413 = vmatprep.subr.mxu0 0.0
        %1414 = vmatpush1.msra.mxu0 0.0
        %1415 = vmatprep.subr.mxu0 0.0
        %1416 = vmatpush1.msra.mxu0 0.0
        %1417 = vmatprep.subr.mxu0 0.0
        %1418 = vmatpush1.msra.mxu0 0.0
        %1419 = vmatprep.subr.mxu0 0.0
        %1420 = vmatpush1.msra.mxu0 0.0
        %1421 = vmatprep.subr.mxu0 0.0
        %1422 = vmatpush1.msra.mxu0 0.0
        %1423 = vmatprep.subr.mxu0 0.0
        %1424 = vmatpush1.msra.mxu0 0.0
        %1425 = vmatprep.subr.mxu0 0.0
        %1426 = vmatpush1.msra.mxu0 0.0
        %1427 = vmatprep.subr.mxu0 0.0
        %1428 = vmatpush1.msra.mxu0 0.0
        %1429 = vmatprep.mubr.f32.mxu0 0.0
        %1430 = vmatmul.mubr.f32.gmra.mrb[0].mxu0 %v1339
        %v1431 = vpop.f32.mrb[0].mxu0
        %v1432 = vadd.f32 %v632, %v1431
        %v1433 = vpop.f32.mrb[0].mxu0
        %1434 = vmatprep.mubr.f32.mxu0 0.0
        %1435 = vmatmul.mubr.f32.gmra.mrb[0].mxu0 %v1342
        %v1436 = vpop.f32.mrb[0].mxu0
        %v1437 = vadd.f32 %v632, %v1436
        %v1438 = vpop.f32.mrb[0].mxu0
        %1439 = vmatprep.mubr.f32.mxu0 0.0
        %1440 = vmatmul.mubr.f32.gmra.mrb[0].mxu0 %v1345
        %v1441 = vpop.f32.mrb[0].mxu0
        %v1442 = vadd.f32 %v632, %v1441
        %v1443 = vpop.f32.mrb[0].mxu0
        %1444 = vmatprep.mubr.f32.mxu0 0.0
        %1445 = vmatmul.mubr.f32.gmra.mrb[0].mxu0 %v1348
        %v1446 = vpop.f32.mrb[0].mxu0
        %v1447 = vadd.f32 %v632, %v1446
        %v1448 = vpop.f32.mrb[0].mxu0
        %1449 = vmatprep.mubr.f32.mxu0 0.0
        %1450 = vmatmul.mubr.f32.gmra.mrb[0].mxu0 %v1351
        %v1451 = vpop.f32.mrb[0].mxu0
        %v1452 = vadd.f32 %v632, %v1451
        %v1453 = vpop.f32.mrb[0].mxu0
        %1454 = vmatprep.mubr.f32.mxu0 0.0
        %1455 = vmatmul.mubr.f32.gmra.mrb[0].mxu0 %v1354
        %v1456 = vpop.f32.mrb[0].mxu0
        %v1457 = vadd.f32 %v632, %v1456
        %v1458 = vpop.f32.mrb[0].mxu0
        %1459 = vmatprep.mubr.f32.mxu0 0.0
        %1460 = vmatmul.mubr.f32.gmra.mrb[0].mxu0 %v1357
        %v1461 = vpop.f32.mrb[0].mxu0
        %v1462 = vadd.f32 %v632, %v1461
        %v1463 = vpop.f32.mrb[0].mxu0
        %1464 = vmatprep.mubr.f32.mxu0 0.0
        %1465 = vmatmul.mubr.f32.gmra.mrb[0].mxu0 %v1360
        %v1466 = vpop.f32.mrb[0].mxu0
        %v1467 = vadd.f32 %v632, %v1466
        %v1468 = vpop.f32.mrb[0].mxu0
        %1469 = vdwg.mxu0
        %v1470 = vmin.f32 %v1432, 20.0
        %v1471 = vmin.f32 %v1437, 20.0
        %v1472 = vmin.f32 %v1442, 20.0
        %v1473 = vmin.f32 %v1447, 20.0
        %v1474 = vmin.f32 %v1452, 20.0
        %v1475 = vmin.f32 %v1457, 20.0
        %v1476 = vmin.f32 %v1462, 20.0
        %v1477 = vmin.f32 %v1467, 20.0
        %v1478 = vmul.f32 %v1470, 1.442695
        %v1479 = vpow.pop %v1478
        %v1480 = vmul.f32 %v1471, 1.442695
        %v1481 = vpow.pop %v1480
        %v1482 = vmul.f32 %v1472, 1.442695
        %v1483 = vpow.pop %v1482
        %v1484 = vmul.f32 %v1473, 1.442695
        %v1485 = vpow.pop %v1484
        %v1486 = vmul.f32 %v1474, 1.442695
        %v1487 = vpow.pop %v1486
        %v1488 = vmul.f32 %v1475, 1.442695
        %v1489 = vpow.pop %v1488
        %v1490 = vmul.f32 %v1476, 1.442695
        %v1491 = vpow.pop %v1490
        %v1492 = vmul.f32 %v1477, 1.442695
        %v1493 = vpow.pop %v1492
        %v1494 = vadd.f32 %v1479, 1.0
        %v1495 = vadd.f32 %v1481, 1.0
        %v1496 = vadd.f32 %v1483, 1.0
        %v1497 = vadd.f32 %v1485, 1.0
        %v1498 = vadd.f32 %v1487, 1.0
        %v1499 = vadd.f32 %v1489, 1.0
        %v1500 = vadd.f32 %v1491, 1.0
        %v1501 = vadd.f32 %v1493, 1.0
        %v1502 = vmul.f32 %v1494, %v1494
        %v1503 = vmul.f32 %v1495, %v1495
        %v1504 = vmul.f32 %v1496, %v1496
        %v1505 = vmul.f32 %v1497, %v1497
        %v1506 = vmul.f32 %v1498, %v1498
        %v1507 = vmul.f32 %v1499, %v1499
        %v1508 = vmul.f32 %v1500, %v1500
        %v1509 = vmul.f32 %v1501, %v1501
        %v1510 = vsub.f32 %v1502, 1.0
        %v1511 = vsub.f32 %v1503, 1.0
        %v1512 = vsub.f32 %v1504, 1.0
        %v1513 = vsub.f32 %v1505, 1.0
        %v1514 = vsub.f32 %v1506, 1.0
        %v1515 = vsub.f32 %v1507, 1.0
        %v1516 = vsub.f32 %v1508, 1.0
        %v1517 = vsub.f32 %v1509, 1.0
        %v1518 = vmul.f32 %v1432, %v1510
        %v1519 = vmul.f32 %v1437, %v1511
        %v1520 = vmul.f32 %v1442, %v1512
        %v1521 = vmul.f32 %v1447, %v1513
        %v1522 = vmul.f32 %v1452, %v1514
        %v1523 = vmul.f32 %v1457, %v1515
        %v1524 = vmul.f32 %v1462, %v1516
        %v1525 = vmul.f32 %v1467, %v1517
        %v1526 = vadd.f32 %v1502, 1.0
        %v1527 = vadd.f32 %v1503, 1.0
        %v1528 = vadd.f32 %v1504, 1.0
        %v1529 = vadd.f32 %v1505, 1.0
        %v1530 = vadd.f32 %v1506, 1.0
        %v1531 = vadd.f32 %v1507, 1.0
        %v1532 = vadd.f32 %v1508, 1.0
        %v1533 = vadd.f32 %v1509, 1.0
        %v1534 = vrcp.pop %v1526
        %v1535 = vrcp.pop %v1527
        %v1536 = vrcp.pop %v1528
        %v1537 = vrcp.pop %v1529
        %v1538 = vrcp.pop %v1530
        %v1539 = vrcp.pop %v1531
        %v1540 = vrcp.pop %v1532
        %v1541 = vrcp.pop %v1533
        %v1542 = vmul.f32 %v1518, %v1534
        %v1543 = vmul.f32 %v1519, %v1535
        %v1544 = vmul.f32 %v1520, %v1536
        %v1545 = vmul.f32 %v1521, %v1537
        %v1546 = vmul.f32 %v1522, %v1538
        %v1547 = vmul.f32 %v1523, %v1539
        %v1548 = vmul.f32 %v1524, %v1540
        %v1549 = vmul.f32 %v1525, %v1541
        %s1550 = scalar_lea.vmem [#allocation2], 448
        %1551 = vst.msk [vmem:[%s1550 + $0x1] sm:$0xff] %vm520, %v1542
        %1552 = vst.msk [vmem:[%s1550 + $0x11] sm:$0xff] %vm520, %v1543
        %1553 = vst.msk [vmem:[%s1550 + $0x21] sm:$0xff] %vm520, %v1544
        %1554 = vst.msk [vmem:[%s1550 + $0x31] sm:$0xff] %vm520, %v1545
        %1555 = vst.msk [vmem:[%s1550 + $0x41] sm:$0xff] %vm520, %v1546
        %1556 = vst.msk [vmem:[%s1550 + $0x51] sm:$0xff] %vm520, %v1547
        %1557 = vst.msk [vmem:[%s1550 + $0x61] sm:$0xff] %vm520, %v1548
        %1558 = vst.msk [vmem:[%s1550 + $0x71] sm:$0xff] %vm520, %v1549
        %s1559 = scalar_lea.vmem [#allocation2], 432
        %v1560 = vld [vmem:[%s1559] sm:$0xff]
        %v1561 = vld [vmem:[%s1559 + $0x10] sm:$0xff]
        %v1562 = vld [vmem:[%s1559 + $0x20] sm:$0xff]
        %v1563 = vld [vmem:[%s1559 + $0x30] sm:$0xff]
        %v1564 = vld [vmem:[%s1559 + $0x40] sm:$0xff]
        %v1565 = vld [vmem:[%s1559 + $0x50] sm:$0xff]
        %v1566 = vld [vmem:[%s1559 + $0x60] sm:$0xff]
        %v1567 = vld [vmem:[%s1559 + $0x70] sm:$0xff]
        %v1568 = vld [vmem:[%s3] sm:$0xff]
        %v1569 = vld [vmem:[%s3 + $0x8] sm:$0xff]
        %v1570 = vld [vmem:[%s3 + $0x10] sm:$0xff]
        %v1571 = vld [vmem:[%s3 + $0x18] sm:$0xff]
        %s1572 = scalar_lea.vmem [#allocation2], 288
        %v1573 = vld [vmem:[%s1572 + $0x1] sm:$0xff]
        %v1574 = vld [vmem:[%s1572 + $0x11] sm:$0xff]
        %v1575 = vld [vmem:[%s1572 + $0x21] sm:$0xff]
        %v1576 = vld [vmem:[%s1572 + $0x31] sm:$0xff]
        %v1577 = vld [vmem:[%s1572 + $0x41] sm:$0xff]
        %v1578 = vld [vmem:[%s1572 + $0x51] sm:$0xff]
        %v1579 = vld [vmem:[%s1572 + $0x61] sm:$0xff]
        %v1580 = vld [vmem:[%s1572 + $0x71] sm:$0xff]
        %s1581 = scalar_lea.vmem %s3, 32
        %v1582 = vld [vmem:[%s1581] sm:$0xff]
        %v1583 = vld [vmem:[%s1581 + $0x8] sm:$0xff]
        %v1584 = vld [vmem:[%s1581 + $0x10] sm:$0xff]
        %v1585 = vld [vmem:[%s1581 + $0x18] sm:$0xff]
        %v1587 = vsel %vm520, %v1573, 0
        %v1590 = vsel %vm520, %v1574, 0
        %v1593 = vsel %vm520, %v1575, 0
        %v1596 = vsel %vm520, %v1576, 0
        %v1599 = vsel %vm520, %v1577, 0
        %v1602 = vsel %vm520, %v1578, 0
        %v1605 = vsel %vm520, %v1579, 0
        %v1608 = vsel %vm520, %v1580, 0
        %1610 = vmatprep.subr.mxu0 0.0
        %1611 = vmatpush1.msra.mxu0 %v1582
        %1612 = vmatprep.subr.mxu0 0.0
        %1613 = vmatpush1.msra.mxu0 %v1583
        %1614 = vmatprep.subr.mxu0 0.0
        %1615 = vmatpush1.msra.mxu0 %v1584
        %1616 = vmatprep.subr.mxu0 0.0
        %1617 = vmatpush1.msra.mxu0 %v1585
        %1618 = vmatprep.subr.mxu0 0.0
        %1619 = vmatpush1.msra.mxu0 0.0
        %1620 = vmatprep.subr.mxu0 0.0
        %1621 = vmatpush1.msra.mxu0 0.0
        %1622 = vmatprep.subr.mxu0 0.0
        %1623 = vmatpush1.msra.mxu0 0.0
        %1624 = vmatprep.subr.mxu0 0.0
        %1625 = vmatpush1.msra.mxu0 0.0
        %1626 = vmatprep.subr.mxu0 0.0
        %1627 = vmatpush1.msra.mxu0 0.0
        %1628 = vmatprep.subr.mxu0 0.0
        %1629 = vmatpush1.msra.mxu0 0.0
        %1630 = vmatprep.subr.mxu0 0.0
        %1631 = vmatpush1.msra.mxu0 0.0
        %1632 = vmatprep.subr.mxu0 0.0
        %1633 = vmatpush1.msra.mxu0 0.0
        %1634 = vmatprep.subr.mxu0 0.0
        %1635 = vmatpush1.msra.mxu0 0.0
        %1636 = vmatprep.subr.mxu0 0.0
        %1637 = vmatpush1.msra.mxu0 0.0
        %1638 = vmatprep.subr.mxu0 0.0
        %1639 = vmatpush1.msra.mxu0 0.0
        %1640 = vmatprep.subr.mxu0 0.0
        %1641 = vmatpush1.msra.mxu0 0.0
        %1642 = vmatprep.subr.mxu0 0.0
        %1643 = vmatpush1.msra.mxu0 0.0
        %1644 = vmatprep.subr.mxu0 0.0
        %1645 = vmatpush1.msra.mxu0 0.0
        %1646 = vmatprep.subr.mxu0 0.0
        %1647 = vmatpush1.msra.mxu0 0.0
        %1648 = vmatprep.subr.mxu0 0.0
        %1649 = vmatpush1.msra.mxu0 0.0
        %1650 = vmatprep.subr.mxu0 0.0
        %1651 = vmatpush1.msra.mxu0 0.0
        %1652 = vmatprep.subr.mxu0 0.0
        %1653 = vmatpush1.msra.mxu0 0.0
        %1654 = vmatprep.subr.mxu0 0.0
        %1655 = vmatpush1.msra.mxu0 0.0
        %1656 = vmatprep.subr.mxu0 0.0
        %1657 = vmatpush1.msra.mxu0 0.0
        %1658 = vmatprep.subr.mxu0 0.0
        %1659 = vmatpush1.msra.mxu0 0.0
        %1660 = vmatprep.subr.mxu0 0.0
        %1661 = vmatpush1.msra.mxu0 0.0
        %1662 = vmatprep.subr.mxu0 0.0
        %1663 = vmatpush1.msra.mxu0 0.0
        %1664 = vmatprep.subr.mxu0 0.0
        %1665 = vmatpush1.msra.mxu0 0.0
        %1666 = vmatprep.subr.mxu0 0.0
        %1667 = vmatpush1.msra.mxu0 0.0
        %1668 = vmatprep.subr.mxu0 0.0
        %1669 = vmatpush1.msra.mxu0 0.0
        %1670 = vmatprep.subr.mxu0 0.0
        %1671 = vmatpush1.msra.mxu0 0.0
        %1672 = vmatprep.subr.mxu0 0.0
        %1673 = vmatpush1.msra.mxu0 0.0
        %1674 = vmatprep.mubr.f32.mxu0 0.0
        %1675 = vmatmul.mubr.f32.gmra.mrb[0].mxu0 %v1587
        %v1676 = vpop.f32.mrb[0].mxu0
        %v1677 = vadd.f32 0.0, %v1676
        %v1678 = vpop.f32.mrb[0].mxu0
        %1679 = vmatprep.mubr.f32.mxu0 0.0
        %1680 = vmatmul.mubr.f32.gmra.mrb[0].mxu0 %v1590
        %v1681 = vpop.f32.mrb[0].mxu0
        %v1682 = vadd.f32 0.0, %v1681
        %v1683 = vpop.f32.mrb[0].mxu0
        %1684 = vmatprep.mubr.f32.mxu0 0.0
        %1685 = vmatmul.mubr.f32.gmra.mrb[0].mxu0 %v1593
        %v1686 = vpop.f32.mrb[0].mxu0
        %v1687 = vadd.f32 0.0, %v1686
        %v1688 = vpop.f32.mrb[0].mxu0
        %1689 = vmatprep.mubr.f32.mxu0 0.0
        %1690 = vmatmul.mubr.f32.gmra.mrb[0].mxu0 %v1596
        %v1691 = vpop.f32.mrb[0].mxu0
        %v1692 = vadd.f32 0.0, %v1691
        %v1693 = vpop.f32.mrb[0].mxu0
        %1694 = vmatprep.mubr.f32.mxu0 0.0
        %1695 = vmatmul.mubr.f32.gmra.mrb[0].mxu0 %v1599
        %v1696 = vpop.f32.mrb[0].mxu0
        %v1697 = vadd.f32 0.0, %v1696
        %v1698 = vpop.f32.mrb[0].mxu0
        %1699 = vmatprep.mubr.f32.mxu0 0.0
        %1700 = vmatmul.mubr.f32.gmra.mrb[0].mxu0 %v1602
        %v1701 = vpop.f32.mrb[0].mxu0
        %v1702 = vadd.f32 0.0, %v1701
        %v1703 = vpop.f32.mrb[0].mxu0
        %1704 = vmatprep.mubr.f32.mxu0 0.0
        %1705 = vmatmul.mubr.f32.gmra.mrb[0].mxu0 %v1605
        %v1706 = vpop.f32.mrb[0].mxu0
        %v1707 = vadd.f32 0.0, %v1706
        %v1708 = vpop.f32.mrb[0].mxu0
        %1709 = vmatprep.mubr.f32.mxu0 0.0
        %1710 = vmatmul.mubr.f32.gmra.mrb[0].mxu0 %v1608
        %v1711 = vpop.f32.mrb[0].mxu0
        %v1712 = vadd.f32 0.0, %v1711
        %v1713 = vpop.f32.mrb[0].mxu0
        %1714 = vdwg.mxu0
        %v1716 = vsel %vm520, %v1560, 0
        %v1719 = vsel %vm520, %v1561, 0
        %v1722 = vsel %vm520, %v1562, 0
        %v1725 = vsel %vm520, %v1563, 0
        %v1728 = vsel %vm520, %v1564, 0
        %v1731 = vsel %vm520, %v1565, 0
        %v1734 = vsel %vm520, %v1566, 0
        %v1737 = vsel %vm520, %v1567, 0
        %1739 = vmatprep.subr.mxu0 0.0
        %1740 = vmatpush1.msra.mxu0 %v1568
        %1741 = vmatprep.subr.mxu0 0.0
        %1742 = vmatpush1.msra.mxu0 %v1569
        %1743 = vmatprep.subr.mxu0 0.0
        %1744 = vmatpush1.msra.mxu0 %v1570
        %1745 = vmatprep.subr.mxu0 0.0
        %1746 = vmatpush1.msra.mxu0 %v1571
        %1747 = vmatprep.subr.mxu0 0.0
        %1748 = vmatpush1.msra.mxu0 0.0
        %1749 = vmatprep.subr.mxu0 0.0
        %1750 = vmatpush1.msra.mxu0 0.0
        %1751 = vmatprep.subr.mxu0 0.0
        %1752 = vmatpush1.msra.mxu0 0.0
        %1753 = vmatprep.subr.mxu0 0.0
        %1754 = vmatpush1.msra.mxu0 0.0
        %1755 = vmatprep.subr.mxu0 0.0
        %1756 = vmatpush1.msra.mxu0 0.0
        %1757 = vmatprep.subr.mxu0 0.0
        %1758 = vmatpush1.msra.mxu0 0.0
        %1759 = vmatprep.subr.mxu0 0.0
        %1760 = vmatpush1.msra.mxu0 0.0
        %1761 = vmatprep.subr.mxu0 0.0
        %1762 = vmatpush1.msra.mxu0 0.0
        %1763 = vmatprep.subr.mxu0 0.0
        %1764 = vmatpush1.msra.mxu0 0.0
        %1765 = vmatprep.subr.mxu0 0.0
        %1766 = vmatpush1.msra.mxu0 0.0
        %1767 = vmatprep.subr.mxu0 0.0
        %1768 = vmatpush1.msra.mxu0 0.0
        %1769 = vmatprep.subr.mxu0 0.0
        %1770 = vmatpush1.msra.mxu0 0.0
        %1771 = vmatprep.subr.mxu0 0.0
        %1772 = vmatpush1.msra.mxu0 0.0
        %1773 = vmatprep.subr.mxu0 0.0
        %1774 = vmatpush1.msra.mxu0 0.0
        %1775 = vmatprep.subr.mxu0 0.0
        %1776 = vmatpush1.msra.mxu0 0.0
        %1777 = vmatprep.subr.mxu0 0.0
        %1778 = vmatpush1.msra.mxu0 0.0
        %1779 = vmatprep.subr.mxu0 0.0
        %1780 = vmatpush1.msra.mxu0 0.0
        %1781 = vmatprep.subr.mxu0 0.0
        %1782 = vmatpush1.msra.mxu0 0.0
        %1783 = vmatprep.subr.mxu0 0.0
        %1784 = vmatpush1.msra.mxu0 0.0
        %1785 = vmatprep.subr.mxu0 0.0
        %1786 = vmatpush1.msra.mxu0 0.0
        %1787 = vmatprep.subr.mxu0 0.0
        %1788 = vmatpush1.msra.mxu0 0.0
        %1789 = vmatprep.subr.mxu0 0.0
        %1790 = vmatpush1.msra.mxu0 0.0
        %1791 = vmatprep.subr.mxu0 0.0
        %1792 = vmatpush1.msra.mxu0 0.0
        %1793 = vmatprep.subr.mxu0 0.0
        %1794 = vmatpush1.msra.mxu0 0.0
        %1795 = vmatprep.subr.mxu0 0.0
        %1796 = vmatpush1.msra.mxu0 0.0
        %1797 = vmatprep.subr.mxu0 0.0
        %1798 = vmatpush1.msra.mxu0 0.0
        %1799 = vmatprep.subr.mxu0 0.0
        %1800 = vmatpush1.msra.mxu0 0.0
        %1801 = vmatprep.subr.mxu0 0.0
        %1802 = vmatpush1.msra.mxu0 0.0
        %1803 = vmatprep.mubr.f32.mxu0 0.0
        %1804 = vmatmul.mubr.f32.gmra.mrb[0].mxu0 %v1716
        %v1805 = vpop.f32.mrb[0].mxu0
        %v1806 = vadd.f32 %v1677, %v1805
        %v1807 = vpop.f32.mrb[0].mxu0
        %1808 = vmatprep.mubr.f32.mxu0 0.0
        %1809 = vmatmul.mubr.f32.gmra.mrb[0].mxu0 %v1719
        %v1810 = vpop.f32.mrb[0].mxu0
        %v1811 = vadd.f32 %v1682, %v1810
        %v1812 = vpop.f32.mrb[0].mxu0
        %1813 = vmatprep.mubr.f32.mxu0 0.0
        %1814 = vmatmul.mubr.f32.gmra.mrb[0].mxu0 %v1722
        %v1815 = vpop.f32.mrb[0].mxu0
        %v1816 = vadd.f32 %v1687, %v1815
        %v1817 = vpop.f32.mrb[0].mxu0
        %1818 = vmatprep.mubr.f32.mxu0 0.0
        %1819 = vmatmul.mubr.f32.gmra.mrb[0].mxu0 %v1725
        %v1820 = vpop.f32.mrb[0].mxu0
        %v1821 = vadd.f32 %v1692, %v1820
        %v1822 = vpop.f32.mrb[0].mxu0
        %1823 = vmatprep.mubr.f32.mxu0 0.0
        %1824 = vmatmul.mubr.f32.gmra.mrb[0].mxu0 %v1728
        %v1825 = vpop.f32.mrb[0].mxu0
        %v1826 = vadd.f32 %v1697, %v1825
        %v1827 = vpop.f32.mrb[0].mxu0
        %1828 = vmatprep.mubr.f32.mxu0 0.0
        %1829 = vmatmul.mubr.f32.gmra.mrb[0].mxu0 %v1731
        %v1830 = vpop.f32.mrb[0].mxu0
        %v1831 = vadd.f32 %v1702, %v1830
        %v1832 = vpop.f32.mrb[0].mxu0
        %1833 = vmatprep.mubr.f32.mxu0 0.0
        %1834 = vmatmul.mubr.f32.gmra.mrb[0].mxu0 %v1734
        %v1835 = vpop.f32.mrb[0].mxu0
        %v1836 = vadd.f32 %v1707, %v1835
        %v1837 = vpop.f32.mrb[0].mxu0
        %1838 = vmatprep.mubr.f32.mxu0 0.0
        %1839 = vmatmul.mubr.f32.gmra.mrb[0].mxu0 %v1737
        %v1840 = vpop.f32.mrb[0].mxu0
        %v1841 = vadd.f32 %v1712, %v1840
        %v1842 = vpop.f32.mrb[0].mxu0
        %1843 = vdwg.mxu0
        %v1844 = vld [vmem:[%s1559 + $0x1] sm:$0xff]
        %v1845 = vld [vmem:[%s1559 + $0x11] sm:$0xff]
        %v1846 = vld [vmem:[%s1559 + $0x21] sm:$0xff]
        %v1847 = vld [vmem:[%s1559 + $0x31] sm:$0xff]
        %v1848 = vld [vmem:[%s1559 + $0x41] sm:$0xff]
        %v1849 = vld [vmem:[%s1559 + $0x51] sm:$0xff]
        %v1850 = vld [vmem:[%s1559 + $0x61] sm:$0xff]
        %v1851 = vld [vmem:[%s1559 + $0x71] sm:$0xff]
        %s1852 = scalar_lea.vmem %s3, 64
        %v1853 = vld [vmem:[%s1852] sm:$0xff]
        %v1854 = vld [vmem:[%s1852 + $0x8] sm:$0xff]
        %v1855 = vld [vmem:[%s1852 + $0x10] sm:$0xff]
        %v1856 = vld [vmem:[%s1852 + $0x18] sm:$0xff]
        %v1858 = vsel %vm520, %v1844, 0
        %v1861 = vsel %vm520, %v1845, 0
        %v1864 = vsel %vm520, %v1846, 0
        %v1867 = vsel %vm520, %v1847, 0
        %v1870 = vsel %vm520, %v1848, 0
        %v1873 = vsel %vm520, %v1849, 0
        %v1876 = vsel %vm520, %v1850, 0
        %v1879 = vsel %vm520, %v1851, 0
        %1881 = vmatprep.subr.mxu0 0.0
        %1882 = vmatpush1.msra.mxu0 %v1853
        %1883 = vmatprep.subr.mxu0 0.0
        %1884 = vmatpush1.msra.mxu0 %v1854
        %1885 = vmatprep.subr.mxu0 0.0
        %1886 = vmatpush1.msra.mxu0 %v1855
        %1887 = vmatprep.subr.mxu0 0.0
        %1888 = vmatpush1.msra.mxu0 %v1856
        %1889 = vmatprep.subr.mxu0 0.0
        %1890 = vmatpush1.msra.mxu0 0.0
        %1891 = vmatprep.subr.mxu0 0.0
        %1892 = vmatpush1.msra.mxu0 0.0
        %1893 = vmatprep.subr.mxu0 0.0
        %1894 = vmatpush1.msra.mxu0 0.0
        %1895 = vmatprep.subr.mxu0 0.0
        %1896 = vmatpush1.msra.mxu0 0.0
        %1897 = vmatprep.subr.mxu0 0.0
        %1898 = vmatpush1.msra.mxu0 0.0
        %1899 = vmatprep.subr.mxu0 0.0
        %1900 = vmatpush1.msra.mxu0 0.0
        %1901 = vmatprep.subr.mxu0 0.0
        %1902 = vmatpush1.msra.mxu0 0.0
        %1903 = vmatprep.subr.mxu0 0.0
        %1904 = vmatpush1.msra.mxu0 0.0
        %1905 = vmatprep.subr.mxu0 0.0
        %1906 = vmatpush1.msra.mxu0 0.0
        %1907 = vmatprep.subr.mxu0 0.0
        %1908 = vmatpush1.msra.mxu0 0.0
        %1909 = vmatprep.subr.mxu0 0.0
        %1910 = vmatpush1.msra.mxu0 0.0
        %1911 = vmatprep.subr.mxu0 0.0
        %1912 = vmatpush1.msra.mxu0 0.0
        %1913 = vmatprep.subr.mxu0 0.0
        %1914 = vmatpush1.msra.mxu0 0.0
        %1915 = vmatprep.subr.mxu0 0.0
        %1916 = vmatpush1.msra.mxu0 0.0
        %1917 = vmatprep.subr.mxu0 0.0
        %1918 = vmatpush1.msra.mxu0 0.0
        %1919 = vmatprep.subr.mxu0 0.0
        %1920 = vmatpush1.msra.mxu0 0.0
        %1921 = vmatprep.subr.mxu0 0.0
        %1922 = vmatpush1.msra.mxu0 0.0
        %1923 = vmatprep.subr.mxu0 0.0
        %1924 = vmatpush1.msra.mxu0 0.0
        %1925 = vmatprep.subr.mxu0 0.0
        %1926 = vmatpush1.msra.mxu0 0.0
        %1927 = vmatprep.subr.mxu0 0.0
        %1928 = vmatpush1.msra.mxu0 0.0
        %1929 = vmatprep.subr.mxu0 0.0
        %1930 = vmatpush1.msra.mxu0 0.0
        %1931 = vmatprep.subr.mxu0 0.0
        %1932 = vmatpush1.msra.mxu0 0.0
        %1933 = vmatprep.subr.mxu0 0.0
        %1934 = vmatpush1.msra.mxu0 0.0
        %1935 = vmatprep.subr.mxu0 0.0
        %1936 = vmatpush1.msra.mxu0 0.0
        %1937 = vmatprep.subr.mxu0 0.0
        %1938 = vmatpush1.msra.mxu0 0.0
        %1939 = vmatprep.subr.mxu0 0.0
        %1940 = vmatpush1.msra.mxu0 0.0
        %1941 = vmatprep.subr.mxu0 0.0
        %1942 = vmatpush1.msra.mxu0 0.0
        %1943 = vmatprep.subr.mxu0 0.0
        %1944 = vmatpush1.msra.mxu0 0.0
        %1945 = vmatprep.mubr.f32.mxu0 0.0
        %1946 = vmatmul.mubr.f32.gmra.mrb[0].mxu0 %v1858
        %v1947 = vpop.f32.mrb[0].mxu0
        %v1948 = vadd.f32 0.0, %v1947
        %v1949 = vpop.f32.mrb[0].mxu0
        %1950 = vmatprep.mubr.f32.mxu0 0.0
        %1951 = vmatmul.mubr.f32.gmra.mrb[0].mxu0 %v1861
        %v1952 = vpop.f32.mrb[0].mxu0
        %v1953 = vadd.f32 0.0, %v1952
        %v1954 = vpop.f32.mrb[0].mxu0
        %1955 = vmatprep.mubr.f32.mxu0 0.0
        %1956 = vmatmul.mubr.f32.gmra.mrb[0].mxu0 %v1864
        %v1957 = vpop.f32.mrb[0].mxu0
        %v1958 = vadd.f32 0.0, %v1957
        %v1959 = vpop.f32.mrb[0].mxu0
        %1960 = vmatprep.mubr.f32.mxu0 0.0
        %1961 = vmatmul.mubr.f32.gmra.mrb[0].mxu0 %v1867
        %v1962 = vpop.f32.mrb[0].mxu0
        %v1963 = vadd.f32 0.0, %v1962
        %v1964 = vpop.f32.mrb[0].mxu0
        %1965 = vmatprep.mubr.f32.mxu0 0.0
        %1966 = vmatmul.mubr.f32.gmra.mrb[0].mxu0 %v1870
        %v1967 = vpop.f32.mrb[0].mxu0
        %v1968 = vadd.f32 0.0, %v1967
        %v1969 = vpop.f32.mrb[0].mxu0
        %1970 = vmatprep.mubr.f32.mxu0 0.0
        %1971 = vmatmul.mubr.f32.gmra.mrb[0].mxu0 %v1873
        %v1972 = vpop.f32.mrb[0].mxu0
        %v1973 = vadd.f32 0.0, %v1972
        %v1974 = vpop.f32.mrb[0].mxu0
        %1975 = vmatprep.mubr.f32.mxu0 0.0
        %1976 = vmatmul.mubr.f32.gmra.mrb[0].mxu0 %v1876
        %v1977 = vpop.f32.mrb[0].mxu0
        %v1978 = vadd.f32 0.0, %v1977
        %v1979 = vpop.f32.mrb[0].mxu0
        %1980 = vmatprep.mubr.f32.mxu0 0.0
        %1981 = vmatmul.mubr.f32.gmra.mrb[0].mxu0 %v1879
        %v1982 = vpop.f32.mrb[0].mxu0
        %v1983 = vadd.f32 0.0, %v1982
        %v1984 = vpop.f32.mrb[0].mxu0
        %1985 = vdwg.mxu0
        %v1986 = vadd.f32 %v1806, %v1948
        %v1987 = vadd.f32 %v1811, %v1953
        %v1988 = vadd.f32 %v1816, %v1958
        %v1989 = vadd.f32 %v1821, %v1963
        %v1990 = vadd.f32 %v1826, %v1968
        %v1991 = vadd.f32 %v1831, %v1973
        %v1992 = vadd.f32 %v1836, %v1978
        %v1993 = vadd.f32 %v1841, %v1983
        %v1994 = vld [vmem:[%s1082] sm:$0xff]
        %v1995 = vld [vmem:[%s1082 + $0x10] sm:$0xff]
        %v1996 = vld [vmem:[%s1082 + $0x20] sm:$0xff]
        %v1997 = vld [vmem:[%s1082 + $0x30] sm:$0xff]
        %v1998 = vld [vmem:[%s1082 + $0x40] sm:$0xff]
        %v1999 = vld [vmem:[%s1082 + $0x50] sm:$0xff]
        %v2000 = vld [vmem:[%s1082 + $0x60] sm:$0xff]
        %v2001 = vld [vmem:[%s1082 + $0x70] sm:$0xff]
        %s2002 = scalar_lea.vmem %s3, 96
        %v2003 = vld [vmem:[%s2002] sm:$0xff]
        %v2004 = vld [vmem:[%s2002 + $0x8] sm:$0xff]
        %v2005 = vld [vmem:[%s2002 + $0x10] sm:$0xff]
        %v2006 = vld [vmem:[%s2002 + $0x18] sm:$0xff]
        %v2008 = vsel %vm520, %v1994, 0
        %v2011 = vsel %vm520, %v1995, 0
        %v2014 = vsel %vm520, %v1996, 0
        %v2017 = vsel %vm520, %v1997, 0
        %v2020 = vsel %vm520, %v1998, 0
        %v2023 = vsel %vm520, %v1999, 0
        %v2026 = vsel %vm520, %v2000, 0
        %v2029 = vsel %vm520, %v2001, 0
        %2031 = vmatprep.subr.mxu0 0.0
        %2032 = vmatpush1.msra.mxu0 %v2003
        %2033 = vmatprep.subr.mxu0 0.0
        %2034 = vmatpush1.msra.mxu0 %v2004
        %2035 = vmatprep.subr.mxu0 0.0
        %2036 = vmatpush1.msra.mxu0 %v2005
        %2037 = vmatprep.subr.mxu0 0.0
        %2038 = vmatpush1.msra.mxu0 %v2006
        %2039 = vmatprep.subr.mxu0 0.0
        %2040 = vmatpush1.msra.mxu0 0.0
        %2041 = vmatprep.subr.mxu0 0.0
        %2042 = vmatpush1.msra.mxu0 0.0
        %2043 = vmatprep.subr.mxu0 0.0
        %2044 = vmatpush1.msra.mxu0 0.0
        %2045 = vmatprep.subr.mxu0 0.0
        %2046 = vmatpush1.msra.mxu0 0.0
        %2047 = vmatprep.subr.mxu0 0.0
        %2048 = vmatpush1.msra.mxu0 0.0
        %2049 = vmatprep.subr.mxu0 0.0
        %2050 = vmatpush1.msra.mxu0 0.0
        %2051 = vmatprep.subr.mxu0 0.0
        %2052 = vmatpush1.msra.mxu0 0.0
        %2053 = vmatprep.subr.mxu0 0.0
        %2054 = vmatpush1.msra.mxu0 0.0
        %2055 = vmatprep.subr.mxu0 0.0
        %2056 = vmatpush1.msra.mxu0 0.0
        %2057 = vmatprep.subr.mxu0 0.0
        %2058 = vmatpush1.msra.mxu0 0.0
        %2059 = vmatprep.subr.mxu0 0.0
        %2060 = vmatpush1.msra.mxu0 0.0
        %2061 = vmatprep.subr.mxu0 0.0
        %2062 = vmatpush1.msra.mxu0 0.0
        %2063 = vmatprep.subr.mxu0 0.0
        %2064 = vmatpush1.msra.mxu0 0.0
        %2065 = vmatprep.subr.mxu0 0.0
        %2066 = vmatpush1.msra.mxu0 0.0
        %2067 = vmatprep.subr.mxu0 0.0
        %2068 = vmatpush1.msra.mxu0 0.0
        %2069 = vmatprep.subr.mxu0 0.0
        %2070 = vmatpush1.msra.mxu0 0.0
        %2071 = vmatprep.subr.mxu0 0.0
        %2072 = vmatpush1.msra.mxu0 0.0
        %2073 = vmatprep.subr.mxu0 0.0
        %2074 = vmatpush1.msra.mxu0 0.0
        %2075 = vmatprep.subr.mxu0 0.0
        %2076 = vmatpush1.msra.mxu0 0.0
        %2077 = vmatprep.subr.mxu0 0.0
        %2078 = vmatpush1.msra.mxu0 0.0
        %2079 = vmatprep.subr.mxu0 0.0
        %2080 = vmatpush1.msra.mxu0 0.0
        %2081 = vmatprep.subr.mxu0 0.0
        %2082 = vmatpush1.msra.mxu0 0.0
        %2083 = vmatprep.subr.mxu0 0.0
        %2084 = vmatpush1.msra.mxu0 0.0
        %2085 = vmatprep.subr.mxu0 0.0
        %2086 = vmatpush1.msra.mxu0 0.0
        %2087 = vmatprep.subr.mxu0 0.0
        %2088 = vmatpush1.msra.mxu0 0.0
        %2089 = vmatprep.subr.mxu0 0.0
        %2090 = vmatpush1.msra.mxu0 0.0
        %2091 = vmatprep.subr.mxu0 0.0
        %2092 = vmatpush1.msra.mxu0 0.0
        %2093 = vmatprep.subr.mxu0 0.0
        %2094 = vmatpush1.msra.mxu0 0.0
        %2095 = vmatprep.mubr.f32.mxu0 0.0
        %2096 = vmatmul.mubr.f32.gmra.mrb[0].mxu0 %v2008
        %v2097 = vpop.f32.mrb[0].mxu0
        %v2098 = vadd.f32 0.0, %v2097
        %v2099 = vpop.f32.mrb[0].mxu0
        %2100 = vmatprep.mubr.f32.mxu0 0.0
        %2101 = vmatmul.mubr.f32.gmra.mrb[0].mxu0 %v2011
        %v2102 = vpop.f32.mrb[0].mxu0
        %v2103 = vadd.f32 0.0, %v2102
        %v2104 = vpop.f32.mrb[0].mxu0
        %2105 = vmatprep.mubr.f32.mxu0 0.0
        %2106 = vmatmul.mubr.f32.gmra.mrb[0].mxu0 %v2014
        %v2107 = vpop.f32.mrb[0].mxu0
        %v2108 = vadd.f32 0.0, %v2107
        %v2109 = vpop.f32.mrb[0].mxu0
        %2110 = vmatprep.mubr.f32.mxu0 0.0
        %2111 = vmatmul.mubr.f32.gmra.mrb[0].mxu0 %v2017
        %v2112 = vpop.f32.mrb[0].mxu0
        %v2113 = vadd.f32 0.0, %v2112
        %v2114 = vpop.f32.mrb[0].mxu0
        %2115 = vmatprep.mubr.f32.mxu0 0.0
        %2116 = vmatmul.mubr.f32.gmra.mrb[0].mxu0 %v2020
        %v2117 = vpop.f32.mrb[0].mxu0
        %v2118 = vadd.f32 0.0, %v2117
        %v2119 = vpop.f32.mrb[0].mxu0
        %2120 = vmatprep.mubr.f32.mxu0 0.0
        %2121 = vmatmul.mubr.f32.gmra.mrb[0].mxu0 %v2023
        %v2122 = vpop.f32.mrb[0].mxu0
        %v2123 = vadd.f32 0.0, %v2122
        %v2124 = vpop.f32.mrb[0].mxu0
        %2125 = vmatprep.mubr.f32.mxu0 0.0
        %2126 = vmatmul.mubr.f32.gmra.mrb[0].mxu0 %v2026
        %v2127 = vpop.f32.mrb[0].mxu0
        %v2128 = vadd.f32 0.0, %v2127
        %v2129 = vpop.f32.mrb[0].mxu0
        %2130 = vmatprep.mubr.f32.mxu0 0.0
        %2131 = vmatmul.mubr.f32.gmra.mrb[0].mxu0 %v2029
        %v2132 = vpop.f32.mrb[0].mxu0
        %v2133 = vadd.f32 0.0, %v2132
        %v2134 = vpop.f32.mrb[0].mxu0
        %2135 = vdwg.mxu0
        %v2136 = vadd.f32 %v1986, %v2098
        %v2137 = vadd.f32 %v1987, %v2103
        %v2138 = vadd.f32 %v1988, %v2108
        %v2139 = vadd.f32 %v1989, %v2113
        %v2140 = vadd.f32 %v1990, %v2118
        %v2141 = vadd.f32 %v1991, %v2123
        %v2142 = vadd.f32 %v1992, %v2128
        %v2143 = vadd.f32 %v1993, %v2133
        %v2144 = vld [vmem:[%s848 + $0x1] sm:$0xff]
        %v2145 = vld [vmem:[%s848 + $0x11] sm:$0xff]
        %v2146 = vld [vmem:[%s848 + $0x21] sm:$0xff]
        %v2147 = vld [vmem:[%s848 + $0x31] sm:$0xff]
        %v2148 = vld [vmem:[%s848 + $0x41] sm:$0xff]
        %v2149 = vld [vmem:[%s848 + $0x51] sm:$0xff]
        %v2150 = vld [vmem:[%s848 + $0x61] sm:$0xff]
        %v2151 = vld [vmem:[%s848 + $0x71] sm:$0xff]
        %s2152 = scalar_lea.vmem %s3, 128
        %v2153 = vld [vmem:[%s2152] sm:$0xff]
        %v2154 = vld [vmem:[%s2152 + $0x8] sm:$0xff]
        %v2155 = vld [vmem:[%s2152 + $0x10] sm:$0xff]
        %v2156 = vld [vmem:[%s2152 + $0x18] sm:$0xff]
        %v2158 = vsel %vm520, %v2144, 0
        %v2161 = vsel %vm520, %v2145, 0
        %v2164 = vsel %vm520, %v2146, 0
        %v2167 = vsel %vm520, %v2147, 0
        %v2170 = vsel %vm520, %v2148, 0
        %v2173 = vsel %vm520, %v2149, 0
        %v2176 = vsel %vm520, %v2150, 0
        %v2179 = vsel %vm520, %v2151, 0
        %2181 = vmatprep.subr.mxu0 0.0
        %2182 = vmatpush1.msra.mxu0 %v2153
        %2183 = vmatprep.subr.mxu0 0.0
        %2184 = vmatpush1.msra.mxu0 %v2154
        %2185 = vmatprep.subr.mxu0 0.0
        %2186 = vmatpush1.msra.mxu0 %v2155
        %2187 = vmatprep.subr.mxu0 0.0
        %2188 = vmatpush1.msra.mxu0 %v2156
        %2189 = vmatprep.subr.mxu0 0.0
        %2190 = vmatpush1.msra.mxu0 0.0
        %2191 = vmatprep.subr.mxu0 0.0
        %2192 = vmatpush1.msra.mxu0 0.0
        %2193 = vmatprep.subr.mxu0 0.0
        %2194 = vmatpush1.msra.mxu0 0.0
        %2195 = vmatprep.subr.mxu0 0.0
        %2196 = vmatpush1.msra.mxu0 0.0
        %2197 = vmatprep.subr.mxu0 0.0
        %2198 = vmatpush1.msra.mxu0 0.0
        %2199 = vmatprep.subr.mxu0 0.0
        %2200 = vmatpush1.msra.mxu0 0.0
        %2201 = vmatprep.subr.mxu0 0.0
        %2202 = vmatpush1.msra.mxu0 0.0
        %2203 = vmatprep.subr.mxu0 0.0
        %2204 = vmatpush1.msra.mxu0 0.0
        %2205 = vmatprep.subr.mxu0 0.0
        %2206 = vmatpush1.msra.mxu0 0.0
        %2207 = vmatprep.subr.mxu0 0.0
        %2208 = vmatpush1.msra.mxu0 0.0
        %2209 = vmatprep.subr.mxu0 0.0
        %2210 = vmatpush1.msra.mxu0 0.0
        %2211 = vmatprep.subr.mxu0 0.0
        %2212 = vmatpush1.msra.mxu0 0.0
        %2213 = vmatprep.subr.mxu0 0.0
        %2214 = vmatpush1.msra.mxu0 0.0
        %2215 = vmatprep.subr.mxu0 0.0
        %2216 = vmatpush1.msra.mxu0 0.0
        %2217 = vmatprep.subr.mxu0 0.0
        %2218 = vmatpush1.msra.mxu0 0.0
        %2219 = vmatprep.subr.mxu0 0.0
        %2220 = vmatpush1.msra.mxu0 0.0
        %2221 = vmatprep.subr.mxu0 0.0
        %2222 = vmatpush1.msra.mxu0 0.0
        %2223 = vmatprep.subr.mxu0 0.0
        %2224 = vmatpush1.msra.mxu0 0.0
        %2225 = vmatprep.subr.mxu0 0.0
        %2226 = vmatpush1.msra.mxu0 0.0
        %2227 = vmatprep.subr.mxu0 0.0
        %2228 = vmatpush1.msra.mxu0 0.0
        %2229 = vmatprep.subr.mxu0 0.0
        %2230 = vmatpush1.msra.mxu0 0.0
        %2231 = vmatprep.subr.mxu0 0.0
        %2232 = vmatpush1.msra.mxu0 0.0
        %2233 = vmatprep.subr.mxu0 0.0
        %2234 = vmatpush1.msra.mxu0 0.0
        %2235 = vmatprep.subr.mxu0 0.0
        %2236 = vmatpush1.msra.mxu0 0.0
        %2237 = vmatprep.subr.mxu0 0.0
        %2238 = vmatpush1.msra.mxu0 0.0
        %2239 = vmatprep.subr.mxu0 0.0
        %2240 = vmatpush1.msra.mxu0 0.0
        %2241 = vmatprep.subr.mxu0 0.0
        %2242 = vmatpush1.msra.mxu0 0.0
        %2243 = vmatprep.subr.mxu0 0.0
        %2244 = vmatpush1.msra.mxu0 0.0
        %2245 = vmatprep.mubr.f32.mxu0 0.0
        %2246 = vmatmul.mubr.f32.gmra.mrb[0].mxu0 %v2158
        %v2247 = vpop.f32.mrb[0].mxu0
        %v2248 = vadd.f32 0.0, %v2247
        %v2249 = vpop.f32.mrb[0].mxu0
        %2250 = vmatprep.mubr.f32.mxu0 0.0
        %2251 = vmatmul.mubr.f32.gmra.mrb[0].mxu0 %v2161
        %v2252 = vpop.f32.mrb[0].mxu0
        %v2253 = vadd.f32 0.0, %v2252
        %v2254 = vpop.f32.mrb[0].mxu0
        %2255 = vmatprep.mubr.f32.mxu0 0.0
        %2256 = vmatmul.mubr.f32.gmra.mrb[0].mxu0 %v2164
        %v2257 = vpop.f32.mrb[0].mxu0
        %v2258 = vadd.f32 0.0, %v2257
        %v2259 = vpop.f32.mrb[0].mxu0
        %2260 = vmatprep.mubr.f32.mxu0 0.0
        %2261 = vmatmul.mubr.f32.gmra.mrb[0].mxu0 %v2167
        %v2262 = vpop.f32.mrb[0].mxu0
        %v2263 = vadd.f32 0.0, %v2262
        %v2264 = vpop.f32.mrb[0].mxu0
        %2265 = vmatprep.mubr.f32.mxu0 0.0
        %2266 = vmatmul.mubr.f32.gmra.mrb[0].mxu0 %v2170
        %v2267 = vpop.f32.mrb[0].mxu0
        %v2268 = vadd.f32 0.0, %v2267
        %v2269 = vpop.f32.mrb[0].mxu0
        %2270 = vmatprep.mubr.f32.mxu0 0.0
        %2271 = vmatmul.mubr.f32.gmra.mrb[0].mxu0 %v2173
        %v2272 = vpop.f32.mrb[0].mxu0
        %v2273 = vadd.f32 0.0, %v2272
        %v2274 = vpop.f32.mrb[0].mxu0
        %2275 = vmatprep.mubr.f32.mxu0 0.0
        %2276 = vmatmul.mubr.f32.gmra.mrb[0].mxu0 %v2176
        %v2277 = vpop.f32.mrb[0].mxu0
        %v2278 = vadd.f32 0.0, %v2277
        %v2279 = vpop.f32.mrb[0].mxu0
        %2280 = vmatprep.mubr.f32.mxu0 0.0
        %2281 = vmatmul.mubr.f32.gmra.mrb[0].mxu0 %v2179
        %v2282 = vpop.f32.mrb[0].mxu0
        %v2283 = vadd.f32 0.0, %v2282
        %v2284 = vpop.f32.mrb[0].mxu0
        %2285 = vdwg.mxu0
        %v2286 = vadd.f32 %v2136, %v2248
        %v2287 = vadd.f32 %v2137, %v2253
        %v2288 = vadd.f32 %v2138, %v2258
        %v2289 = vadd.f32 %v2139, %v2263
        %v2290 = vadd.f32 %v2140, %v2268
        %v2291 = vadd.f32 %v2141, %v2273
        %v2292 = vadd.f32 %v2142, %v2278
        %v2293 = vadd.f32 %v2143, %v2283
        %v2294 = vld [vmem:[%s1082 + $0x1] sm:$0xff]
        %v2295 = vld [vmem:[%s1082 + $0x11] sm:$0xff]
        %v2296 = vld [vmem:[%s1082 + $0x21] sm:$0xff]
        %v2297 = vld [vmem:[%s1082 + $0x31] sm:$0xff]
        %v2298 = vld [vmem:[%s1082 + $0x41] sm:$0xff]
        %v2299 = vld [vmem:[%s1082 + $0x51] sm:$0xff]
        %v2300 = vld [vmem:[%s1082 + $0x61] sm:$0xff]
        %v2301 = vld [vmem:[%s1082 + $0x71] sm:$0xff]
        %s2302 = scalar_lea.vmem %s3, 160
        %v2303 = vld [vmem:[%s2302] sm:$0xff]
        %v2304 = vld [vmem:[%s2302 + $0x8] sm:$0xff]
        %v2305 = vld [vmem:[%s2302 + $0x10] sm:$0xff]
        %v2306 = vld [vmem:[%s2302 + $0x18] sm:$0xff]
        %v2308 = vsel %vm520, %v2294, 0
        %v2311 = vsel %vm520, %v2295, 0
        %v2314 = vsel %vm520, %v2296, 0
        %v2317 = vsel %vm520, %v2297, 0
        %v2320 = vsel %vm520, %v2298, 0
        %v2323 = vsel %vm520, %v2299, 0
        %v2326 = vsel %vm520, %v2300, 0
        %v2329 = vsel %vm520, %v2301, 0
        %2331 = vmatprep.subr.mxu0 0.0
        %2332 = vmatpush1.msra.mxu0 %v2303
        %2333 = vmatprep.subr.mxu0 0.0
        %2334 = vmatpush1.msra.mxu0 %v2304
        %2335 = vmatprep.subr.mxu0 0.0
        %2336 = vmatpush1.msra.mxu0 %v2305
        %2337 = vmatprep.subr.mxu0 0.0
        %2338 = vmatpush1.msra.mxu0 %v2306
        %2339 = vmatprep.subr.mxu0 0.0
        %2340 = vmatpush1.msra.mxu0 0.0
        %2341 = vmatprep.subr.mxu0 0.0
        %2342 = vmatpush1.msra.mxu0 0.0
        %2343 = vmatprep.subr.mxu0 0.0
        %2344 = vmatpush1.msra.mxu0 0.0
        %2345 = vmatprep.subr.mxu0 0.0
        %2346 = vmatpush1.msra.mxu0 0.0
        %2347 = vmatprep.subr.mxu0 0.0
        %2348 = vmatpush1.msra.mxu0 0.0
        %2349 = vmatprep.subr.mxu0 0.0
        %2350 = vmatpush1.msra.mxu0 0.0
        %2351 = vmatprep.subr.mxu0 0.0
        %2352 = vmatpush1.msra.mxu0 0.0
        %2353 = vmatprep.subr.mxu0 0.0
        %2354 = vmatpush1.msra.mxu0 0.0
        %2355 = vmatprep.subr.mxu0 0.0
        %2356 = vmatpush1.msra.mxu0 0.0
        %2357 = vmatprep.subr.mxu0 0.0
        %2358 = vmatpush1.msra.mxu0 0.0
        %2359 = vmatprep.subr.mxu0 0.0
        %2360 = vmatpush1.msra.mxu0 0.0
        %2361 = vmatprep.subr.mxu0 0.0
        %2362 = vmatpush1.msra.mxu0 0.0
        %2363 = vmatprep.subr.mxu0 0.0
        %2364 = vmatpush1.msra.mxu0 0.0
        %2365 = vmatprep.subr.mxu0 0.0
        %2366 = vmatpush1.msra.mxu0 0.0
        %2367 = vmatprep.subr.mxu0 0.0
        %2368 = vmatpush1.msra.mxu0 0.0
        %2369 = vmatprep.subr.mxu0 0.0
        %2370 = vmatpush1.msra.mxu0 0.0
        %2371 = vmatprep.subr.mxu0 0.0
        %2372 = vmatpush1.msra.mxu0 0.0
        %2373 = vmatprep.subr.mxu0 0.0
        %2374 = vmatpush1.msra.mxu0 0.0
        %2375 = vmatprep.subr.mxu0 0.0
        %2376 = vmatpush1.msra.mxu0 0.0
        %2377 = vmatprep.subr.mxu0 0.0
        %2378 = vmatpush1.msra.mxu0 0.0
        %2379 = vmatprep.subr.mxu0 0.0
        %2380 = vmatpush1.msra.mxu0 0.0
        %2381 = vmatprep.subr.mxu0 0.0
        %2382 = vmatpush1.msra.mxu0 0.0
        %2383 = vmatprep.subr.mxu0 0.0
        %2384 = vmatpush1.msra.mxu0 0.0
        %2385 = vmatprep.subr.mxu0 0.0
        %2386 = vmatpush1.msra.mxu0 0.0
        %2387 = vmatprep.subr.mxu0 0.0
        %2388 = vmatpush1.msra.mxu0 0.0
        %2389 = vmatprep.subr.mxu0 0.0
        %2390 = vmatpush1.msra.mxu0 0.0
        %2391 = vmatprep.subr.mxu0 0.0
        %2392 = vmatpush1.msra.mxu0 0.0
        %2393 = vmatprep.subr.mxu0 0.0
        %2394 = vmatpush1.msra.mxu0 0.0
        %2395 = vmatprep.mubr.f32.mxu0 0.0
        %2396 = vmatmul.mubr.f32.gmra.mrb[0].mxu0 %v2308
        %v2397 = vpop.f32.mrb[0].mxu0
        %v2398 = vadd.f32 0.0, %v2397
        %v2399 = vpop.f32.mrb[0].mxu0
        %2400 = vmatprep.mubr.f32.mxu0 0.0
        %2401 = vmatmul.mubr.f32.gmra.mrb[0].mxu0 %v2311
        %v2402 = vpop.f32.mrb[0].mxu0
        %v2403 = vadd.f32 0.0, %v2402
        %v2404 = vpop.f32.mrb[0].mxu0
        %2405 = vmatprep.mubr.f32.mxu0 0.0
        %2406 = vmatmul.mubr.f32.gmra.mrb[0].mxu0 %v2314
        %v2407 = vpop.f32.mrb[0].mxu0
        %v2408 = vadd.f32 0.0, %v2407
        %v2409 = vpop.f32.mrb[0].mxu0
        %2410 = vmatprep.mubr.f32.mxu0 0.0
        %2411 = vmatmul.mubr.f32.gmra.mrb[0].mxu0 %v2317
        %v2412 = vpop.f32.mrb[0].mxu0
        %v2413 = vadd.f32 0.0, %v2412
        %v2414 = vpop.f32.mrb[0].mxu0
        %2415 = vmatprep.mubr.f32.mxu0 0.0
        %2416 = vmatmul.mubr.f32.gmra.mrb[0].mxu0 %v2320
        %v2417 = vpop.f32.mrb[0].mxu0
        %v2418 = vadd.f32 0.0, %v2417
        %v2419 = vpop.f32.mrb[0].mxu0
        %2420 = vmatprep.mubr.f32.mxu0 0.0
        %2421 = vmatmul.mubr.f32.gmra.mrb[0].mxu0 %v2323
        %v2422 = vpop.f32.mrb[0].mxu0
        %v2423 = vadd.f32 0.0, %v2422
        %v2424 = vpop.f32.mrb[0].mxu0
        %2425 = vmatprep.mubr.f32.mxu0 0.0
        %2426 = vmatmul.mubr.f32.gmra.mrb[0].mxu0 %v2326
        %v2427 = vpop.f32.mrb[0].mxu0
        %v2428 = vadd.f32 0.0, %v2427
        %v2429 = vpop.f32.mrb[0].mxu0
        %2430 = vmatprep.mubr.f32.mxu0 0.0
        %2431 = vmatmul.mubr.f32.gmra.mrb[0].mxu0 %v2329
        %v2432 = vpop.f32.mrb[0].mxu0
        %v2433 = vadd.f32 0.0, %v2432
        %v2434 = vpop.f32.mrb[0].mxu0
        %2435 = vdwg.mxu0
        %v2436 = vadd.f32 %v2286, %v2398
        %v2437 = vadd.f32 %v2287, %v2403
        %v2438 = vadd.f32 %v2288, %v2408
        %v2439 = vadd.f32 %v2289, %v2413
        %v2440 = vadd.f32 %v2290, %v2418
        %v2441 = vadd.f32 %v2291, %v2423
        %v2442 = vadd.f32 %v2292, %v2428
        %v2443 = vadd.f32 %v2293, %v2433
        %v2444 = vld [vmem:[%s1550] sm:$0xff]
        %v2445 = vld [vmem:[%s1550 + $0x10] sm:$0xff]
        %v2446 = vld [vmem:[%s1550 + $0x20] sm:$0xff]
        %v2447 = vld [vmem:[%s1550 + $0x30] sm:$0xff]
        %v2448 = vld [vmem:[%s1550 + $0x40] sm:$0xff]
        %v2449 = vld [vmem:[%s1550 + $0x50] sm:$0xff]
        %v2450 = vld [vmem:[%s1550 + $0x60] sm:$0xff]
        %v2451 = vld [vmem:[%s1550 + $0x70] sm:$0xff]
        %s2452 = scalar_lea.vmem %s3, 192
        %v2453 = vld [vmem:[%s2452] sm:$0xff]
        %v2454 = vld [vmem:[%s2452 + $0x8] sm:$0xff]
        %v2455 = vld [vmem:[%s2452 + $0x10] sm:$0xff]
        %v2456 = vld [vmem:[%s2452 + $0x18] sm:$0xff]
        %v2458 = vsel %vm520, %v2444, 0
        %v2461 = vsel %vm520, %v2445, 0
        %v2464 = vsel %vm520, %v2446, 0
        %v2467 = vsel %vm520, %v2447, 0
        %v2470 = vsel %vm520, %v2448, 0
        %v2473 = vsel %vm520, %v2449, 0
        %v2476 = vsel %vm520, %v2450, 0
        %v2479 = vsel %vm520, %v2451, 0
        %2481 = vmatprep.subr.mxu0 0.0
        %2482 = vmatpush1.msra.mxu0 %v2453
        %2483 = vmatprep.subr.mxu0 0.0
        %2484 = vmatpush1.msra.mxu0 %v2454
        %2485 = vmatprep.subr.mxu0 0.0
        %2486 = vmatpush1.msra.mxu0 %v2455
        %2487 = vmatprep.subr.mxu0 0.0
        %2488 = vmatpush1.msra.mxu0 %v2456
        %2489 = vmatprep.subr.mxu0 0.0
        %2490 = vmatpush1.msra.mxu0 0.0
        %2491 = vmatprep.subr.mxu0 0.0
        %2492 = vmatpush1.msra.mxu0 0.0
        %2493 = vmatprep.subr.mxu0 0.0
        %2494 = vmatpush1.msra.mxu0 0.0
        %2495 = vmatprep.subr.mxu0 0.0
        %2496 = vmatpush1.msra.mxu0 0.0
        %2497 = vmatprep.subr.mxu0 0.0
        %2498 = vmatpush1.msra.mxu0 0.0
        %2499 = vmatprep.subr.mxu0 0.0
        %2500 = vmatpush1.msra.mxu0 0.0
        %2501 = vmatprep.subr.mxu0 0.0
        %2502 = vmatpush1.msra.mxu0 0.0
        %2503 = vmatprep.subr.mxu0 0.0
        %2504 = vmatpush1.msra.mxu0 0.0
        %2505 = vmatprep.subr.mxu0 0.0
        %2506 = vmatpush1.msra.mxu0 0.0
        %2507 = vmatprep.subr.mxu0 0.0
        %2508 = vmatpush1.msra.mxu0 0.0
        %2509 = vmatprep.subr.mxu0 0.0
        %2510 = vmatpush1.msra.mxu0 0.0
        %2511 = vmatprep.subr.mxu0 0.0
        %2512 = vmatpush1.msra.mxu0 0.0
        %2513 = vmatprep.subr.mxu0 0.0
        %2514 = vmatpush1.msra.mxu0 0.0
        %2515 = vmatprep.subr.mxu0 0.0
        %2516 = vmatpush1.msra.mxu0 0.0
        %2517 = vmatprep.subr.mxu0 0.0
        %2518 = vmatpush1.msra.mxu0 0.0
        %2519 = vmatprep.subr.mxu0 0.0
        %2520 = vmatpush1.msra.mxu0 0.0
        %2521 = vmatprep.subr.mxu0 0.0
        %2522 = vmatpush1.msra.mxu0 0.0
        %2523 = vmatprep.subr.mxu0 0.0
        %2524 = vmatpush1.msra.mxu0 0.0
        %2525 = vmatprep.subr.mxu0 0.0
        %2526 = vmatpush1.msra.mxu0 0.0
        %2527 = vmatprep.subr.mxu0 0.0
        %2528 = vmatpush1.msra.mxu0 0.0
        %2529 = vmatprep.subr.mxu0 0.0
        %2530 = vmatpush1.msra.mxu0 0.0
        %2531 = vmatprep.subr.mxu0 0.0
        %2532 = vmatpush1.msra.mxu0 0.0
        %2533 = vmatprep.subr.mxu0 0.0
        %2534 = vmatpush1.msra.mxu0 0.0
        %2535 = vmatprep.subr.mxu0 0.0
        %2536 = vmatpush1.msra.mxu0 0.0
        %2537 = vmatprep.subr.mxu0 0.0
        %2538 = vmatpush1.msra.mxu0 0.0
        %2539 = vmatprep.subr.mxu0 0.0
        %2540 = vmatpush1.msra.mxu0 0.0
        %2541 = vmatprep.subr.mxu0 0.0
        %2542 = vmatpush1.msra.mxu0 0.0
        %2543 = vmatprep.subr.mxu0 0.0
        %2544 = vmatpush1.msra.mxu0 0.0
        %2545 = vmatprep.mubr.f32.mxu0 0.0
        %2546 = vmatmul.mubr.f32.gmra.mrb[0].mxu0 %v2458
        %v2547 = vpop.f32.mrb[0].mxu0
        %v2548 = vadd.f32 0.0, %v2547
        %v2549 = vpop.f32.mrb[0].mxu0
        %2550 = vmatprep.mubr.f32.mxu0 0.0
        %2551 = vmatmul.mubr.f32.gmra.mrb[0].mxu0 %v2461
        %v2552 = vpop.f32.mrb[0].mxu0
        %v2553 = vadd.f32 0.0, %v2552
        %v2554 = vpop.f32.mrb[0].mxu0
        %2555 = vmatprep.mubr.f32.mxu0 0.0
        %2556 = vmatmul.mubr.f32.gmra.mrb[0].mxu0 %v2464
        %v2557 = vpop.f32.mrb[0].mxu0
        %v2558 = vadd.f32 0.0, %v2557
        %v2559 = vpop.f32.mrb[0].mxu0
        %2560 = vmatprep.mubr.f32.mxu0 0.0
        %2561 = vmatmul.mubr.f32.gmra.mrb[0].mxu0 %v2467
        %v2562 = vpop.f32.mrb[0].mxu0
        %v2563 = vadd.f32 0.0, %v2562
        %v2564 = vpop.f32.mrb[0].mxu0
        %2565 = vmatprep.mubr.f32.mxu0 0.0
        %2566 = vmatmul.mubr.f32.gmra.mrb[0].mxu0 %v2470
        %v2567 = vpop.f32.mrb[0].mxu0
        %v2568 = vadd.f32 0.0, %v2567
        %v2569 = vpop.f32.mrb[0].mxu0
        %2570 = vmatprep.mubr.f32.mxu0 0.0
        %2571 = vmatmul.mubr.f32.gmra.mrb[0].mxu0 %v2473
        %v2572 = vpop.f32.mrb[0].mxu0
        %v2573 = vadd.f32 0.0, %v2572
        %v2574 = vpop.f32.mrb[0].mxu0
        %2575 = vmatprep.mubr.f32.mxu0 0.0
        %2576 = vmatmul.mubr.f32.gmra.mrb[0].mxu0 %v2476
        %v2577 = vpop.f32.mrb[0].mxu0
        %v2578 = vadd.f32 0.0, %v2577
        %v2579 = vpop.f32.mrb[0].mxu0
        %2580 = vmatprep.mubr.f32.mxu0 0.0
        %2581 = vmatmul.mubr.f32.gmra.mrb[0].mxu0 %v2479
        %v2582 = vpop.f32.mrb[0].mxu0
        %v2583 = vadd.f32 0.0, %v2582
        %v2584 = vpop.f32.mrb[0].mxu0
        %2585 = vdwg.mxu0
        %v2586 = vadd.f32 %v2436, %v2548
        %v2587 = vadd.f32 %v2437, %v2553
        %v2588 = vadd.f32 %v2438, %v2558
        %v2589 = vadd.f32 %v2439, %v2563
        %v2590 = vadd.f32 %v2440, %v2568
        %v2591 = vadd.f32 %v2441, %v2573
        %v2592 = vadd.f32 %v2442, %v2578
        %v2593 = vadd.f32 %v2443, %v2583
        %v2594 = vld [vmem:[%s1316 + $0x1] sm:$0xff]
        %v2595 = vld [vmem:[%s1316 + $0x11] sm:$0xff]
        %v2596 = vld [vmem:[%s1316 + $0x21] sm:$0xff]
        %v2597 = vld [vmem:[%s1316 + $0x31] sm:$0xff]
        %v2598 = vld [vmem:[%s1316 + $0x41] sm:$0xff]
        %v2599 = vld [vmem:[%s1316 + $0x51] sm:$0xff]
        %v2600 = vld [vmem:[%s1316 + $0x61] sm:$0xff]
        %v2601 = vld [vmem:[%s1316 + $0x71] sm:$0xff]
        %s2602 = scalar_lea.vmem %s3, 224
        %v2603 = vld [vmem:[%s2602] sm:$0xff]
        %v2604 = vld [vmem:[%s2602 + $0x8] sm:$0xff]
        %v2605 = vld [vmem:[%s2602 + $0x10] sm:$0xff]
        %v2606 = vld [vmem:[%s2602 + $0x18] sm:$0xff]
        %v2608 = vsel %vm520, %v2594, 0
        %v2611 = vsel %vm520, %v2595, 0
        %v2614 = vsel %vm520, %v2596, 0
        %v2617 = vsel %vm520, %v2597, 0
        %v2620 = vsel %vm520, %v2598, 0
        %v2623 = vsel %vm520, %v2599, 0
        %v2626 = vsel %vm520, %v2600, 0
        %v2629 = vsel %vm520, %v2601, 0
        %2631 = vmatprep.subr.mxu0 0.0
        %2632 = vmatpush1.msra.mxu0 %v2603
        %2633 = vmatprep.subr.mxu0 0.0
        %2634 = vmatpush1.msra.mxu0 %v2604
        %2635 = vmatprep.subr.mxu0 0.0
        %2636 = vmatpush1.msra.mxu0 %v2605
        %2637 = vmatprep.subr.mxu0 0.0
        %2638 = vmatpush1.msra.mxu0 %v2606
        %2639 = vmatprep.subr.mxu0 0.0
        %2640 = vmatpush1.msra.mxu0 0.0
        %2641 = vmatprep.subr.mxu0 0.0
        %2642 = vmatpush1.msra.mxu0 0.0
        %2643 = vmatprep.subr.mxu0 0.0
        %2644 = vmatpush1.msra.mxu0 0.0
        %2645 = vmatprep.subr.mxu0 0.0
        %2646 = vmatpush1.msra.mxu0 0.0
        %2647 = vmatprep.subr.mxu0 0.0
        %2648 = vmatpush1.msra.mxu0 0.0
        %2649 = vmatprep.subr.mxu0 0.0
        %2650 = vmatpush1.msra.mxu0 0.0
        %2651 = vmatprep.subr.mxu0 0.0
        %2652 = vmatpush1.msra.mxu0 0.0
        %2653 = vmatprep.subr.mxu0 0.0
        %2654 = vmatpush1.msra.mxu0 0.0
        %2655 = vmatprep.subr.mxu0 0.0
        %2656 = vmatpush1.msra.mxu0 0.0
        %2657 = vmatprep.subr.mxu0 0.0
        %2658 = vmatpush1.msra.mxu0 0.0
        %2659 = vmatprep.subr.mxu0 0.0
        %2660 = vmatpush1.msra.mxu0 0.0
        %2661 = vmatprep.subr.mxu0 0.0
        %2662 = vmatpush1.msra.mxu0 0.0
        %2663 = vmatprep.subr.mxu0 0.0
        %2664 = vmatpush1.msra.mxu0 0.0
        %2665 = vmatprep.subr.mxu0 0.0
        %2666 = vmatpush1.msra.mxu0 0.0
        %2667 = vmatprep.subr.mxu0 0.0
        %2668 = vmatpush1.msra.mxu0 0.0
        %2669 = vmatprep.subr.mxu0 0.0
        %2670 = vmatpush1.msra.mxu0 0.0
        %2671 = vmatprep.subr.mxu0 0.0
        %2672 = vmatpush1.msra.mxu0 0.0
        %2673 = vmatprep.subr.mxu0 0.0
        %2674 = vmatpush1.msra.mxu0 0.0
        %2675 = vmatprep.subr.mxu0 0.0
        %2676 = vmatpush1.msra.mxu0 0.0
        %2677 = vmatprep.subr.mxu0 0.0
        %2678 = vmatpush1.msra.mxu0 0.0
        %2679 = vmatprep.subr.mxu0 0.0
        %2680 = vmatpush1.msra.mxu0 0.0
        %2681 = vmatprep.subr.mxu0 0.0
        %2682 = vmatpush1.msra.mxu0 0.0
        %2683 = vmatprep.subr.mxu0 0.0
        %2684 = vmatpush1.msra.mxu0 0.0
        %2685 = vmatprep.subr.mxu0 0.0
        %2686 = vmatpush1.msra.mxu0 0.0
        %2687 = vmatprep.subr.mxu0 0.0
        %2688 = vmatpush1.msra.mxu0 0.0
        %2689 = vmatprep.subr.mxu0 0.0
        %2690 = vmatpush1.msra.mxu0 0.0
        %2691 = vmatprep.subr.mxu0 0.0
        %2692 = vmatpush1.msra.mxu0 0.0
        %2693 = vmatprep.subr.mxu0 0.0
        %2694 = vmatpush1.msra.mxu0 0.0
        %2695 = vmatprep.mubr.f32.mxu0 0.0
        %2696 = vmatmul.mubr.f32.gmra.mrb[0].mxu0 %v2608
        %v2697 = vpop.f32.mrb[0].mxu0
        %v2698 = vadd.f32 0.0, %v2697
        %v2699 = vpop.f32.mrb[0].mxu0
        %2700 = vmatprep.mubr.f32.mxu0 0.0
        %2701 = vmatmul.mubr.f32.gmra.mrb[0].mxu0 %v2611
        %v2702 = vpop.f32.mrb[0].mxu0
        %v2703 = vadd.f32 0.0, %v2702
        %v2704 = vpop.f32.mrb[0].mxu0
        %2705 = vmatprep.mubr.f32.mxu0 0.0
        %2706 = vmatmul.mubr.f32.gmra.mrb[0].mxu0 %v2614
        %v2707 = vpop.f32.mrb[0].mxu0
        %v2708 = vadd.f32 0.0, %v2707
        %v2709 = vpop.f32.mrb[0].mxu0
        %2710 = vmatprep.mubr.f32.mxu0 0.0
        %2711 = vmatmul.mubr.f32.gmra.mrb[0].mxu0 %v2617
        %v2712 = vpop.f32.mrb[0].mxu0
        %v2713 = vadd.f32 0.0, %v2712
        %v2714 = vpop.f32.mrb[0].mxu0
        %2715 = vmatprep.mubr.f32.mxu0 0.0
        %2716 = vmatmul.mubr.f32.gmra.mrb[0].mxu0 %v2620
        %v2717 = vpop.f32.mrb[0].mxu0
        %v2718 = vadd.f32 0.0, %v2717
        %v2719 = vpop.f32.mrb[0].mxu0
        %2720 = vmatprep.mubr.f32.mxu0 0.0
        %2721 = vmatmul.mubr.f32.gmra.mrb[0].mxu0 %v2623
        %v2722 = vpop.f32.mrb[0].mxu0
        %v2723 = vadd.f32 0.0, %v2722
        %v2724 = vpop.f32.mrb[0].mxu0
        %2725 = vmatprep.mubr.f32.mxu0 0.0
        %2726 = vmatmul.mubr.f32.gmra.mrb[0].mxu0 %v2626
        %v2727 = vpop.f32.mrb[0].mxu0
        %v2728 = vadd.f32 0.0, %v2727
        %v2729 = vpop.f32.mrb[0].mxu0
        %2730 = vmatprep.mubr.f32.mxu0 0.0
        %2731 = vmatmul.mubr.f32.gmra.mrb[0].mxu0 %v2629
        %v2732 = vpop.f32.mrb[0].mxu0
        %v2733 = vadd.f32 0.0, %v2732
        %v2734 = vpop.f32.mrb[0].mxu0
        %2735 = vdwg.mxu0
        %v2736 = vadd.f32 %v2586, %v2698
        %v2737 = vadd.f32 %v2587, %v2703
        %v2738 = vadd.f32 %v2588, %v2708
        %v2739 = vadd.f32 %v2589, %v2713
        %v2740 = vadd.f32 %v2590, %v2718
        %v2741 = vadd.f32 %v2591, %v2723
        %v2742 = vadd.f32 %v2592, %v2728
        %v2743 = vadd.f32 %v2593, %v2733
        %v2744 = vld [vmem:[%s1550 + $0x1] sm:$0xff]
        %v2745 = vld [vmem:[%s1550 + $0x11] sm:$0xff]
        %v2746 = vld [vmem:[%s1550 + $0x21] sm:$0xff]
        %v2747 = vld [vmem:[%s1550 + $0x31] sm:$0xff]
        %v2748 = vld [vmem:[%s1550 + $0x41] sm:$0xff]
        %v2749 = vld [vmem:[%s1550 + $0x51] sm:$0xff]
        %v2750 = vld [vmem:[%s1550 + $0x61] sm:$0xff]
        %v2751 = vld [vmem:[%s1550 + $0x71] sm:$0xff]
        %s2752 = scalar_lea.vmem %s3, 256
        %v2753 = vld [vmem:[%s2752] sm:$0xff]
        %v2754 = vld [vmem:[%s2752 + $0x8] sm:$0xff]
        %v2755 = vld [vmem:[%s2752 + $0x10] sm:$0xff]
        %v2756 = vld [vmem:[%s2752 + $0x18] sm:$0xff]
        %v2758 = vsel %vm520, %v2744, 0
        %v2761 = vsel %vm520, %v2745, 0
        %v2764 = vsel %vm520, %v2746, 0
        %v2767 = vsel %vm520, %v2747, 0
        %v2770 = vsel %vm520, %v2748, 0
        %v2773 = vsel %vm520, %v2749, 0
        %v2776 = vsel %vm520, %v2750, 0
        %v2779 = vsel %vm520, %v2751, 0
        %2781 = vmatprep.subr.mxu0 0.0
        %2782 = vmatpush1.msra.mxu0 %v2753
        %2783 = vmatprep.subr.mxu0 0.0
        %2784 = vmatpush1.msra.mxu0 %v2754
        %2785 = vmatprep.subr.mxu0 0.0
        %2786 = vmatpush1.msra.mxu0 %v2755
        %2787 = vmatprep.subr.mxu0 0.0
        %2788 = vmatpush1.msra.mxu0 %v2756
        %2789 = vmatprep.subr.mxu0 0.0
        %2790 = vmatpush1.msra.mxu0 0.0
        %2791 = vmatprep.subr.mxu0 0.0
        %2792 = vmatpush1.msra.mxu0 0.0
        %2793 = vmatprep.subr.mxu0 0.0
        %2794 = vmatpush1.msra.mxu0 0.0
        %2795 = vmatprep.subr.mxu0 0.0
        %2796 = vmatpush1.msra.mxu0 0.0
        %2797 = vmatprep.subr.mxu0 0.0
        %2798 = vmatpush1.msra.mxu0 0.0
        %2799 = vmatprep.subr.mxu0 0.0
        %2800 = vmatpush1.msra.mxu0 0.0
        %2801 = vmatprep.subr.mxu0 0.0
        %2802 = vmatpush1.msra.mxu0 0.0
        %2803 = vmatprep.subr.mxu0 0.0
        %2804 = vmatpush1.msra.mxu0 0.0
        %2805 = vmatprep.subr.mxu0 0.0
        %2806 = vmatpush1.msra.mxu0 0.0
        %2807 = vmatprep.subr.mxu0 0.0
        %2808 = vmatpush1.msra.mxu0 0.0
        %2809 = vmatprep.subr.mxu0 0.0
        %2810 = vmatpush1.msra.mxu0 0.0
        %2811 = vmatprep.subr.mxu0 0.0
        %2812 = vmatpush1.msra.mxu0 0.0
        %2813 = vmatprep.subr.mxu0 0.0
        %2814 = vmatpush1.msra.mxu0 0.0
        %2815 = vmatprep.subr.mxu0 0.0
        %2816 = vmatpush1.msra.mxu0 0.0
        %2817 = vmatprep.subr.mxu0 0.0
        %2818 = vmatpush1.msra.mxu0 0.0
        %2819 = vmatprep.subr.mxu0 0.0
        %2820 = vmatpush1.msra.mxu0 0.0
        %2821 = vmatprep.subr.mxu0 0.0
        %2822 = vmatpush1.msra.mxu0 0.0
        %2823 = vmatprep.subr.mxu0 0.0
        %2824 = vmatpush1.msra.mxu0 0.0
        %2825 = vmatprep.subr.mxu0 0.0
        %2826 = vmatpush1.msra.mxu0 0.0
        %2827 = vmatprep.subr.mxu0 0.0
        %2828 = vmatpush1.msra.mxu0 0.0
        %2829 = vmatprep.subr.mxu0 0.0
        %2830 = vmatpush1.msra.mxu0 0.0
        %2831 = vmatprep.subr.mxu0 0.0
        %2832 = vmatpush1.msra.mxu0 0.0
        %2833 = vmatprep.subr.mxu0 0.0
        %2834 = vmatpush1.msra.mxu0 0.0
        %2835 = vmatprep.subr.mxu0 0.0
        %2836 = vmatpush1.msra.mxu0 0.0
        %2837 = vmatprep.subr.mxu0 0.0
        %2838 = vmatpush1.msra.mxu0 0.0
        %2839 = vmatprep.subr.mxu0 0.0
        %2840 = vmatpush1.msra.mxu0 0.0
        %2841 = vmatprep.subr.mxu0 0.0
        %2842 = vmatpush1.msra.mxu0 0.0
        %2843 = vmatprep.subr.mxu0 0.0
        %2844 = vmatpush1.msra.mxu0 0.0
        %2845 = vmatprep.mubr.f32.mxu0 0.0
        %2846 = vmatmul.mubr.f32.gmra.mrb[0].mxu0 %v2758
        %v2847 = vpop.f32.mrb[0].mxu0
        %v2848 = vadd.f32 0.0, %v2847
        %v2849 = vpop.f32.mrb[0].mxu0
        %2850 = vmatprep.mubr.f32.mxu0 0.0
        %2851 = vmatmul.mubr.f32.gmra.mrb[0].mxu0 %v2761
        %v2852 = vpop.f32.mrb[0].mxu0
        %v2853 = vadd.f32 0.0, %v2852
        %v2854 = vpop.f32.mrb[0].mxu0
        %2855 = vmatprep.mubr.f32.mxu0 0.0
        %2856 = vmatmul.mubr.f32.gmra.mrb[0].mxu0 %v2764
        %v2857 = vpop.f32.mrb[0].mxu0
        %v2858 = vadd.f32 0.0, %v2857
        %v2859 = vpop.f32.mrb[0].mxu0
        %2860 = vmatprep.mubr.f32.mxu0 0.0
        %2861 = vmatmul.mubr.f32.gmra.mrb[0].mxu0 %v2767
        %v2862 = vpop.f32.mrb[0].mxu0
        %v2863 = vadd.f32 0.0, %v2862
        %v2864 = vpop.f32.mrb[0].mxu0
        %2865 = vmatprep.mubr.f32.mxu0 0.0
        %2866 = vmatmul.mubr.f32.gmra.mrb[0].mxu0 %v2770
        %v2867 = vpop.f32.mrb[0].mxu0
        %v2868 = vadd.f32 0.0, %v2867
        %v2869 = vpop.f32.mrb[0].mxu0
        %2870 = vmatprep.mubr.f32.mxu0 0.0
        %2871 = vmatmul.mubr.f32.gmra.mrb[0].mxu0 %v2773
        %v2872 = vpop.f32.mrb[0].mxu0
        %v2873 = vadd.f32 0.0, %v2872
        %v2874 = vpop.f32.mrb[0].mxu0
        %2875 = vmatprep.mubr.f32.mxu0 0.0
        %2876 = vmatmul.mubr.f32.gmra.mrb[0].mxu0 %v2776
        %v2877 = vpop.f32.mrb[0].mxu0
        %v2878 = vadd.f32 0.0, %v2877
        %v2879 = vpop.f32.mrb[0].mxu0
        %2880 = vmatprep.mubr.f32.mxu0 0.0
        %2881 = vmatmul.mubr.f32.gmra.mrb[0].mxu0 %v2779
        %v2882 = vpop.f32.mrb[0].mxu0
        %v2883 = vadd.f32 0.0, %v2882
        %v2884 = vpop.f32.mrb[0].mxu0
        %2885 = vdwg.mxu0
        %v2886 = vadd.f32 %v2736, %v2848
        %v2887 = vadd.f32 %v2737, %v2853
        %v2888 = vadd.f32 %v2738, %v2858
        %v2889 = vadd.f32 %v2739, %v2863
        %v2890 = vadd.f32 %v2740, %v2868
        %v2891 = vadd.f32 %v2741, %v2873
        %v2892 = vadd.f32 %v2742, %v2878
        %v2893 = vadd.f32 %v2743, %v2883
        %v2894 = vld [vmem:[%s4] sm:$0x1]
        %v2896 = vlaneseq
        %v2897 = vshrl.u32 %v2896, 7
        %v2898 = vsub.s32 0, %v2897
        %v2899 = vrot.slane %v2894, %v2898
        %v2901 = vadd.f32 %v2886, %v2899
        %v2902 = vadd.f32 %v2887, %v2899
        %v2903 = vadd.f32 %v2888, %v2899
        %v2904 = vadd.f32 %v2889, %v2899
        %v2905 = vadd.f32 %v2890, %v2899
        %v2906 = vadd.f32 %v2891, %v2899
        %v2907 = vadd.f32 %v2892, %v2899
        %v2908 = vadd.f32 %v2893, %v2899
        %v2909 = vmin.f32 %v2901, 20.0
        %v2910 = vmin.f32 %v2902, 20.0
        %v2911 = vmin.f32 %v2903, 20.0
        %v2912 = vmin.f32 %v2904, 20.0
        %v2913 = vmin.f32 %v2905, 20.0
        %v2914 = vmin.f32 %v2906, 20.0
        %v2915 = vmin.f32 %v2907, 20.0
        %v2916 = vmin.f32 %v2908, 20.0
        %v2917 = vmul.f32 %v2909, 1.442695
        %v2918 = vpow.pop %v2917
        %v2919 = vmul.f32 %v2910, 1.442695
        %v2920 = vpow.pop %v2919
        %v2921 = vmul.f32 %v2911, 1.442695
        %v2922 = vpow.pop %v2921
        %v2923 = vmul.f32 %v2912, 1.442695
        %v2924 = vpow.pop %v2923
        %v2925 = vmul.f32 %v2913, 1.442695
        %v2926 = vpow.pop %v2925
        %v2927 = vmul.f32 %v2914, 1.442695
        %v2928 = vpow.pop %v2927
        %v2929 = vmul.f32 %v2915, 1.442695
        %v2930 = vpow.pop %v2929
        %v2931 = vmul.f32 %v2916, 1.442695
        %v2932 = vpow.pop %v2931
        %v2933 = vadd.f32 %v2918, 1.0
        %v2934 = vadd.f32 %v2920, 1.0
        %v2935 = vadd.f32 %v2922, 1.0
        %v2936 = vadd.f32 %v2924, 1.0
        %v2937 = vadd.f32 %v2926, 1.0
        %v2938 = vadd.f32 %v2928, 1.0
        %v2939 = vadd.f32 %v2930, 1.0
        %v2940 = vadd.f32 %v2932, 1.0
        %v2941 = vmul.f32 %v2933, %v2933
        %v2942 = vmul.f32 %v2934, %v2934
        %v2943 = vmul.f32 %v2935, %v2935
        %v2944 = vmul.f32 %v2936, %v2936
        %v2945 = vmul.f32 %v2937, %v2937
        %v2946 = vmul.f32 %v2938, %v2938
        %v2947 = vmul.f32 %v2939, %v2939
        %v2948 = vmul.f32 %v2940, %v2940
        %v2949 = vsub.f32 %v2941, 1.0
        %v2950 = vsub.f32 %v2942, 1.0
        %v2951 = vsub.f32 %v2943, 1.0
        %v2952 = vsub.f32 %v2944, 1.0
        %v2953 = vsub.f32 %v2945, 1.0
        %v2954 = vsub.f32 %v2946, 1.0
        %v2955 = vsub.f32 %v2947, 1.0
        %v2956 = vsub.f32 %v2948, 1.0
        %v2957 = vmul.f32 %v2901, %v2949
        %v2958 = vmul.f32 %v2902, %v2950
        %v2959 = vmul.f32 %v2903, %v2951
        %v2960 = vmul.f32 %v2904, %v2952
        %v2961 = vmul.f32 %v2905, %v2953
        %v2962 = vmul.f32 %v2906, %v2954
        %v2963 = vmul.f32 %v2907, %v2955
        %v2964 = vmul.f32 %v2908, %v2956
        %v2965 = vadd.f32 %v2941, 1.0
        %v2966 = vadd.f32 %v2942, 1.0
        %v2967 = vadd.f32 %v2943, 1.0
        %v2968 = vadd.f32 %v2944, 1.0
        %v2969 = vadd.f32 %v2945, 1.0
        %v2970 = vadd.f32 %v2946, 1.0
        %v2971 = vadd.f32 %v2947, 1.0
        %v2972 = vadd.f32 %v2948, 1.0
        %v2973 = vrcp.pop %v2965
        %v2974 = vrcp.pop %v2966
        %v2975 = vrcp.pop %v2967
        %v2976 = vrcp.pop %v2968
        %v2977 = vrcp.pop %v2969
        %v2978 = vrcp.pop %v2970
        %v2979 = vrcp.pop %v2971
        %v2980 = vrcp.pop %v2972
        %v2981 = vmul.f32 %v2957, %v2973
        %v2982 = vmul.f32 %v2958, %v2974
        %v2983 = vmul.f32 %v2959, %v2975
        %v2984 = vmul.f32 %v2960, %v2976
        %v2985 = vmul.f32 %v2961, %v2977
        %v2986 = vmul.f32 %v2962, %v2978
        %v2987 = vmul.f32 %v2963, %v2979
        %v2988 = vmul.f32 %v2964, %v2980
        %v2989 = vld [vmem:[%s5] sm:$0xff]
        %v2990 = vld [vmem:[%s5 + $0x8] sm:$0xff]
        %v2991 = vld [vmem:[%s5 + $0x10] sm:$0xff]
        %v2992 = vld [vmem:[%s5 + $0x18] sm:$0xff]
        %v2993 = vld [vmem:[%s5 + $0x20] sm:$0xff]
        %v2994 = vld [vmem:[%s5 + $0x28] sm:$0xff]
        %v2995 = vld [vmem:[%s5 + $0x30] sm:$0xff]
        %v2996 = vld [vmem:[%s5 + $0x38] sm:$0xff]
        %v2997 = vld [vmem:[%s6] sm:$0x1]
        %v2999 = vlaneseq
        %v3000 = vshrl.u32 %v2999, 7
        %v3001 = vsub.s32 0, %v3000
        %v3002 = vrot.slane %v2997, %v3001
        %vm3004 = vcmask 523264
        %v3006 = vsel %vm3004, %v2981, 0
        %v3009 = vsel %vm3004, %v2982, 0
        %v3012 = vsel %vm3004, %v2983, 0
        %v3015 = vsel %vm3004, %v2984, 0
        %v3018 = vsel %vm3004, %v2985, 0
        %v3021 = vsel %vm3004, %v2986, 0
        %v3024 = vsel %vm3004, %v2987, 0
        %v3027 = vsel %vm3004, %v2988, 0
        %3029 = vmatprep.subr.mxu0 0.0
        %3030 = vmatpush1.msra.mxu0 %v2989
        %3031 = vmatprep.subr.mxu0 0.0
        %3032 = vmatpush1.msra.mxu0 %v2990
        %3033 = vmatprep.subr.mxu0 0.0
        %3034 = vmatpush1.msra.mxu0 %v2991
        %3035 = vmatprep.subr.mxu0 0.0
        %3036 = vmatpush1.msra.mxu0 %v2992
        %3037 = vmatprep.subr.mxu0 0.0
        %3038 = vmatpush1.msra.mxu0 %v2993
        %3039 = vmatprep.subr.mxu0 0.0
        %3040 = vmatpush1.msra.mxu0 %v2994
        %3041 = vmatprep.subr.mxu0 0.0
        %3042 = vmatpush1.msra.mxu0 %v2995
        %3043 = vmatprep.subr.mxu0 0.0
        %3044 = vmatpush1.msra.mxu0 %v2996
        %3045 = vmatprep.subr.mxu0 0.0
        %3046 = vmatpush1.msra.mxu0 0.0
        %3047 = vmatprep.subr.mxu0 0.0
        %3048 = vmatpush1.msra.mxu0 0.0
        %3049 = vmatprep.subr.mxu0 0.0
        %3050 = vmatpush1.msra.mxu0 0.0
        %3051 = vmatprep.subr.mxu0 0.0
        %3052 = vmatpush1.msra.mxu0 0.0
        %3053 = vmatprep.subr.mxu0 0.0
        %3054 = vmatpush1.msra.mxu0 0.0
        %3055 = vmatprep.subr.mxu0 0.0
        %3056 = vmatpush1.msra.mxu0 0.0
        %3057 = vmatprep.subr.mxu0 0.0
        %3058 = vmatpush1.msra.mxu0 0.0
        %3059 = vmatprep.subr.mxu0 0.0
        %3060 = vmatpush1.msra.mxu0 0.0
        %3061 = vmatprep.subr.mxu0 0.0
        %3062 = vmatpush1.msra.mxu0 0.0
        %3063 = vmatprep.subr.mxu0 0.0
        %3064 = vmatpush1.msra.mxu0 0.0
        %3065 = vmatprep.subr.mxu0 0.0
        %3066 = vmatpush1.msra.mxu0 0.0
        %3067 = vmatprep.subr.mxu0 0.0
        %3068 = vmatpush1.msra.mxu0 0.0
        %3069 = vmatprep.subr.mxu0 0.0
        %3070 = vmatpush1.msra.mxu0 0.0
        %3071 = vmatprep.subr.mxu0 0.0
        %3072 = vmatpush1.msra.mxu0 0.0
        %3073 = vmatprep.subr.mxu0 0.0
        %3074 = vmatpush1.msra.mxu0 0.0
        %3075 = vmatprep.subr.mxu0 0.0
        %3076 = vmatpush1.msra.mxu0 0.0
        %3077 = vmatprep.subr.mxu0 0.0
        %3078 = vmatpush1.msra.mxu0 0.0
        %3079 = vmatprep.subr.mxu0 0.0
        %3080 = vmatpush1.msra.mxu0 0.0
        %3081 = vmatprep.subr.mxu0 0.0
        %3082 = vmatpush1.msra.mxu0 0.0
        %3083 = vmatprep.subr.mxu0 0.0
        %3084 = vmatpush1.msra.mxu0 0.0
        %3085 = vmatprep.subr.mxu0 0.0
        %3086 = vmatpush1.msra.mxu0 0.0
        %3087 = vmatprep.subr.mxu0 0.0
        %3088 = vmatpush1.msra.mxu0 0.0
        %3089 = vmatprep.subr.mxu0 0.0
        %3090 = vmatpush1.msra.mxu0 0.0
        %3091 = vmatprep.subr.mxu0 0.0
        %3092 = vmatpush1.msra.mxu0 0.0
        %3093 = vmatprep.mubr.f32.mxu0 0.0
        %3094 = vmatmul.mubr.f32.gmra.mrb[0].mxu0 %v3006
        %v3095 = vpop.f32.mrb[0].mxu0
        %v3096 = vadd.f32 %v3002, %v3095
        %v3097 = vpop.f32.mrb[0].mxu0
        %3098 = vmatprep.mubr.f32.mxu0 0.0
        %3099 = vmatmul.mubr.f32.gmra.mrb[0].mxu0 %v3009
        %v3100 = vpop.f32.mrb[0].mxu0
        %v3101 = vadd.f32 %v3002, %v3100
        %v3102 = vpop.f32.mrb[0].mxu0
        %3103 = vmatprep.mubr.f32.mxu0 0.0
        %3104 = vmatmul.mubr.f32.gmra.mrb[0].mxu0 %v3012
        %v3105 = vpop.f32.mrb[0].mxu0
        %v3106 = vadd.f32 %v3002, %v3105
        %v3107 = vpop.f32.mrb[0].mxu0
        %3108 = vmatprep.mubr.f32.mxu0 0.0
        %3109 = vmatmul.mubr.f32.gmra.mrb[0].mxu0 %v3015
        %v3110 = vpop.f32.mrb[0].mxu0
        %v3111 = vadd.f32 %v3002, %v3110
        %v3112 = vpop.f32.mrb[0].mxu0
        %3113 = vmatprep.mubr.f32.mxu0 0.0
        %3114 = vmatmul.mubr.f32.gmra.mrb[0].mxu0 %v3018
        %v3115 = vpop.f32.mrb[0].mxu0
        %v3116 = vadd.f32 %v3002, %v3115
        %v3117 = vpop.f32.mrb[0].mxu0
        %3118 = vmatprep.mubr.f32.mxu0 0.0
        %3119 = vmatmul.mubr.f32.gmra.mrb[0].mxu0 %v3021
        %v3120 = vpop.f32.mrb[0].mxu0
        %v3121 = vadd.f32 %v3002, %v3120
        %v3122 = vpop.f32.mrb[0].mxu0
        %3123 = vmatprep.mubr.f32.mxu0 0.0
        %3124 = vmatmul.mubr.f32.gmra.mrb[0].mxu0 %v3024
        %v3125 = vpop.f32.mrb[0].mxu0
        %v3126 = vadd.f32 %v3002, %v3125
        %v3127 = vpop.f32.mrb[0].mxu0
        %3128 = vmatprep.mubr.f32.mxu0 0.0
        %3129 = vmatmul.mubr.f32.gmra.mrb[0].mxu0 %v3027
        %v3130 = vpop.f32.mrb[0].mxu0
        %v3131 = vadd.f32 %v3002, %v3130
        %v3132 = vpop.f32.mrb[0].mxu0
        %3133 = vdwg.mxu0
        %v3134 = vmin.f32 %v3096, 20.0
        %v3135 = vmin.f32 %v3101, 20.0
        %v3136 = vmin.f32 %v3106, 20.0
        %v3137 = vmin.f32 %v3111, 20.0
        %v3138 = vmin.f32 %v3116, 20.0
        %v3139 = vmin.f32 %v3121, 20.0
        %v3140 = vmin.f32 %v3126, 20.0
        %v3141 = vmin.f32 %v3131, 20.0
        %v3142 = vmul.f32 %v3134, 1.442695
        %v3143 = vpow.pop %v3142
        %v3144 = vmul.f32 %v3135, 1.442695
        %v3145 = vpow.pop %v3144
        %v3146 = vmul.f32 %v3136, 1.442695
        %v3147 = vpow.pop %v3146
        %v3148 = vmul.f32 %v3137, 1.442695
        %v3149 = vpow.pop %v3148
        %v3150 = vmul.f32 %v3138, 1.442695
        %v3151 = vpow.pop %v3150
        %v3152 = vmul.f32 %v3139, 1.442695
        %v3153 = vpow.pop %v3152
        %v3154 = vmul.f32 %v3140, 1.442695
        %v3155 = vpow.pop %v3154
        %v3156 = vmul.f32 %v3141, 1.442695
        %v3157 = vpow.pop %v3156
        %v3158 = vadd.f32 %v3143, 1.0
        %v3159 = vadd.f32 %v3145, 1.0
        %v3160 = vadd.f32 %v3147, 1.0
        %v3161 = vadd.f32 %v3149, 1.0
        %v3162 = vadd.f32 %v3151, 1.0
        %v3163 = vadd.f32 %v3153, 1.0
        %v3164 = vadd.f32 %v3155, 1.0
        %v3165 = vadd.f32 %v3157, 1.0
        %v3166 = vmul.f32 %v3158, %v3158
        %v3167 = vmul.f32 %v3159, %v3159
        %v3168 = vmul.f32 %v3160, %v3160
        %v3169 = vmul.f32 %v3161, %v3161
        %v3170 = vmul.f32 %v3162, %v3162
        %v3171 = vmul.f32 %v3163, %v3163
        %v3172 = vmul.f32 %v3164, %v3164
        %v3173 = vmul.f32 %v3165, %v3165
        %v3174 = vsub.f32 %v3166, 1.0
        %v3175 = vsub.f32 %v3167, 1.0
        %v3176 = vsub.f32 %v3168, 1.0
        %v3177 = vsub.f32 %v3169, 1.0
        %v3178 = vsub.f32 %v3170, 1.0
        %v3179 = vsub.f32 %v3171, 1.0
        %v3180 = vsub.f32 %v3172, 1.0
        %v3181 = vsub.f32 %v3173, 1.0
        %v3182 = vmul.f32 %v3096, %v3174
        %v3183 = vmul.f32 %v3101, %v3175
        %v3184 = vmul.f32 %v3106, %v3176
        %v3185 = vmul.f32 %v3111, %v3177
        %v3186 = vmul.f32 %v3116, %v3178
        %v3187 = vmul.f32 %v3121, %v3179
        %v3188 = vmul.f32 %v3126, %v3180
        %v3189 = vmul.f32 %v3131, %v3181
        %v3190 = vadd.f32 %v3166, 1.0
        %v3191 = vadd.f32 %v3167, 1.0
        %v3192 = vadd.f32 %v3168, 1.0
        %v3193 = vadd.f32 %v3169, 1.0
        %v3194 = vadd.f32 %v3170, 1.0
        %v3195 = vadd.f32 %v3171, 1.0
        %v3196 = vadd.f32 %v3172, 1.0
        %v3197 = vadd.f32 %v3173, 1.0
        %v3198 = vrcp.pop %v3190
        %v3199 = vrcp.pop %v3191
        %v3200 = vrcp.pop %v3192
        %v3201 = vrcp.pop %v3193
        %v3202 = vrcp.pop %v3194
        %v3203 = vrcp.pop %v3195
        %v3204 = vrcp.pop %v3196
        %v3205 = vrcp.pop %v3197
        %v3206 = vmul.f32 %v3182, %v3198
        %v3207 = vmul.f32 %v3183, %v3199
        %v3208 = vmul.f32 %v3184, %v3200
        %v3209 = vmul.f32 %v3185, %v3201
        %v3210 = vmul.f32 %v3186, %v3202
        %v3211 = vmul.f32 %v3187, %v3203
        %v3212 = vmul.f32 %v3188, %v3204
        %v3213 = vmul.f32 %v3189, %v3205
        %v3214 = vld [vmem:[%s7] sm:$0xff]
        %v3215 = vld [vmem:[%s7 + $0x8] sm:$0xff]
        %v3216 = vld [vmem:[%s7 + $0x10] sm:$0xff]
        %v3217 = vld [vmem:[%s7 + $0x18] sm:$0xff]
        %v3218 = vld [vmem:[%s7 + $0x20] sm:$0xff]
        %v3219 = vld [vmem:[%s7 + $0x28] sm:$0xff]
        %v3220 = vld [vmem:[%s7 + $0x30] sm:$0xff]
        %v3221 = vld [vmem:[%s7 + $0x38] sm:$0xff]
        %v3222 = vld [vmem:[%s8] sm:$0x1]
        %v3224 = vlaneseq
        %v3225 = vshrl.u32 %v3224, 7
        %v3226 = vsub.s32 0, %v3225
        %v3227 = vrot.slane %v3222, %v3226
        %3237 = vrot.lane.b32.xlu0 %v3206, 64
        %v3238 = vpop.permute.xlu0 %3237
        %3239 = vrot.lane.b32.xlu0 %v3207, 64
        %v3240 = vpop.permute.xlu0 %3239
        %3241 = vrot.lane.b32.xlu0 %v3208, 64
        %v3242 = vpop.permute.xlu0 %3241
        %3243 = vrot.lane.b32.xlu0 %v3209, 64
        %v3244 = vpop.permute.xlu0 %3243
        %3245 = vrot.lane.b32.xlu0 %v3210, 64
        %v3246 = vpop.permute.xlu0 %3245
        %3247 = vrot.lane.b32.xlu0 %v3211, 64
        %v3248 = vpop.permute.xlu0 %3247
        %3249 = vrot.lane.b32.xlu0 %v3212, 64
        %v3250 = vpop.permute.xlu0 %3249
        %3251 = vrot.lane.b32.xlu0 %v3213, 64
        %v3252 = vpop.permute.xlu0 %3251
        %v3253 = vsel %vm3004, %v3238, 0
        %v3255 = vsel %vm3004, %v3240, 0
        %v3257 = vsel %vm3004, %v3242, 0
        %v3259 = vsel %vm3004, %v3244, 0
        %v3261 = vsel %vm3004, %v3246, 0
        %v3263 = vsel %vm3004, %v3248, 0
        %v3265 = vsel %vm3004, %v3250, 0
        %v3267 = vsel %vm3004, %v3252, 0
        %3269 = vmatprep.subr.mxu0 0.0
        %3270 = vmatpush1.msra.mxu0 %v3214
        %3271 = vmatprep.subr.mxu0 0.0
        %3272 = vmatpush1.msra.mxu0 %v3215
        %3273 = vmatprep.subr.mxu0 0.0
        %3274 = vmatpush1.msra.mxu0 %v3216
        %3275 = vmatprep.subr.mxu0 0.0
        %3276 = vmatpush1.msra.mxu0 %v3217
        %3277 = vmatprep.subr.mxu0 0.0
        %3278 = vmatpush1.msra.mxu0 %v3218
        %3279 = vmatprep.subr.mxu0 0.0
        %3280 = vmatpush1.msra.mxu0 %v3219
        %3281 = vmatprep.subr.mxu0 0.0
        %3282 = vmatpush1.msra.mxu0 %v3220
        %3283 = vmatprep.subr.mxu0 0.0
        %3284 = vmatpush1.msra.mxu0 %v3221
        %3285 = vmatprep.subr.mxu0 0.0
        %3286 = vmatpush1.msra.mxu0 0.0
        %3287 = vmatprep.subr.mxu0 0.0
        %3288 = vmatpush1.msra.mxu0 0.0
        %3289 = vmatprep.subr.mxu0 0.0
        %3290 = vmatpush1.msra.mxu0 0.0
        %3291 = vmatprep.subr.mxu0 0.0
        %3292 = vmatpush1.msra.mxu0 0.0
        %3293 = vmatprep.subr.mxu0 0.0
        %3294 = vmatpush1.msra.mxu0 0.0
        %3295 = vmatprep.subr.mxu0 0.0
        %3296 = vmatpush1.msra.mxu0 0.0
        %3297 = vmatprep.subr.mxu0 0.0
        %3298 = vmatpush1.msra.mxu0 0.0
        %3299 = vmatprep.subr.mxu0 0.0
        %3300 = vmatpush1.msra.mxu0 0.0
        %3301 = vmatprep.subr.mxu0 0.0
        %3302 = vmatpush1.msra.mxu0 0.0
        %3303 = vmatprep.subr.mxu0 0.0
        %3304 = vmatpush1.msra.mxu0 0.0
        %3305 = vmatprep.subr.mxu0 0.0
        %3306 = vmatpush1.msra.mxu0 0.0
        %3307 = vmatprep.subr.mxu0 0.0
        %3308 = vmatpush1.msra.mxu0 0.0
        %3309 = vmatprep.subr.mxu0 0.0
        %3310 = vmatpush1.msra.mxu0 0.0
        %3311 = vmatprep.subr.mxu0 0.0
        %3312 = vmatpush1.msra.mxu0 0.0
        %3313 = vmatprep.subr.mxu0 0.0
        %3314 = vmatpush1.msra.mxu0 0.0
        %3315 = vmatprep.subr.mxu0 0.0
        %3316 = vmatpush1.msra.mxu0 0.0
        %3317 = vmatprep.subr.mxu0 0.0
        %3318 = vmatpush1.msra.mxu0 0.0
        %3319 = vmatprep.subr.mxu0 0.0
        %3320 = vmatpush1.msra.mxu0 0.0
        %3321 = vmatprep.subr.mxu0 0.0
        %3322 = vmatpush1.msra.mxu0 0.0
        %3323 = vmatprep.subr.mxu0 0.0
        %3324 = vmatpush1.msra.mxu0 0.0
        %3325 = vmatprep.subr.mxu0 0.0
        %3326 = vmatpush1.msra.mxu0 0.0
        %3327 = vmatprep.subr.mxu0 0.0
        %3328 = vmatpush1.msra.mxu0 0.0
        %3329 = vmatprep.subr.mxu0 0.0
        %3330 = vmatpush1.msra.mxu0 0.0
        %3331 = vmatprep.subr.mxu0 0.0
        %3332 = vmatpush1.msra.mxu0 0.0
        %3333 = vmatprep.mubr.f32.mxu0 0.0
        %3334 = vmatmul.mubr.f32.gmra.mrb[0].mxu0 %v3253
        %v3335 = vpop.f32.mrb[0].mxu0
        %v3336 = vadd.f32 %v3227, %v3335
        %v3337 = vpop.f32.mrb[0].mxu0
        %3338 = vmatprep.mubr.f32.mxu0 0.0
        %3339 = vmatmul.mubr.f32.gmra.mrb[0].mxu0 %v3255
        %v3340 = vpop.f32.mrb[0].mxu0
        %v3341 = vadd.f32 %v3227, %v3340
        %v3342 = vpop.f32.mrb[0].mxu0
        %3343 = vmatprep.mubr.f32.mxu0 0.0
        %3344 = vmatmul.mubr.f32.gmra.mrb[0].mxu0 %v3257
        %v3345 = vpop.f32.mrb[0].mxu0
        %v3346 = vadd.f32 %v3227, %v3345
        %v3347 = vpop.f32.mrb[0].mxu0
        %3348 = vmatprep.mubr.f32.mxu0 0.0
        %3349 = vmatmul.mubr.f32.gmra.mrb[0].mxu0 %v3259
        %v3350 = vpop.f32.mrb[0].mxu0
        %v3351 = vadd.f32 %v3227, %v3350
        %v3352 = vpop.f32.mrb[0].mxu0
        %3353 = vmatprep.mubr.f32.mxu0 0.0
        %3354 = vmatmul.mubr.f32.gmra.mrb[0].mxu0 %v3261
        %v3355 = vpop.f32.mrb[0].mxu0
        %v3356 = vadd.f32 %v3227, %v3355
        %v3357 = vpop.f32.mrb[0].mxu0
        %3358 = vmatprep.mubr.f32.mxu0 0.0
        %3359 = vmatmul.mubr.f32.gmra.mrb[0].mxu0 %v3263
        %v3360 = vpop.f32.mrb[0].mxu0
        %v3361 = vadd.f32 %v3227, %v3360
        %v3362 = vpop.f32.mrb[0].mxu0
        %3363 = vmatprep.mubr.f32.mxu0 0.0
        %3364 = vmatmul.mubr.f32.gmra.mrb[0].mxu0 %v3265
        %v3365 = vpop.f32.mrb[0].mxu0
        %v3366 = vadd.f32 %v3227, %v3365
        %v3367 = vpop.f32.mrb[0].mxu0
        %3368 = vmatprep.mubr.f32.mxu0 0.0
        %3369 = vmatmul.mubr.f32.gmra.mrb[0].mxu0 %v3267
        %v3370 = vpop.f32.mrb[0].mxu0
        %v3371 = vadd.f32 %v3227, %v3370
        %v3372 = vpop.f32.mrb[0].mxu0
        %3373 = vdwg.mxu0
        %v3374 = vmin.f32 %v3336, 20.0
        %v3375 = vmin.f32 %v3341, 20.0
        %v3376 = vmin.f32 %v3346, 20.0
        %v3377 = vmin.f32 %v3351, 20.0
        %v3378 = vmin.f32 %v3356, 20.0
        %v3379 = vmin.f32 %v3361, 20.0
        %v3380 = vmin.f32 %v3366, 20.0
        %v3381 = vmin.f32 %v3371, 20.0
        %v3382 = vmul.f32 %v3374, 1.442695
        %v3383 = vpow.pop %v3382
        %v3384 = vmul.f32 %v3375, 1.442695
        %v3385 = vpow.pop %v3384
        %v3386 = vmul.f32 %v3376, 1.442695
        %v3387 = vpow.pop %v3386
        %v3388 = vmul.f32 %v3377, 1.442695
        %v3389 = vpow.pop %v3388
        %v3390 = vmul.f32 %v3378, 1.442695
        %v3391 = vpow.pop %v3390
        %v3392 = vmul.f32 %v3379, 1.442695
        %v3393 = vpow.pop %v3392
        %v3394 = vmul.f32 %v3380, 1.442695
        %v3395 = vpow.pop %v3394
        %v3396 = vmul.f32 %v3381, 1.442695
        %v3397 = vpow.pop %v3396
        %v3398 = vadd.f32 %v3383, 1.0
        %v3399 = vadd.f32 %v3385, 1.0
        %v3400 = vadd.f32 %v3387, 1.0
        %v3401 = vadd.f32 %v3389, 1.0
        %v3402 = vadd.f32 %v3391, 1.0
        %v3403 = vadd.f32 %v3393, 1.0
        %v3404 = vadd.f32 %v3395, 1.0
        %v3405 = vadd.f32 %v3397, 1.0
        %v3406 = vmul.f32 %v3398, %v3398
        %v3407 = vmul.f32 %v3399, %v3399
        %v3408 = vmul.f32 %v3400, %v3400
        %v3409 = vmul.f32 %v3401, %v3401
        %v3410 = vmul.f32 %v3402, %v3402
        %v3411 = vmul.f32 %v3403, %v3403
        %v3412 = vmul.f32 %v3404, %v3404
        %v3413 = vmul.f32 %v3405, %v3405
        %v3414 = vsub.f32 %v3406, 1.0
        %v3415 = vsub.f32 %v3407, 1.0
        %v3416 = vsub.f32 %v3408, 1.0
        %v3417 = vsub.f32 %v3409, 1.0
        %v3418 = vsub.f32 %v3410, 1.0
        %v3419 = vsub.f32 %v3411, 1.0
        %v3420 = vsub.f32 %v3412, 1.0
        %v3421 = vsub.f32 %v3413, 1.0
        %v3422 = vmul.f32 %v3336, %v3414
        %v3423 = vmul.f32 %v3341, %v3415
        %v3424 = vmul.f32 %v3346, %v3416
        %v3425 = vmul.f32 %v3351, %v3417
        %v3426 = vmul.f32 %v3356, %v3418
        %v3427 = vmul.f32 %v3361, %v3419
        %v3428 = vmul.f32 %v3366, %v3420
        %v3429 = vmul.f32 %v3371, %v3421
        %v3430 = vadd.f32 %v3406, 1.0
        %v3431 = vadd.f32 %v3407, 1.0
        %v3432 = vadd.f32 %v3408, 1.0
        %v3433 = vadd.f32 %v3409, 1.0
        %v3434 = vadd.f32 %v3410, 1.0
        %v3435 = vadd.f32 %v3411, 1.0
        %v3436 = vadd.f32 %v3412, 1.0
        %v3437 = vadd.f32 %v3413, 1.0
        %v3438 = vrcp.pop %v3430
        %v3439 = vrcp.pop %v3431
        %v3440 = vrcp.pop %v3432
        %v3441 = vrcp.pop %v3433
        %v3442 = vrcp.pop %v3434
        %v3443 = vrcp.pop %v3435
        %v3444 = vrcp.pop %v3436
        %v3445 = vrcp.pop %v3437
        %v3446 = vmul.f32 %v3422, %v3438
        %v3447 = vmul.f32 %v3423, %v3439
        %v3448 = vmul.f32 %v3424, %v3440
        %v3449 = vmul.f32 %v3425, %v3441
        %v3450 = vmul.f32 %v3426, %v3442
        %v3451 = vmul.f32 %v3427, %v3443
        %v3452 = vmul.f32 %v3428, %v3444
        %v3453 = vmul.f32 %v3429, %v3445
        %s3454 = scalar_lea.vmem [#allocation3], 16
        %3455 = vst.msk [vmem:[%s3454 + $0x1] sm:$0xff] %vm520, %v3446
        %3456 = vst.msk [vmem:[%s3454 + $0x11] sm:$0xff] %vm520, %v3447
        %3457 = vst.msk [vmem:[%s3454 + $0x21] sm:$0xff] %vm520, %v3448
        %3458 = vst.msk [vmem:[%s3454 + $0x31] sm:$0xff] %vm520, %v3449
        %3459 = vst.msk [vmem:[%s3454 + $0x41] sm:$0xff] %vm520, %v3450
        %3460 = vst.msk [vmem:[%s3454 + $0x51] sm:$0xff] %vm520, %v3451
        %3461 = vst.msk [vmem:[%s3454 + $0x61] sm:$0xff] %vm520, %v3452
        %3462 = vst.msk [vmem:[%s3454 + $0x71] sm:$0xff] %vm520, %v3453
        %v3463 = vld [vmem:[#allocation3] sm:$0xff]
        %v3464 = vld [vmem:[#allocation3 + $0x10] sm:$0xff]
        %v3465 = vld [vmem:[#allocation3 + $0x20] sm:$0xff]
        %v3466 = vld [vmem:[#allocation3 + $0x30] sm:$0xff]
        %v3467 = vld [vmem:[#allocation3 + $0x40] sm:$0xff]
        %v3468 = vld [vmem:[#allocation3 + $0x50] sm:$0xff]
        %v3469 = vld [vmem:[#allocation3 + $0x60] sm:$0xff]
        %v3470 = vld [vmem:[#allocation3 + $0x70] sm:$0xff]
        %v3471 = vld [vmem:[%s9] sm:$0xff]
        %v3472 = vld [vmem:[%s9 + $0x8] sm:$0xff]
        %v3473 = vld [vmem:[%s9 + $0x10] sm:$0xff]
        %v3474 = vld [vmem:[%s9 + $0x18] sm:$0xff]
        %v3475 = vld [vmem:[#allocation3 + $0x1] sm:$0xff]
        %v3476 = vld [vmem:[#allocation3 + $0x11] sm:$0xff]
        %v3477 = vld [vmem:[#allocation3 + $0x21] sm:$0xff]
        %v3478 = vld [vmem:[#allocation3 + $0x31] sm:$0xff]
        %v3479 = vld [vmem:[#allocation3 + $0x41] sm:$0xff]
        %v3480 = vld [vmem:[#allocation3 + $0x51] sm:$0xff]
        %v3481 = vld [vmem:[#allocation3 + $0x61] sm:$0xff]
        %v3482 = vld [vmem:[#allocation3 + $0x71] sm:$0xff]
        %s3483 = scalar_lea.vmem %s9, 32
        %v3484 = vld [vmem:[%s3483] sm:$0xff]
        %v3485 = vld [vmem:[%s3483 + $0x8] sm:$0xff]
        %v3486 = vld [vmem:[%s3483 + $0x10] sm:$0xff]
        %v3487 = vld [vmem:[%s3483 + $0x18] sm:$0xff]
        %v3489 = vsel %vm520, %v3475, 0
        %v3492 = vsel %vm520, %v3476, 0
        %v3495 = vsel %vm520, %v3477, 0
        %v3498 = vsel %vm520, %v3478, 0
        %v3501 = vsel %vm520, %v3479, 0
        %v3504 = vsel %vm520, %v3480, 0
        %v3507 = vsel %vm520, %v3481, 0
        %v3510 = vsel %vm520, %v3482, 0
        %3512 = vmatprep.subr.mxu0 0.0
        %3513 = vmatpush1.msra.mxu0 %v3484
        %3514 = vmatprep.subr.mxu0 0.0
        %3515 = vmatpush1.msra.mxu0 %v3485
        %3516 = vmatprep.subr.mxu0 0.0
        %3517 = vmatpush1.msra.mxu0 %v3486
        %3518 = vmatprep.subr.mxu0 0.0
        %3519 = vmatpush1.msra.mxu0 %v3487
        %3520 = vmatprep.subr.mxu0 0.0
        %3521 = vmatpush1.msra.mxu0 0.0
        %3522 = vmatprep.subr.mxu0 0.0
        %3523 = vmatpush1.msra.mxu0 0.0
        %3524 = vmatprep.subr.mxu0 0.0
        %3525 = vmatpush1.msra.mxu0 0.0
        %3526 = vmatprep.subr.mxu0 0.0
        %3527 = vmatpush1.msra.mxu0 0.0
        %3528 = vmatprep.subr.mxu0 0.0
        %3529 = vmatpush1.msra.mxu0 0.0
        %3530 = vmatprep.subr.mxu0 0.0
        %3531 = vmatpush1.msra.mxu0 0.0
        %3532 = vmatprep.subr.mxu0 0.0
        %3533 = vmatpush1.msra.mxu0 0.0
        %3534 = vmatprep.subr.mxu0 0.0
        %3535 = vmatpush1.msra.mxu0 0.0
        %3536 = vmatprep.subr.mxu0 0.0
        %3537 = vmatpush1.msra.mxu0 0.0
        %3538 = vmatprep.subr.mxu0 0.0
        %3539 = vmatpush1.msra.mxu0 0.0
        %3540 = vmatprep.subr.mxu0 0.0
        %3541 = vmatpush1.msra.mxu0 0.0
        %3542 = vmatprep.subr.mxu0 0.0
        %3543 = vmatpush1.msra.mxu0 0.0
        %3544 = vmatprep.subr.mxu0 0.0
        %3545 = vmatpush1.msra.mxu0 0.0
        %3546 = vmatprep.subr.mxu0 0.0
        %3547 = vmatpush1.msra.mxu0 0.0
        %3548 = vmatprep.subr.mxu0 0.0
        %3549 = vmatpush1.msra.mxu0 0.0
        %3550 = vmatprep.subr.mxu0 0.0
        %3551 = vmatpush1.msra.mxu0 0.0
        %3552 = vmatprep.subr.mxu0 0.0
        %3553 = vmatpush1.msra.mxu0 0.0
        %3554 = vmatprep.subr.mxu0 0.0
        %3555 = vmatpush1.msra.mxu0 0.0
        %3556 = vmatprep.subr.mxu0 0.0
        %3557 = vmatpush1.msra.mxu0 0.0
        %3558 = vmatprep.subr.mxu0 0.0
        %3559 = vmatpush1.msra.mxu0 0.0
        %3560 = vmatprep.subr.mxu0 0.0
        %3561 = vmatpush1.msra.mxu0 0.0
        %3562 = vmatprep.subr.mxu0 0.0
        %3563 = vmatpush1.msra.mxu0 0.0
        %3564 = vmatprep.subr.mxu0 0.0
        %3565 = vmatpush1.msra.mxu0 0.0
        %3566 = vmatprep.subr.mxu0 0.0
        %3567 = vmatpush1.msra.mxu0 0.0
        %3568 = vmatprep.subr.mxu0 0.0
        %3569 = vmatpush1.msra.mxu0 0.0
        %3570 = vmatprep.subr.mxu0 0.0
        %3571 = vmatpush1.msra.mxu0 0.0
        %3572 = vmatprep.subr.mxu0 0.0
        %3573 = vmatpush1.msra.mxu0 0.0
        %3574 = vmatprep.subr.mxu0 0.0
        %3575 = vmatpush1.msra.mxu0 0.0
        %3576 = vmatprep.mubr.f32.mxu0 0.0
        %3577 = vmatmul.mubr.f32.gmra.mrb[0].mxu0 %v3489
        %v3578 = vpop.f32.mrb[0].mxu0
        %v3579 = vadd.f32 0.0, %v3578
        %v3580 = vpop.f32.mrb[0].mxu0
        %3581 = vmatprep.mubr.f32.mxu0 0.0
        %3582 = vmatmul.mubr.f32.gmra.mrb[0].mxu0 %v3492
        %v3583 = vpop.f32.mrb[0].mxu0
        %v3584 = vadd.f32 0.0, %v3583
        %v3585 = vpop.f32.mrb[0].mxu0
        %3586 = vmatprep.mubr.f32.mxu0 0.0
        %3587 = vmatmul.mubr.f32.gmra.mrb[0].mxu0 %v3495
        %v3588 = vpop.f32.mrb[0].mxu0
        %v3589 = vadd.f32 0.0, %v3588
        %v3590 = vpop.f32.mrb[0].mxu0
        %3591 = vmatprep.mubr.f32.mxu0 0.0
        %3592 = vmatmul.mubr.f32.gmra.mrb[0].mxu0 %v3498
        %v3593 = vpop.f32.mrb[0].mxu0
        %v3594 = vadd.f32 0.0, %v3593
        %v3595 = vpop.f32.mrb[0].mxu0
        %3596 = vmatprep.mubr.f32.mxu0 0.0
        %3597 = vmatmul.mubr.f32.gmra.mrb[0].mxu0 %v3501
        %v3598 = vpop.f32.mrb[0].mxu0
        %v3599 = vadd.f32 0.0, %v3598
        %v3600 = vpop.f32.mrb[0].mxu0
        %3601 = vmatprep.mubr.f32.mxu0 0.0
        %3602 = vmatmul.mubr.f32.gmra.mrb[0].mxu0 %v3504
        %v3603 = vpop.f32.mrb[0].mxu0
        %v3604 = vadd.f32 0.0, %v3603
        %v3605 = vpop.f32.mrb[0].mxu0
        %3606 = vmatprep.mubr.f32.mxu0 0.0
        %3607 = vmatmul.mubr.f32.gmra.mrb[0].mxu0 %v3507
        %v3608 = vpop.f32.mrb[0].mxu0
        %v3609 = vadd.f32 0.0, %v3608
        %v3610 = vpop.f32.mrb[0].mxu0
        %3611 = vmatprep.mubr.f32.mxu0 0.0
        %3612 = vmatmul.mubr.f32.gmra.mrb[0].mxu0 %v3510
        %v3613 = vpop.f32.mrb[0].mxu0
        %v3614 = vadd.f32 0.0, %v3613
        %v3615 = vpop.f32.mrb[0].mxu0
        %3616 = vdwg.mxu0
        %v3618 = vsel %vm520, %v3463, 0
        %v3621 = vsel %vm520, %v3464, 0
        %v3624 = vsel %vm520, %v3465, 0
        %v3627 = vsel %vm520, %v3466, 0
        %v3630 = vsel %vm520, %v3467, 0
        %v3633 = vsel %vm520, %v3468, 0
        %v3636 = vsel %vm520, %v3469, 0
        %v3639 = vsel %vm520, %v3470, 0
        %3641 = vmatprep.subr.mxu0 0.0
        %3642 = vmatpush1.msra.mxu0 %v3471
        %3643 = vmatprep.subr.mxu0 0.0
        %3644 = vmatpush1.msra.mxu0 %v3472
        %3645 = vmatprep.subr.mxu0 0.0
        %3646 = vmatpush1.msra.mxu0 %v3473
        %3647 = vmatprep.subr.mxu0 0.0
        %3648 = vmatpush1.msra.mxu0 %v3474
        %3649 = vmatprep.subr.mxu0 0.0
        %3650 = vmatpush1.msra.mxu0 0.0
        %3651 = vmatprep.subr.mxu0 0.0
        %3652 = vmatpush1.msra.mxu0 0.0
        %3653 = vmatprep.subr.mxu0 0.0
        %3654 = vmatpush1.msra.mxu0 0.0
        %3655 = vmatprep.subr.mxu0 0.0
        %3656 = vmatpush1.msra.mxu0 0.0
        %3657 = vmatprep.subr.mxu0 0.0
        %3658 = vmatpush1.msra.mxu0 0.0
        %3659 = vmatprep.subr.mxu0 0.0
        %3660 = vmatpush1.msra.mxu0 0.0
        %3661 = vmatprep.subr.mxu0 0.0
        %3662 = vmatpush1.msra.mxu0 0.0
        %3663 = vmatprep.subr.mxu0 0.0
        %3664 = vmatpush1.msra.mxu0 0.0
        %3665 = vmatprep.subr.mxu0 0.0
        %3666 = vmatpush1.msra.mxu0 0.0
        %3667 = vmatprep.subr.mxu0 0.0
        %3668 = vmatpush1.msra.mxu0 0.0
        %3669 = vmatprep.subr.mxu0 0.0
        %3670 = vmatpush1.msra.mxu0 0.0
        %3671 = vmatprep.subr.mxu0 0.0
        %3672 = vmatpush1.msra.mxu0 0.0
        %3673 = vmatprep.subr.mxu0 0.0
        %3674 = vmatpush1.msra.mxu0 0.0
        %3675 = vmatprep.subr.mxu0 0.0
        %3676 = vmatpush1.msra.mxu0 0.0
        %3677 = vmatprep.subr.mxu0 0.0
        %3678 = vmatpush1.msra.mxu0 0.0
        %3679 = vmatprep.subr.mxu0 0.0
        %3680 = vmatpush1.msra.mxu0 0.0
        %3681 = vmatprep.subr.mxu0 0.0
        %3682 = vmatpush1.msra.mxu0 0.0
        %3683 = vmatprep.subr.mxu0 0.0
        %3684 = vmatpush1.msra.mxu0 0.0
        %3685 = vmatprep.subr.mxu0 0.0
        %3686 = vmatpush1.msra.mxu0 0.0
        %3687 = vmatprep.subr.mxu0 0.0
        %3688 = vmatpush1.msra.mxu0 0.0
        %3689 = vmatprep.subr.mxu0 0.0
        %3690 = vmatpush1.msra.mxu0 0.0
        %3691 = vmatprep.subr.mxu0 0.0
        %3692 = vmatpush1.msra.mxu0 0.0
        %3693 = vmatprep.subr.mxu0 0.0
        %3694 = vmatpush1.msra.mxu0 0.0
        %3695 = vmatprep.subr.mxu0 0.0
        %3696 = vmatpush1.msra.mxu0 0.0
        %3697 = vmatprep.subr.mxu0 0.0
        %3698 = vmatpush1.msra.mxu0 0.0
        %3699 = vmatprep.subr.mxu0 0.0
        %3700 = vmatpush1.msra.mxu0 0.0
        %3701 = vmatprep.subr.mxu0 0.0
        %3702 = vmatpush1.msra.mxu0 0.0
        %3703 = vmatprep.subr.mxu0 0.0
        %3704 = vmatpush1.msra.mxu0 0.0
        %3705 = vmatprep.mubr.f32.mxu0 0.0
        %3706 = vmatmul.mubr.f32.gmra.mrb[0].mxu0 %v3618
        %v3707 = vpop.f32.mrb[0].mxu0
        %v3708 = vadd.f32 %v3579, %v3707
        %v3709 = vpop.f32.mrb[0].mxu0
        %3710 = vmatprep.mubr.f32.mxu0 0.0
        %3711 = vmatmul.mubr.f32.gmra.mrb[0].mxu0 %v3621
        %v3712 = vpop.f32.mrb[0].mxu0
        %v3713 = vadd.f32 %v3584, %v3712
        %v3714 = vpop.f32.mrb[0].mxu0
        %3715 = vmatprep.mubr.f32.mxu0 0.0
        %3716 = vmatmul.mubr.f32.gmra.mrb[0].mxu0 %v3624
        %v3717 = vpop.f32.mrb[0].mxu0
        %v3718 = vadd.f32 %v3589, %v3717
        %v3719 = vpop.f32.mrb[0].mxu0
        %3720 = vmatprep.mubr.f32.mxu0 0.0
        %3721 = vmatmul.mubr.f32.gmra.mrb[0].mxu0 %v3627
        %v3722 = vpop.f32.mrb[0].mxu0
        %v3723 = vadd.f32 %v3594, %v3722
        %v3724 = vpop.f32.mrb[0].mxu0
        %3725 = vmatprep.mubr.f32.mxu0 0.0
        %3726 = vmatmul.mubr.f32.gmra.mrb[0].mxu0 %v3630
        %v3727 = vpop.f32.mrb[0].mxu0
        %v3728 = vadd.f32 %v3599, %v3727
        %v3729 = vpop.f32.mrb[0].mxu0
        %3730 = vmatprep.mubr.f32.mxu0 0.0
        %3731 = vmatmul.mubr.f32.gmra.mrb[0].mxu0 %v3633
        %v3732 = vpop.f32.mrb[0].mxu0
        %v3733 = vadd.f32 %v3604, %v3732
        %v3734 = vpop.f32.mrb[0].mxu0
        %3735 = vmatprep.mubr.f32.mxu0 0.0
        %3736 = vmatmul.mubr.f32.gmra.mrb[0].mxu0 %v3636
        %v3737 = vpop.f32.mrb[0].mxu0
        %v3738 = vadd.f32 %v3609, %v3737
        %v3739 = vpop.f32.mrb[0].mxu0
        %3740 = vmatprep.mubr.f32.mxu0 0.0
        %3741 = vmatmul.mubr.f32.gmra.mrb[0].mxu0 %v3639
        %v3742 = vpop.f32.mrb[0].mxu0
        %v3743 = vadd.f32 %v3614, %v3742
        %v3744 = vpop.f32.mrb[0].mxu0
        %3745 = vdwg.mxu0
        %v3746 = vld [vmem:[#allocation3 + $0x2] sm:$0xff]
        %v3747 = vld [vmem:[#allocation3 + $0x12] sm:$0xff]
        %v3748 = vld [vmem:[#allocation3 + $0x22] sm:$0xff]
        %v3749 = vld [vmem:[#allocation3 + $0x32] sm:$0xff]
        %v3750 = vld [vmem:[#allocation3 + $0x42] sm:$0xff]
        %v3751 = vld [vmem:[#allocation3 + $0x52] sm:$0xff]
        %v3752 = vld [vmem:[#allocation3 + $0x62] sm:$0xff]
        %v3753 = vld [vmem:[#allocation3 + $0x72] sm:$0xff]
        %s3754 = scalar_lea.vmem %s9, 64
        %v3755 = vld [vmem:[%s3754] sm:$0xff]
        %v3756 = vld [vmem:[%s3754 + $0x8] sm:$0xff]
        %v3757 = vld [vmem:[%s3754 + $0x10] sm:$0xff]
        %v3758 = vld [vmem:[%s3754 + $0x18] sm:$0xff]
        %v3760 = vsel %vm520, %v3746, 0
        %v3763 = vsel %vm520, %v3747, 0
        %v3766 = vsel %vm520, %v3748, 0
        %v3769 = vsel %vm520, %v3749, 0
        %v3772 = vsel %vm520, %v3750, 0
        %v3775 = vsel %vm520, %v3751, 0
        %v3778 = vsel %vm520, %v3752, 0
        %v3781 = vsel %vm520, %v3753, 0
        %3783 = vmatprep.subr.mxu0 0.0
        %3784 = vmatpush1.msra.mxu0 %v3755
        %3785 = vmatprep.subr.mxu0 0.0
        %3786 = vmatpush1.msra.mxu0 %v3756
        %3787 = vmatprep.subr.mxu0 0.0
        %3788 = vmatpush1.msra.mxu0 %v3757
        %3789 = vmatprep.subr.mxu0 0.0
        %3790 = vmatpush1.msra.mxu0 %v3758
        %3791 = vmatprep.subr.mxu0 0.0
        %3792 = vmatpush1.msra.mxu0 0.0
        %3793 = vmatprep.subr.mxu0 0.0
        %3794 = vmatpush1.msra.mxu0 0.0
        %3795 = vmatprep.subr.mxu0 0.0
        %3796 = vmatpush1.msra.mxu0 0.0
        %3797 = vmatprep.subr.mxu0 0.0
        %3798 = vmatpush1.msra.mxu0 0.0
        %3799 = vmatprep.subr.mxu0 0.0
        %3800 = vmatpush1.msra.mxu0 0.0
        %3801 = vmatprep.subr.mxu0 0.0
        %3802 = vmatpush1.msra.mxu0 0.0
        %3803 = vmatprep.subr.mxu0 0.0
        %3804 = vmatpush1.msra.mxu0 0.0
        %3805 = vmatprep.subr.mxu0 0.0
        %3806 = vmatpush1.msra.mxu0 0.0
        %3807 = vmatprep.subr.mxu0 0.0
        %3808 = vmatpush1.msra.mxu0 0.0
        %3809 = vmatprep.subr.mxu0 0.0
        %3810 = vmatpush1.msra.mxu0 0.0
        %3811 = vmatprep.subr.mxu0 0.0
        %3812 = vmatpush1.msra.mxu0 0.0
        %3813 = vmatprep.subr.mxu0 0.0
        %3814 = vmatpush1.msra.mxu0 0.0
        %3815 = vmatprep.subr.mxu0 0.0
        %3816 = vmatpush1.msra.mxu0 0.0
        %3817 = vmatprep.subr.mxu0 0.0
        %3818 = vmatpush1.msra.mxu0 0.0
        %3819 = vmatprep.subr.mxu0 0.0
        %3820 = vmatpush1.msra.mxu0 0.0
        %3821 = vmatprep.subr.mxu0 0.0
        %3822 = vmatpush1.msra.mxu0 0.0
        %3823 = vmatprep.subr.mxu0 0.0
        %3824 = vmatpush1.msra.mxu0 0.0
        %3825 = vmatprep.subr.mxu0 0.0
        %3826 = vmatpush1.msra.mxu0 0.0
        %3827 = vmatprep.subr.mxu0 0.0
        %3828 = vmatpush1.msra.mxu0 0.0
        %3829 = vmatprep.subr.mxu0 0.0
        %3830 = vmatpush1.msra.mxu0 0.0
        %3831 = vmatprep.subr.mxu0 0.0
        %3832 = vmatpush1.msra.mxu0 0.0
        %3833 = vmatprep.subr.mxu0 0.0
        %3834 = vmatpush1.msra.mxu0 0.0
        %3835 = vmatprep.subr.mxu0 0.0
        %3836 = vmatpush1.msra.mxu0 0.0
        %3837 = vmatprep.subr.mxu0 0.0
        %3838 = vmatpush1.msra.mxu0 0.0
        %3839 = vmatprep.subr.mxu0 0.0
        %3840 = vmatpush1.msra.mxu0 0.0
        %3841 = vmatprep.subr.mxu0 0.0
        %3842 = vmatpush1.msra.mxu0 0.0
        %3843 = vmatprep.subr.mxu0 0.0
        %3844 = vmatpush1.msra.mxu0 0.0
        %3845 = vmatprep.subr.mxu0 0.0
        %3846 = vmatpush1.msra.mxu0 0.0
        %3847 = vmatprep.mubr.f32.mxu0 0.0
        %3848 = vmatmul.mubr.f32.gmra.mrb[0].mxu0 %v3760
        %v3849 = vpop.f32.mrb[0].mxu0
        %v3850 = vadd.f32 0.0, %v3849
        %v3851 = vpop.f32.mrb[0].mxu0
        %3852 = vmatprep.mubr.f32.mxu0 0.0
        %3853 = vmatmul.mubr.f32.gmra.mrb[0].mxu0 %v3763
        %v3854 = vpop.f32.mrb[0].mxu0
        %v3855 = vadd.f32 0.0, %v3854
        %v3856 = vpop.f32.mrb[0].mxu0
        %3857 = vmatprep.mubr.f32.mxu0 0.0
        %3858 = vmatmul.mubr.f32.gmra.mrb[0].mxu0 %v3766
        %v3859 = vpop.f32.mrb[0].mxu0
        %v3860 = vadd.f32 0.0, %v3859
        %v3861 = vpop.f32.mrb[0].mxu0
        %3862 = vmatprep.mubr.f32.mxu0 0.0
        %3863 = vmatmul.mubr.f32.gmra.mrb[0].mxu0 %v3769
        %v3864 = vpop.f32.mrb[0].mxu0
        %v3865 = vadd.f32 0.0, %v3864
        %v3866 = vpop.f32.mrb[0].mxu0
        %3867 = vmatprep.mubr.f32.mxu0 0.0
        %3868 = vmatmul.mubr.f32.gmra.mrb[0].mxu0 %v3772
        %v3869 = vpop.f32.mrb[0].mxu0
        %v3870 = vadd.f32 0.0, %v3869
        %v3871 = vpop.f32.mrb[0].mxu0
        %3872 = vmatprep.mubr.f32.mxu0 0.0
        %3873 = vmatmul.mubr.f32.gmra.mrb[0].mxu0 %v3775
        %v3874 = vpop.f32.mrb[0].mxu0
        %v3875 = vadd.f32 0.0, %v3874
        %v3876 = vpop.f32.mrb[0].mxu0
        %3877 = vmatprep.mubr.f32.mxu0 0.0
        %3878 = vmatmul.mubr.f32.gmra.mrb[0].mxu0 %v3778
        %v3879 = vpop.f32.mrb[0].mxu0
        %v3880 = vadd.f32 0.0, %v3879
        %v3881 = vpop.f32.mrb[0].mxu0
        %3882 = vmatprep.mubr.f32.mxu0 0.0
        %3883 = vmatmul.mubr.f32.gmra.mrb[0].mxu0 %v3781
        %v3884 = vpop.f32.mrb[0].mxu0
        %v3885 = vadd.f32 0.0, %v3884
        %v3886 = vpop.f32.mrb[0].mxu0
        %3887 = vdwg.mxu0
        %v3888 = vadd.f32 %v3708, %v3850
        %v3889 = vadd.f32 %v3713, %v3855
        %v3890 = vadd.f32 %v3718, %v3860
        %v3891 = vadd.f32 %v3723, %v3865
        %v3892 = vadd.f32 %v3728, %v3870
        %v3893 = vadd.f32 %v3733, %v3875
        %v3894 = vadd.f32 %v3738, %v3880
        %v3895 = vadd.f32 %v3743, %v3885
        %v3896 = vld [vmem:[%s3454] sm:$0xff]
        %v3897 = vld [vmem:[%s3454 + $0x10] sm:$0xff]
        %v3898 = vld [vmem:[%s3454 + $0x20] sm:$0xff]
        %v3899 = vld [vmem:[%s3454 + $0x30] sm:$0xff]
        %v3900 = vld [vmem:[%s3454 + $0x40] sm:$0xff]
        %v3901 = vld [vmem:[%s3454 + $0x50] sm:$0xff]
        %v3902 = vld [vmem:[%s3454 + $0x60] sm:$0xff]
        %v3903 = vld [vmem:[%s3454 + $0x70] sm:$0xff]
        %s3904 = scalar_lea.vmem %s9, 96
        %v3905 = vld [vmem:[%s3904] sm:$0xff]
        %v3906 = vld [vmem:[%s3904 + $0x8] sm:$0xff]
        %v3907 = vld [vmem:[%s3904 + $0x10] sm:$0xff]
        %v3908 = vld [vmem:[%s3904 + $0x18] sm:$0xff]
        %v3910 = vsel %vm520, %v3896, 0
        %v3913 = vsel %vm520, %v3897, 0
        %v3916 = vsel %vm520, %v3898, 0
        %v3919 = vsel %vm520, %v3899, 0
        %v3922 = vsel %vm520, %v3900, 0
        %v3925 = vsel %vm520, %v3901, 0
        %v3928 = vsel %vm520, %v3902, 0
        %v3931 = vsel %vm520, %v3903, 0
        %3933 = vmatprep.subr.mxu0 0.0
        %3934 = vmatpush1.msra.mxu0 %v3905
        %3935 = vmatprep.subr.mxu0 0.0
        %3936 = vmatpush1.msra.mxu0 %v3906
        %3937 = vmatprep.subr.mxu0 0.0
        %3938 = vmatpush1.msra.mxu0 %v3907
        %3939 = vmatprep.subr.mxu0 0.0
        %3940 = vmatpush1.msra.mxu0 %v3908
        %3941 = vmatprep.subr.mxu0 0.0
        %3942 = vmatpush1.msra.mxu0 0.0
        %3943 = vmatprep.subr.mxu0 0.0
        %3944 = vmatpush1.msra.mxu0 0.0
        %3945 = vmatprep.subr.mxu0 0.0
        %3946 = vmatpush1.msra.mxu0 0.0
        %3947 = vmatprep.subr.mxu0 0.0
        %3948 = vmatpush1.msra.mxu0 0.0
        %3949 = vmatprep.subr.mxu0 0.0
        %3950 = vmatpush1.msra.mxu0 0.0
        %3951 = vmatprep.subr.mxu0 0.0
        %3952 = vmatpush1.msra.mxu0 0.0
        %3953 = vmatprep.subr.mxu0 0.0
        %3954 = vmatpush1.msra.mxu0 0.0
        %3955 = vmatprep.subr.mxu0 0.0
        %3956 = vmatpush1.msra.mxu0 0.0
        %3957 = vmatprep.subr.mxu0 0.0
        %3958 = vmatpush1.msra.mxu0 0.0
        %3959 = vmatprep.subr.mxu0 0.0
        %3960 = vmatpush1.msra.mxu0 0.0
        %3961 = vmatprep.subr.mxu0 0.0
        %3962 = vmatpush1.msra.mxu0 0.0
        %3963 = vmatprep.subr.mxu0 0.0
        %3964 = vmatpush1.msra.mxu0 0.0
        %3965 = vmatprep.subr.mxu0 0.0
        %3966 = vmatpush1.msra.mxu0 0.0
        %3967 = vmatprep.subr.mxu0 0.0
        %3968 = vmatpush1.msra.mxu0 0.0
        %3969 = vmatprep.subr.mxu0 0.0
        %3970 = vmatpush1.msra.mxu0 0.0
        %3971 = vmatprep.subr.mxu0 0.0
        %3972 = vmatpush1.msra.mxu0 0.0
        %3973 = vmatprep.subr.mxu0 0.0
        %3974 = vmatpush1.msra.mxu0 0.0
        %3975 = vmatprep.subr.mxu0 0.0
        %3976 = vmatpush1.msra.mxu0 0.0
        %3977 = vmatprep.subr.mxu0 0.0
        %3978 = vmatpush1.msra.mxu0 0.0
        %3979 = vmatprep.subr.mxu0 0.0
        %3980 = vmatpush1.msra.mxu0 0.0
        %3981 = vmatprep.subr.mxu0 0.0
        %3982 = vmatpush1.msra.mxu0 0.0
        %3983 = vmatprep.subr.mxu0 0.0
        %3984 = vmatpush1.msra.mxu0 0.0
        %3985 = vmatprep.subr.mxu0 0.0
        %3986 = vmatpush1.msra.mxu0 0.0
        %3987 = vmatprep.subr.mxu0 0.0
        %3988 = vmatpush1.msra.mxu0 0.0
        %3989 = vmatprep.subr.mxu0 0.0
        %3990 = vmatpush1.msra.mxu0 0.0
        %3991 = vmatprep.subr.mxu0 0.0
        %3992 = vmatpush1.msra.mxu0 0.0
        %3993 = vmatprep.subr.mxu0 0.0
        %3994 = vmatpush1.msra.mxu0 0.0
        %3995 = vmatprep.subr.mxu0 0.0
        %3996 = vmatpush1.msra.mxu0 0.0
        %3997 = vmatprep.mubr.f32.mxu0 0.0
        %3998 = vmatmul.mubr.f32.gmra.mrb[0].mxu0 %v3910
        %v3999 = vpop.f32.mrb[0].mxu0
        %v4000 = vadd.f32 0.0, %v3999
        %v4001 = vpop.f32.mrb[0].mxu0
        %4002 = vmatprep.mubr.f32.mxu0 0.0
        %4003 = vmatmul.mubr.f32.gmra.mrb[0].mxu0 %v3913
        %v4004 = vpop.f32.mrb[0].mxu0
        %v4005 = vadd.f32 0.0, %v4004
        %v4006 = vpop.f32.mrb[0].mxu0
        %4007 = vmatprep.mubr.f32.mxu0 0.0
        %4008 = vmatmul.mubr.f32.gmra.mrb[0].mxu0 %v3916
        %v4009 = vpop.f32.mrb[0].mxu0
        %v4010 = vadd.f32 0.0, %v4009
        %v4011 = vpop.f32.mrb[0].mxu0
        %4012 = vmatprep.mubr.f32.mxu0 0.0
        %4013 = vmatmul.mubr.f32.gmra.mrb[0].mxu0 %v3919
        %v4014 = vpop.f32.mrb[0].mxu0
        %v4015 = vadd.f32 0.0, %v4014
        %v4016 = vpop.f32.mrb[0].mxu0
        %4017 = vmatprep.mubr.f32.mxu0 0.0
        %4018 = vmatmul.mubr.f32.gmra.mrb[0].mxu0 %v3922
        %v4019 = vpop.f32.mrb[0].mxu0
        %v4020 = vadd.f32 0.0, %v4019
        %v4021 = vpop.f32.mrb[0].mxu0
        %4022 = vmatprep.mubr.f32.mxu0 0.0
        %4023 = vmatmul.mubr.f32.gmra.mrb[0].mxu0 %v3925
        %v4024 = vpop.f32.mrb[0].mxu0
        %v4025 = vadd.f32 0.0, %v4024
        %v4026 = vpop.f32.mrb[0].mxu0
        %4027 = vmatprep.mubr.f32.mxu0 0.0
        %4028 = vmatmul.mubr.f32.gmra.mrb[0].mxu0 %v3928
        %v4029 = vpop.f32.mrb[0].mxu0
        %v4030 = vadd.f32 0.0, %v4029
        %v4031 = vpop.f32.mrb[0].mxu0
        %4032 = vmatprep.mubr.f32.mxu0 0.0
        %4033 = vmatmul.mubr.f32.gmra.mrb[0].mxu0 %v3931
        %v4034 = vpop.f32.mrb[0].mxu0
        %v4035 = vadd.f32 0.0, %v4034
        %v4036 = vpop.f32.mrb[0].mxu0
        %4037 = vdwg.mxu0
        %v4038 = vadd.f32 %v3888, %v4000
        %v4039 = vadd.f32 %v3889, %v4005
        %v4040 = vadd.f32 %v3890, %v4010
        %v4041 = vadd.f32 %v3891, %v4015
        %v4042 = vadd.f32 %v3892, %v4020
        %v4043 = vadd.f32 %v3893, %v4025
        %v4044 = vadd.f32 %v3894, %v4030
        %v4045 = vadd.f32 %v3895, %v4035
        %v4046 = vld [vmem:[%s3454 + $0x1] sm:$0xff]
        %v4047 = vld [vmem:[%s3454 + $0x11] sm:$0xff]
        %v4048 = vld [vmem:[%s3454 + $0x21] sm:$0xff]
        %v4049 = vld [vmem:[%s3454 + $0x31] sm:$0xff]
        %v4050 = vld [vmem:[%s3454 + $0x41] sm:$0xff]
        %v4051 = vld [vmem:[%s3454 + $0x51] sm:$0xff]
        %v4052 = vld [vmem:[%s3454 + $0x61] sm:$0xff]
        %v4053 = vld [vmem:[%s3454 + $0x71] sm:$0xff]
        %s4054 = scalar_lea.vmem %s9, 128
        %v4055 = vld [vmem:[%s4054] sm:$0xff]
        %v4056 = vld [vmem:[%s4054 + $0x8] sm:$0xff]
        %v4057 = vld [vmem:[%s4054 + $0x10] sm:$0xff]
        %v4058 = vld [vmem:[%s4054 + $0x18] sm:$0xff]
        %v4060 = vsel %vm520, %v4046, 0
        %v4063 = vsel %vm520, %v4047, 0
        %v4066 = vsel %vm520, %v4048, 0
        %v4069 = vsel %vm520, %v4049, 0
        %v4072 = vsel %vm520, %v4050, 0
        %v4075 = vsel %vm520, %v4051, 0
        %v4078 = vsel %vm520, %v4052, 0
        %v4081 = vsel %vm520, %v4053, 0
        %4083 = vmatprep.subr.mxu0 0.0
        %4084 = vmatpush1.msra.mxu0 %v4055
        %4085 = vmatprep.subr.mxu0 0.0
        %4086 = vmatpush1.msra.mxu0 %v4056
        %4087 = vmatprep.subr.mxu0 0.0
        %4088 = vmatpush1.msra.mxu0 %v4057
        %4089 = vmatprep.subr.mxu0 0.0
        %4090 = vmatpush1.msra.mxu0 %v4058
        %4091 = vmatprep.subr.mxu0 0.0
        %4092 = vmatpush1.msra.mxu0 0.0
        %4093 = vmatprep.subr.mxu0 0.0
        %4094 = vmatpush1.msra.mxu0 0.0
        %4095 = vmatprep.subr.mxu0 0.0
        %4096 = vmatpush1.msra.mxu0 0.0
        %4097 = vmatprep.subr.mxu0 0.0
        %4098 = vmatpush1.msra.mxu0 0.0
        %4099 = vmatprep.subr.mxu0 0.0
        %4100 = vmatpush1.msra.mxu0 0.0
        %4101 = vmatprep.subr.mxu0 0.0
        %4102 = vmatpush1.msra.mxu0 0.0
        %4103 = vmatprep.subr.mxu0 0.0
        %4104 = vmatpush1.msra.mxu0 0.0
        %4105 = vmatprep.subr.mxu0 0.0
        %4106 = vmatpush1.msra.mxu0 0.0
        %4107 = vmatprep.subr.mxu0 0.0
        %4108 = vmatpush1.msra.mxu0 0.0
        %4109 = vmatprep.subr.mxu0 0.0
        %4110 = vmatpush1.msra.mxu0 0.0
        %4111 = vmatprep.subr.mxu0 0.0
        %4112 = vmatpush1.msra.mxu0 0.0
        %4113 = vmatprep.subr.mxu0 0.0
        %4114 = vmatpush1.msra.mxu0 0.0
        %4115 = vmatprep.subr.mxu0 0.0
        %4116 = vmatpush1.msra.mxu0 0.0
        %4117 = vmatprep.subr.mxu0 0.0
        %4118 = vmatpush1.msra.mxu0 0.0
        %4119 = vmatprep.subr.mxu0 0.0
        %4120 = vmatpush1.msra.mxu0 0.0
        %4121 = vmatprep.subr.mxu0 0.0
        %4122 = vmatpush1.msra.mxu0 0.0
        %4123 = vmatprep.subr.mxu0 0.0
        %4124 = vmatpush1.msra.mxu0 0.0
        %4125 = vmatprep.subr.mxu0 0.0
        %4126 = vmatpush1.msra.mxu0 0.0
        %4127 = vmatprep.subr.mxu0 0.0
        %4128 = vmatpush1.msra.mxu0 0.0
        %4129 = vmatprep.subr.mxu0 0.0
        %4130 = vmatpush1.msra.mxu0 0.0
        %4131 = vmatprep.subr.mxu0 0.0
        %4132 = vmatpush1.msra.mxu0 0.0
        %4133 = vmatprep.subr.mxu0 0.0
        %4134 = vmatpush1.msra.mxu0 0.0
        %4135 = vmatprep.subr.mxu0 0.0
        %4136 = vmatpush1.msra.mxu0 0.0
        %4137 = vmatprep.subr.mxu0 0.0
        %4138 = vmatpush1.msra.mxu0 0.0
        %4139 = vmatprep.subr.mxu0 0.0
        %4140 = vmatpush1.msra.mxu0 0.0
        %4141 = vmatprep.subr.mxu0 0.0
        %4142 = vmatpush1.msra.mxu0 0.0
        %4143 = vmatprep.subr.mxu0 0.0
        %4144 = vmatpush1.msra.mxu0 0.0
        %4145 = vmatprep.subr.mxu0 0.0
        %4146 = vmatpush1.msra.mxu0 0.0
        %4147 = vmatprep.mubr.f32.mxu0 0.0
        %4148 = vmatmul.mubr.f32.gmra.mrb[0].mxu0 %v4060
        %v4149 = vpop.f32.mrb[0].mxu0
        %v4150 = vadd.f32 0.0, %v4149
        %v4151 = vpop.f32.mrb[0].mxu0
        %4152 = vmatprep.mubr.f32.mxu0 0.0
        %4153 = vmatmul.mubr.f32.gmra.mrb[0].mxu0 %v4063
        %v4154 = vpop.f32.mrb[0].mxu0
        %v4155 = vadd.f32 0.0, %v4154
        %v4156 = vpop.f32.mrb[0].mxu0
        %4157 = vmatprep.mubr.f32.mxu0 0.0
        %4158 = vmatmul.mubr.f32.gmra.mrb[0].mxu0 %v4066
        %v4159 = vpop.f32.mrb[0].mxu0
        %v4160 = vadd.f32 0.0, %v4159
        %v4161 = vpop.f32.mrb[0].mxu0
        %4162 = vmatprep.mubr.f32.mxu0 0.0
        %4163 = vmatmul.mubr.f32.gmra.mrb[0].mxu0 %v4069
        %v4164 = vpop.f32.mrb[0].mxu0
        %v4165 = vadd.f32 0.0, %v4164
        %v4166 = vpop.f32.mrb[0].mxu0
        %4167 = vmatprep.mubr.f32.mxu0 0.0
        %4168 = vmatmul.mubr.f32.gmra.mrb[0].mxu0 %v4072
        %v4169 = vpop.f32.mrb[0].mxu0
        %v4170 = vadd.f32 0.0, %v4169
        %v4171 = vpop.f32.mrb[0].mxu0
        %4172 = vmatprep.mubr.f32.mxu0 0.0
        %4173 = vmatmul.mubr.f32.gmra.mrb[0].mxu0 %v4075
        %v4174 = vpop.f32.mrb[0].mxu0
        %v4175 = vadd.f32 0.0, %v4174
        %v4176 = vpop.f32.mrb[0].mxu0
        %4177 = vmatprep.mubr.f32.mxu0 0.0
        %4178 = vmatmul.mubr.f32.gmra.mrb[0].mxu0 %v4078
        %v4179 = vpop.f32.mrb[0].mxu0
        %v4180 = vadd.f32 0.0, %v4179
        %v4181 = vpop.f32.mrb[0].mxu0
        %4182 = vmatprep.mubr.f32.mxu0 0.0
        %4183 = vmatmul.mubr.f32.gmra.mrb[0].mxu0 %v4081
        %v4184 = vpop.f32.mrb[0].mxu0
        %v4185 = vadd.f32 0.0, %v4184
        %v4186 = vpop.f32.mrb[0].mxu0
        %4187 = vdwg.mxu0
        %v4188 = vadd.f32 %v4038, %v4150
        %v4189 = vadd.f32 %v4039, %v4155
        %v4190 = vadd.f32 %v4040, %v4160
        %v4191 = vadd.f32 %v4041, %v4165
        %v4192 = vadd.f32 %v4042, %v4170
        %v4193 = vadd.f32 %v4043, %v4175
        %v4194 = vadd.f32 %v4044, %v4180
        %v4195 = vadd.f32 %v4045, %v4185
        %v4196 = vld [vmem:[%s3454 + $0x2] sm:$0xff]
        %v4197 = vld [vmem:[%s3454 + $0x12] sm:$0xff]
        %v4198 = vld [vmem:[%s3454 + $0x22] sm:$0xff]
        %v4199 = vld [vmem:[%s3454 + $0x32] sm:$0xff]
        %v4200 = vld [vmem:[%s3454 + $0x42] sm:$0xff]
        %v4201 = vld [vmem:[%s3454 + $0x52] sm:$0xff]
        %v4202 = vld [vmem:[%s3454 + $0x62] sm:$0xff]
        %v4203 = vld [vmem:[%s3454 + $0x72] sm:$0xff]
        %s4204 = scalar_lea.vmem %s9, 160
        %v4205 = vld [vmem:[%s4204] sm:$0xff]
        %v4206 = vld [vmem:[%s4204 + $0x8] sm:$0xff]
        %v4207 = vld [vmem:[%s4204 + $0x10] sm:$0xff]
        %v4208 = vld [vmem:[%s4204 + $0x18] sm:$0xff]
        %v4210 = vsel %vm520, %v4196, 0
        %v4213 = vsel %vm520, %v4197, 0
        %v4216 = vsel %vm520, %v4198, 0
        %v4219 = vsel %vm520, %v4199, 0
        %v4222 = vsel %vm520, %v4200, 0
        %v4225 = vsel %vm520, %v4201, 0
        %v4228 = vsel %vm520, %v4202, 0
        %v4231 = vsel %vm520, %v4203, 0
        %4233 = vmatprep.subr.mxu0 0.0
        %4234 = vmatpush1.msra.mxu0 %v4205
        %4235 = vmatprep.subr.mxu0 0.0
        %4236 = vmatpush1.msra.mxu0 %v4206
        %4237 = vmatprep.subr.mxu0 0.0
        %4238 = vmatpush1.msra.mxu0 %v4207
        %4239 = vmatprep.subr.mxu0 0.0
        %4240 = vmatpush1.msra.mxu0 %v4208
        %4241 = vmatprep.subr.mxu0 0.0
        %4242 = vmatpush1.msra.mxu0 0.0
        %4243 = vmatprep.subr.mxu0 0.0
        %4244 = vmatpush1.msra.mxu0 0.0
        %4245 = vmatprep.subr.mxu0 0.0
        %4246 = vmatpush1.msra.mxu0 0.0
        %4247 = vmatprep.subr.mxu0 0.0
        %4248 = vmatpush1.msra.mxu0 0.0
        %4249 = vmatprep.subr.mxu0 0.0
        %4250 = vmatpush1.msra.mxu0 0.0
        %4251 = vmatprep.subr.mxu0 0.0
        %4252 = vmatpush1.msra.mxu0 0.0
        %4253 = vmatprep.subr.mxu0 0.0
        %4254 = vmatpush1.msra.mxu0 0.0
        %4255 = vmatprep.subr.mxu0 0.0
        %4256 = vmatpush1.msra.mxu0 0.0
        %4257 = vmatprep.subr.mxu0 0.0
        %4258 = vmatpush1.msra.mxu0 0.0
        %4259 = vmatprep.subr.mxu0 0.0
        %4260 = vmatpush1.msra.mxu0 0.0
        %4261 = vmatprep.subr.mxu0 0.0
        %4262 = vmatpush1.msra.mxu0 0.0
        %4263 = vmatprep.subr.mxu0 0.0
        %4264 = vmatpush1.msra.mxu0 0.0
        %4265 = vmatprep.subr.mxu0 0.0
        %4266 = vmatpush1.msra.mxu0 0.0
        %4267 = vmatprep.subr.mxu0 0.0
        %4268 = vmatpush1.msra.mxu0 0.0
        %4269 = vmatprep.subr.mxu0 0.0
        %4270 = vmatpush1.msra.mxu0 0.0
        %4271 = vmatprep.subr.mxu0 0.0
        %4272 = vmatpush1.msra.mxu0 0.0
        %4273 = vmatprep.subr.mxu0 0.0
        %4274 = vmatpush1.msra.mxu0 0.0
        %4275 = vmatprep.subr.mxu0 0.0
        %4276 = vmatpush1.msra.mxu0 0.0
        %4277 = vmatprep.subr.mxu0 0.0
        %4278 = vmatpush1.msra.mxu0 0.0
        %4279 = vmatprep.subr.mxu0 0.0
        %4280 = vmatpush1.msra.mxu0 0.0
        %4281 = vmatprep.subr.mxu0 0.0
        %4282 = vmatpush1.msra.mxu0 0.0
        %4283 = vmatprep.subr.mxu0 0.0
        %4284 = vmatpush1.msra.mxu0 0.0
        %4285 = vmatprep.subr.mxu0 0.0
        %4286 = vmatpush1.msra.mxu0 0.0
        %4287 = vmatprep.subr.mxu0 0.0
        %4288 = vmatpush1.msra.mxu0 0.0
        %4289 = vmatprep.subr.mxu0 0.0
        %4290 = vmatpush1.msra.mxu0 0.0
        %4291 = vmatprep.subr.mxu0 0.0
        %4292 = vmatpush1.msra.mxu0 0.0
        %4293 = vmatprep.subr.mxu0 0.0
        %4294 = vmatpush1.msra.mxu0 0.0
        %4295 = vmatprep.subr.mxu0 0.0
        %4296 = vmatpush1.msra.mxu0 0.0
        %4297 = vmatprep.mubr.f32.mxu0 0.0
        %4298 = vmatmul.mubr.f32.gmra.mrb[0].mxu0 %v4210
        %v4299 = vpop.f32.mrb[0].mxu0
        %v4300 = vadd.f32 0.0, %v4299
        %v4301 = vpop.f32.mrb[0].mxu0
        %4302 = vmatprep.mubr.f32.mxu0 0.0
        %4303 = vmatmul.mubr.f32.gmra.mrb[0].mxu0 %v4213
        %v4304 = vpop.f32.mrb[0].mxu0
        %v4305 = vadd.f32 0.0, %v4304
        %v4306 = vpop.f32.mrb[0].mxu0
        %4307 = vmatprep.mubr.f32.mxu0 0.0
        %4308 = vmatmul.mubr.f32.gmra.mrb[0].mxu0 %v4216
        %v4309 = vpop.f32.mrb[0].mxu0
        %v4310 = vadd.f32 0.0, %v4309
        %v4311 = vpop.f32.mrb[0].mxu0
        %4312 = vmatprep.mubr.f32.mxu0 0.0
        %4313 = vmatmul.mubr.f32.gmra.mrb[0].mxu0 %v4219
        %v4314 = vpop.f32.mrb[0].mxu0
        %v4315 = vadd.f32 0.0, %v4314
        %v4316 = vpop.f32.mrb[0].mxu0
        %4317 = vmatprep.mubr.f32.mxu0 0.0
        %4318 = vmatmul.mubr.f32.gmra.mrb[0].mxu0 %v4222
        %v4319 = vpop.f32.mrb[0].mxu0
        %v4320 = vadd.f32 0.0, %v4319
        %v4321 = vpop.f32.mrb[0].mxu0
        %4322 = vmatprep.mubr.f32.mxu0 0.0
        %4323 = vmatmul.mubr.f32.gmra.mrb[0].mxu0 %v4225
        %v4324 = vpop.f32.mrb[0].mxu0
        %v4325 = vadd.f32 0.0, %v4324
        %v4326 = vpop.f32.mrb[0].mxu0
        %4327 = vmatprep.mubr.f32.mxu0 0.0
        %4328 = vmatmul.mubr.f32.gmra.mrb[0].mxu0 %v4228
        %v4329 = vpop.f32.mrb[0].mxu0
        %v4330 = vadd.f32 0.0, %v4329
        %v4331 = vpop.f32.mrb[0].mxu0
        %4332 = vmatprep.mubr.f32.mxu0 0.0
        %4333 = vmatmul.mubr.f32.gmra.mrb[0].mxu0 %v4231
        %v4334 = vpop.f32.mrb[0].mxu0
        %v4335 = vadd.f32 0.0, %v4334
        %v4336 = vpop.f32.mrb[0].mxu0
        %4337 = vdwg.mxu0
        %v4338 = vadd.f32 %v4188, %v4300
        %v4339 = vadd.f32 %v4189, %v4305
        %v4340 = vadd.f32 %v4190, %v4310
        %v4341 = vadd.f32 %v4191, %v4315
        %v4342 = vadd.f32 %v4192, %v4320
        %v4343 = vadd.f32 %v4193, %v4325
        %v4344 = vadd.f32 %v4194, %v4330
        %v4345 = vadd.f32 %v4195, %v4335
        %s4346 = scalar_lea.vmem [#allocation3], 32
        %v4347 = vld [vmem:[%s4346] sm:$0xff]
        %v4348 = vld [vmem:[%s4346 + $0x10] sm:$0xff]
        %v4349 = vld [vmem:[%s4346 + $0x20] sm:$0xff]
        %v4350 = vld [vmem:[%s4346 + $0x30] sm:$0xff]
        %v4351 = vld [vmem:[%s4346 + $0x40] sm:$0xff]
        %v4352 = vld [vmem:[%s4346 + $0x50] sm:$0xff]
        %v4353 = vld [vmem:[%s4346 + $0x60] sm:$0xff]
        %v4354 = vld [vmem:[%s4346 + $0x70] sm:$0xff]
        %s4355 = scalar_lea.vmem %s9, 192
        %v4356 = vld [vmem:[%s4355] sm:$0xff]
        %v4357 = vld [vmem:[%s4355 + $0x8] sm:$0xff]
        %v4358 = vld [vmem:[%s4355 + $0x10] sm:$0xff]
        %v4359 = vld [vmem:[%s4355 + $0x18] sm:$0xff]
        %v4361 = vsel %vm520, %v4347, 0
        %v4364 = vsel %vm520, %v4348, 0
        %v4367 = vsel %vm520, %v4349, 0
        %v4370 = vsel %vm520, %v4350, 0
        %v4373 = vsel %vm520, %v4351, 0
        %v4376 = vsel %vm520, %v4352, 0
        %v4379 = vsel %vm520, %v4353, 0
        %v4382 = vsel %vm520, %v4354, 0
        %4384 = vmatprep.subr.mxu0 0.0
        %4385 = vmatpush1.msra.mxu0 %v4356
        %4386 = vmatprep.subr.mxu0 0.0
        %4387 = vmatpush1.msra.mxu0 %v4357
        %4388 = vmatprep.subr.mxu0 0.0
        %4389 = vmatpush1.msra.mxu0 %v4358
        %4390 = vmatprep.subr.mxu0 0.0
        %4391 = vmatpush1.msra.mxu0 %v4359
        %4392 = vmatprep.subr.mxu0 0.0
        %4393 = vmatpush1.msra.mxu0 0.0
        %4394 = vmatprep.subr.mxu0 0.0
        %4395 = vmatpush1.msra.mxu0 0.0
        %4396 = vmatprep.subr.mxu0 0.0
        %4397 = vmatpush1.msra.mxu0 0.0
        %4398 = vmatprep.subr.mxu0 0.0
        %4399 = vmatpush1.msra.mxu0 0.0
        %4400 = vmatprep.subr.mxu0 0.0
        %4401 = vmatpush1.msra.mxu0 0.0
        %4402 = vmatprep.subr.mxu0 0.0
        %4403 = vmatpush1.msra.mxu0 0.0
        %4404 = vmatprep.subr.mxu0 0.0
        %4405 = vmatpush1.msra.mxu0 0.0
        %4406 = vmatprep.subr.mxu0 0.0
        %4407 = vmatpush1.msra.mxu0 0.0
        %4408 = vmatprep.subr.mxu0 0.0
        %4409 = vmatpush1.msra.mxu0 0.0
        %4410 = vmatprep.subr.mxu0 0.0
        %4411 = vmatpush1.msra.mxu0 0.0
        %4412 = vmatprep.subr.mxu0 0.0
        %4413 = vmatpush1.msra.mxu0 0.0
        %4414 = vmatprep.subr.mxu0 0.0
        %4415 = vmatpush1.msra.mxu0 0.0
        %4416 = vmatprep.subr.mxu0 0.0
        %4417 = vmatpush1.msra.mxu0 0.0
        %4418 = vmatprep.subr.mxu0 0.0
        %4419 = vmatpush1.msra.mxu0 0.0
        %4420 = vmatprep.subr.mxu0 0.0
        %4421 = vmatpush1.msra.mxu0 0.0
        %4422 = vmatprep.subr.mxu0 0.0
        %4423 = vmatpush1.msra.mxu0 0.0
        %4424 = vmatprep.subr.mxu0 0.0
        %4425 = vmatpush1.msra.mxu0 0.0
        %4426 = vmatprep.subr.mxu0 0.0
        %4427 = vmatpush1.msra.mxu0 0.0
        %4428 = vmatprep.subr.mxu0 0.0
        %4429 = vmatpush1.msra.mxu0 0.0
        %4430 = vmatprep.subr.mxu0 0.0
        %4431 = vmatpush1.msra.mxu0 0.0
        %4432 = vmatprep.subr.mxu0 0.0
        %4433 = vmatpush1.msra.mxu0 0.0
        %4434 = vmatprep.subr.mxu0 0.0
        %4435 = vmatpush1.msra.mxu0 0.0
        %4436 = vmatprep.subr.mxu0 0.0
        %4437 = vmatpush1.msra.mxu0 0.0
        %4438 = vmatprep.subr.mxu0 0.0
        %4439 = vmatpush1.msra.mxu0 0.0
        %4440 = vmatprep.subr.mxu0 0.0
        %4441 = vmatpush1.msra.mxu0 0.0
        %4442 = vmatprep.subr.mxu0 0.0
        %4443 = vmatpush1.msra.mxu0 0.0
        %4444 = vmatprep.subr.mxu0 0.0
        %4445 = vmatpush1.msra.mxu0 0.0
        %4446 = vmatprep.subr.mxu0 0.0
        %4447 = vmatpush1.msra.mxu0 0.0
        %4448 = vmatprep.mubr.f32.mxu0 0.0
        %4449 = vmatmul.mubr.f32.gmra.mrb[0].mxu0 %v4361
        %v4450 = vpop.f32.mrb[0].mxu0
        %v4451 = vadd.f32 0.0, %v4450
        %v4452 = vpop.f32.mrb[0].mxu0
        %4453 = vmatprep.mubr.f32.mxu0 0.0
        %4454 = vmatmul.mubr.f32.gmra.mrb[0].mxu0 %v4364
        %v4455 = vpop.f32.mrb[0].mxu0
        %v4456 = vadd.f32 0.0, %v4455
        %v4457 = vpop.f32.mrb[0].mxu0
        %4458 = vmatprep.mubr.f32.mxu0 0.0
        %4459 = vmatmul.mubr.f32.gmra.mrb[0].mxu0 %v4367
        %v4460 = vpop.f32.mrb[0].mxu0
        %v4461 = vadd.f32 0.0, %v4460
        %v4462 = vpop.f32.mrb[0].mxu0
        %4463 = vmatprep.mubr.f32.mxu0 0.0
        %4464 = vmatmul.mubr.f32.gmra.mrb[0].mxu0 %v4370
        %v4465 = vpop.f32.mrb[0].mxu0
        %v4466 = vadd.f32 0.0, %v4465
        %v4467 = vpop.f32.mrb[0].mxu0
        %4468 = vmatprep.mubr.f32.mxu0 0.0
        %4469 = vmatmul.mubr.f32.gmra.mrb[0].mxu0 %v4373
        %v4470 = vpop.f32.mrb[0].mxu0
        %v4471 = vadd.f32 0.0, %v4470
        %v4472 = vpop.f32.mrb[0].mxu0
        %4473 = vmatprep.mubr.f32.mxu0 0.0
        %4474 = vmatmul.mubr.f32.gmra.mrb[0].mxu0 %v4376
        %v4475 = vpop.f32.mrb[0].mxu0
        %v4476 = vadd.f32 0.0, %v4475
        %v4477 = vpop.f32.mrb[0].mxu0
        %4478 = vmatprep.mubr.f32.mxu0 0.0
        %4479 = vmatmul.mubr.f32.gmra.mrb[0].mxu0 %v4379
        %v4480 = vpop.f32.mrb[0].mxu0
        %v4481 = vadd.f32 0.0, %v4480
        %v4482 = vpop.f32.mrb[0].mxu0
        %4483 = vmatprep.mubr.f32.mxu0 0.0
        %4484 = vmatmul.mubr.f32.gmra.mrb[0].mxu0 %v4382
        %v4485 = vpop.f32.mrb[0].mxu0
        %v4486 = vadd.f32 0.0, %v4485
        %v4487 = vpop.f32.mrb[0].mxu0
        %4488 = vdwg.mxu0
        %v4489 = vadd.f32 %v4338, %v4451
        %v4490 = vadd.f32 %v4339, %v4456
        %v4491 = vadd.f32 %v4340, %v4461
        %v4492 = vadd.f32 %v4341, %v4466
        %v4493 = vadd.f32 %v4342, %v4471
        %v4494 = vadd.f32 %v4343, %v4476
        %v4495 = vadd.f32 %v4344, %v4481
        %v4496 = vadd.f32 %v4345, %v4486
        %v4497 = vld [vmem:[%s4346 + $0x1] sm:$0xff]
        %v4498 = vld [vmem:[%s4346 + $0x11] sm:$0xff]
        %v4499 = vld [vmem:[%s4346 + $0x21] sm:$0xff]
        %v4500 = vld [vmem:[%s4346 + $0x31] sm:$0xff]
        %v4501 = vld [vmem:[%s4346 + $0x41] sm:$0xff]
        %v4502 = vld [vmem:[%s4346 + $0x51] sm:$0xff]
        %v4503 = vld [vmem:[%s4346 + $0x61] sm:$0xff]
        %v4504 = vld [vmem:[%s4346 + $0x71] sm:$0xff]
        %s4505 = scalar_lea.vmem %s9, 224
        %v4506 = vld [vmem:[%s4505] sm:$0xff]
        %v4507 = vld [vmem:[%s4505 + $0x8] sm:$0xff]
        %v4508 = vld [vmem:[%s4505 + $0x10] sm:$0xff]
        %v4509 = vld [vmem:[%s4505 + $0x18] sm:$0xff]
        %v4511 = vsel %vm520, %v4497, 0
        %v4514 = vsel %vm520, %v4498, 0
        %v4517 = vsel %vm520, %v4499, 0
        %v4520 = vsel %vm520, %v4500, 0
        %v4523 = vsel %vm520, %v4501, 0
        %v4526 = vsel %vm520, %v4502, 0
        %v4529 = vsel %vm520, %v4503, 0
        %v4532 = vsel %vm520, %v4504, 0
        %4534 = vmatprep.subr.mxu0 0.0
        %4535 = vmatpush1.msra.mxu0 %v4506
        %4536 = vmatprep.subr.mxu0 0.0
        %4537 = vmatpush1.msra.mxu0 %v4507
        %4538 = vmatprep.subr.mxu0 0.0
        %4539 = vmatpush1.msra.mxu0 %v4508
        %4540 = vmatprep.subr.mxu0 0.0
        %4541 = vmatpush1.msra.mxu0 %v4509
        %4542 = vmatprep.subr.mxu0 0.0
        %4543 = vmatpush1.msra.mxu0 0.0
        %4544 = vmatprep.subr.mxu0 0.0
        %4545 = vmatpush1.msra.mxu0 0.0
        %4546 = vmatprep.subr.mxu0 0.0
        %4547 = vmatpush1.msra.mxu0 0.0
        %4548 = vmatprep.subr.mxu0 0.0
        %4549 = vmatpush1.msra.mxu0 0.0
        %4550 = vmatprep.subr.mxu0 0.0
        %4551 = vmatpush1.msra.mxu0 0.0
        %4552 = vmatprep.subr.mxu0 0.0
        %4553 = vmatpush1.msra.mxu0 0.0
        %4554 = vmatprep.subr.mxu0 0.0
        %4555 = vmatpush1.msra.mxu0 0.0
        %4556 = vmatprep.subr.mxu0 0.0
        %4557 = vmatpush1.msra.mxu0 0.0
        %4558 = vmatprep.subr.mxu0 0.0
        %4559 = vmatpush1.msra.mxu0 0.0
        %4560 = vmatprep.subr.mxu0 0.0
        %4561 = vmatpush1.msra.mxu0 0.0
        %4562 = vmatprep.subr.mxu0 0.0
        %4563 = vmatpush1.msra.mxu0 0.0
        %4564 = vmatprep.subr.mxu0 0.0
        %4565 = vmatpush1.msra.mxu0 0.0
        %4566 = vmatprep.subr.mxu0 0.0
        %4567 = vmatpush1.msra.mxu0 0.0
        %4568 = vmatprep.subr.mxu0 0.0
        %4569 = vmatpush1.msra.mxu0 0.0
        %4570 = vmatprep.subr.mxu0 0.0
        %4571 = vmatpush1.msra.mxu0 0.0
        %4572 = vmatprep.subr.mxu0 0.0
        %4573 = vmatpush1.msra.mxu0 0.0
        %4574 = vmatprep.subr.mxu0 0.0
        %4575 = vmatpush1.msra.mxu0 0.0
        %4576 = vmatprep.subr.mxu0 0.0
        %4577 = vmatpush1.msra.mxu0 0.0
        %4578 = vmatprep.subr.mxu0 0.0
        %4579 = vmatpush1.msra.mxu0 0.0
        %4580 = vmatprep.subr.mxu0 0.0
        %4581 = vmatpush1.msra.mxu0 0.0
        %4582 = vmatprep.subr.mxu0 0.0
        %4583 = vmatpush1.msra.mxu0 0.0
        %4584 = vmatprep.subr.mxu0 0.0
        %4585 = vmatpush1.msra.mxu0 0.0
        %4586 = vmatprep.subr.mxu0 0.0
        %4587 = vmatpush1.msra.mxu0 0.0
        %4588 = vmatprep.subr.mxu0 0.0
        %4589 = vmatpush1.msra.mxu0 0.0
        %4590 = vmatprep.subr.mxu0 0.0
        %4591 = vmatpush1.msra.mxu0 0.0
        %4592 = vmatprep.subr.mxu0 0.0
        %4593 = vmatpush1.msra.mxu0 0.0
        %4594 = vmatprep.subr.mxu0 0.0
        %4595 = vmatpush1.msra.mxu0 0.0
        %4596 = vmatprep.subr.mxu0 0.0
        %4597 = vmatpush1.msra.mxu0 0.0
        %4598 = vmatprep.mubr.f32.mxu0 0.0
        %4599 = vmatmul.mubr.f32.gmra.mrb[0].mxu0 %v4511
        %v4600 = vpop.f32.mrb[0].mxu0
        %v4601 = vadd.f32 0.0, %v4600
        %v4602 = vpop.f32.mrb[0].mxu0
        %4603 = vmatprep.mubr.f32.mxu0 0.0
        %4604 = vmatmul.mubr.f32.gmra.mrb[0].mxu0 %v4514
        %v4605 = vpop.f32.mrb[0].mxu0
        %v4606 = vadd.f32 0.0, %v4605
        %v4607 = vpop.f32.mrb[0].mxu0
        %4608 = vmatprep.mubr.f32.mxu0 0.0
        %4609 = vmatmul.mubr.f32.gmra.mrb[0].mxu0 %v4517
        %v4610 = vpop.f32.mrb[0].mxu0
        %v4611 = vadd.f32 0.0, %v4610
        %v4612 = vpop.f32.mrb[0].mxu0
        %4613 = vmatprep.mubr.f32.mxu0 0.0
        %4614 = vmatmul.mubr.f32.gmra.mrb[0].mxu0 %v4520
        %v4615 = vpop.f32.mrb[0].mxu0
        %v4616 = vadd.f32 0.0, %v4615
        %v4617 = vpop.f32.mrb[0].mxu0
        %4618 = vmatprep.mubr.f32.mxu0 0.0
        %4619 = vmatmul.mubr.f32.gmra.mrb[0].mxu0 %v4523
        %v4620 = vpop.f32.mrb[0].mxu0
        %v4621 = vadd.f32 0.0, %v4620
        %v4622 = vpop.f32.mrb[0].mxu0
        %4623 = vmatprep.mubr.f32.mxu0 0.0
        %4624 = vmatmul.mubr.f32.gmra.mrb[0].mxu0 %v4526
        %v4625 = vpop.f32.mrb[0].mxu0
        %v4626 = vadd.f32 0.0, %v4625
        %v4627 = vpop.f32.mrb[0].mxu0
        %4628 = vmatprep.mubr.f32.mxu0 0.0
        %4629 = vmatmul.mubr.f32.gmra.mrb[0].mxu0 %v4529
        %v4630 = vpop.f32.mrb[0].mxu0
        %v4631 = vadd.f32 0.0, %v4630
        %v4632 = vpop.f32.mrb[0].mxu0
        %4633 = vmatprep.mubr.f32.mxu0 0.0
        %4634 = vmatmul.mubr.f32.gmra.mrb[0].mxu0 %v4532
        %v4635 = vpop.f32.mrb[0].mxu0
        %v4636 = vadd.f32 0.0, %v4635
        %v4637 = vpop.f32.mrb[0].mxu0
        %4638 = vdwg.mxu0
        %v4639 = vadd.f32 %v4489, %v4601
        %v4640 = vadd.f32 %v4490, %v4606
        %v4641 = vadd.f32 %v4491, %v4611
        %v4642 = vadd.f32 %v4492, %v4616
        %v4643 = vadd.f32 %v4493, %v4621
        %v4644 = vadd.f32 %v4494, %v4626
        %v4645 = vadd.f32 %v4495, %v4631
        %v4646 = vadd.f32 %v4496, %v4636
        %v4647 = vld [vmem:[%s4346 + $0x2] sm:$0xff]
        %v4648 = vld [vmem:[%s4346 + $0x12] sm:$0xff]
        %v4649 = vld [vmem:[%s4346 + $0x22] sm:$0xff]
        %v4650 = vld [vmem:[%s4346 + $0x32] sm:$0xff]
        %v4651 = vld [vmem:[%s4346 + $0x42] sm:$0xff]
        %v4652 = vld [vmem:[%s4346 + $0x52] sm:$0xff]
        %v4653 = vld [vmem:[%s4346 + $0x62] sm:$0xff]
        %v4654 = vld [vmem:[%s4346 + $0x72] sm:$0xff]
        %s4655 = scalar_lea.vmem %s9, 256
        %v4656 = vld [vmem:[%s4655] sm:$0xff]
        %v4657 = vld [vmem:[%s4655 + $0x8] sm:$0xff]
        %v4658 = vld [vmem:[%s4655 + $0x10] sm:$0xff]
        %v4659 = vld [vmem:[%s4655 + $0x18] sm:$0xff]
        %v4661 = vsel %vm520, %v4647, 0
        %v4664 = vsel %vm520, %v4648, 0
        %v4667 = vsel %vm520, %v4649, 0
        %v4670 = vsel %vm520, %v4650, 0
        %v4673 = vsel %vm520, %v4651, 0
        %v4676 = vsel %vm520, %v4652, 0
        %v4679 = vsel %vm520, %v4653, 0
        %v4682 = vsel %vm520, %v4654, 0
        %4684 = vmatprep.subr.mxu0 0.0
        %4685 = vmatpush1.msra.mxu0 %v4656
        %4686 = vmatprep.subr.mxu0 0.0
        %4687 = vmatpush1.msra.mxu0 %v4657
        %4688 = vmatprep.subr.mxu0 0.0
        %4689 = vmatpush1.msra.mxu0 %v4658
        %4690 = vmatprep.subr.mxu0 0.0
        %4691 = vmatpush1.msra.mxu0 %v4659
        %4692 = vmatprep.subr.mxu0 0.0
        %4693 = vmatpush1.msra.mxu0 0.0
        %4694 = vmatprep.subr.mxu0 0.0
        %4695 = vmatpush1.msra.mxu0 0.0
        %4696 = vmatprep.subr.mxu0 0.0
        %4697 = vmatpush1.msra.mxu0 0.0
        %4698 = vmatprep.subr.mxu0 0.0
        %4699 = vmatpush1.msra.mxu0 0.0
        %4700 = vmatprep.subr.mxu0 0.0
        %4701 = vmatpush1.msra.mxu0 0.0
        %4702 = vmatprep.subr.mxu0 0.0
        %4703 = vmatpush1.msra.mxu0 0.0
        %4704 = vmatprep.subr.mxu0 0.0
        %4705 = vmatpush1.msra.mxu0 0.0
        %4706 = vmatprep.subr.mxu0 0.0
        %4707 = vmatpush1.msra.mxu0 0.0
        %4708 = vmatprep.subr.mxu0 0.0
        %4709 = vmatpush1.msra.mxu0 0.0
        %4710 = vmatprep.subr.mxu0 0.0
        %4711 = vmatpush1.msra.mxu0 0.0
        %4712 = vmatprep.subr.mxu0 0.0
        %4713 = vmatpush1.msra.mxu0 0.0
        %4714 = vmatprep.subr.mxu0 0.0
        %4715 = vmatpush1.msra.mxu0 0.0
        %4716 = vmatprep.subr.mxu0 0.0
        %4717 = vmatpush1.msra.mxu0 0.0
        %4718 = vmatprep.subr.mxu0 0.0
        %4719 = vmatpush1.msra.mxu0 0.0
        %4720 = vmatprep.subr.mxu0 0.0
        %4721 = vmatpush1.msra.mxu0 0.0
        %4722 = vmatprep.subr.mxu0 0.0
        %4723 = vmatpush1.msra.mxu0 0.0
        %4724 = vmatprep.subr.mxu0 0.0
        %4725 = vmatpush1.msra.mxu0 0.0
        %4726 = vmatprep.subr.mxu0 0.0
        %4727 = vmatpush1.msra.mxu0 0.0
        %4728 = vmatprep.subr.mxu0 0.0
        %4729 = vmatpush1.msra.mxu0 0.0
        %4730 = vmatprep.subr.mxu0 0.0
        %4731 = vmatpush1.msra.mxu0 0.0
        %4732 = vmatprep.subr.mxu0 0.0
        %4733 = vmatpush1.msra.mxu0 0.0
        %4734 = vmatprep.subr.mxu0 0.0
        %4735 = vmatpush1.msra.mxu0 0.0
        %4736 = vmatprep.subr.mxu0 0.0
        %4737 = vmatpush1.msra.mxu0 0.0
        %4738 = vmatprep.subr.mxu0 0.0
        %4739 = vmatpush1.msra.mxu0 0.0
        %4740 = vmatprep.subr.mxu0 0.0
        %4741 = vmatpush1.msra.mxu0 0.0
        %4742 = vmatprep.subr.mxu0 0.0
        %4743 = vmatpush1.msra.mxu0 0.0
        %4744 = vmatprep.subr.mxu0 0.0
        %4745 = vmatpush1.msra.mxu0 0.0
        %4746 = vmatprep.subr.mxu0 0.0
        %4747 = vmatpush1.msra.mxu0 0.0
        %4748 = vmatprep.mubr.f32.mxu0 0.0
        %4749 = vmatmul.mubr.f32.gmra.mrb[0].mxu0 %v4661
        %v4750 = vpop.f32.mrb[0].mxu0
        %v4751 = vadd.f32 0.0, %v4750
        %v4752 = vpop.f32.mrb[0].mxu0
        %4753 = vmatprep.mubr.f32.mxu0 0.0
        %4754 = vmatmul.mubr.f32.gmra.mrb[0].mxu0 %v4664
        %v4755 = vpop.f32.mrb[0].mxu0
        %v4756 = vadd.f32 0.0, %v4755
        %v4757 = vpop.f32.mrb[0].mxu0
        %4758 = vmatprep.mubr.f32.mxu0 0.0
        %4759 = vmatmul.mubr.f32.gmra.mrb[0].mxu0 %v4667
        %v4760 = vpop.f32.mrb[0].mxu0
        %v4761 = vadd.f32 0.0, %v4760
        %v4762 = vpop.f32.mrb[0].mxu0
        %4763 = vmatprep.mubr.f32.mxu0 0.0
        %4764 = vmatmul.mubr.f32.gmra.mrb[0].mxu0 %v4670
        %v4765 = vpop.f32.mrb[0].mxu0
        %v4766 = vadd.f32 0.0, %v4765
        %v4767 = vpop.f32.mrb[0].mxu0
        %4768 = vmatprep.mubr.f32.mxu0 0.0
        %4769 = vmatmul.mubr.f32.gmra.mrb[0].mxu0 %v4673
        %v4770 = vpop.f32.mrb[0].mxu0
        %v4771 = vadd.f32 0.0, %v4770
        %v4772 = vpop.f32.mrb[0].mxu0
        %4773 = vmatprep.mubr.f32.mxu0 0.0
        %4774 = vmatmul.mubr.f32.gmra.mrb[0].mxu0 %v4676
        %v4775 = vpop.f32.mrb[0].mxu0
        %v4776 = vadd.f32 0.0, %v4775
        %v4777 = vpop.f32.mrb[0].mxu0
        %4778 = vmatprep.mubr.f32.mxu0 0.0
        %4779 = vmatmul.mubr.f32.gmra.mrb[0].mxu0 %v4679
        %v4780 = vpop.f32.mrb[0].mxu0
        %v4781 = vadd.f32 0.0, %v4780
        %v4782 = vpop.f32.mrb[0].mxu0
        %4783 = vmatprep.mubr.f32.mxu0 0.0
        %4784 = vmatmul.mubr.f32.gmra.mrb[0].mxu0 %v4682
        %v4785 = vpop.f32.mrb[0].mxu0
        %v4786 = vadd.f32 0.0, %v4785
        %v4787 = vpop.f32.mrb[0].mxu0
        %4788 = vdwg.mxu0
        %v4789 = vadd.f32 %v4639, %v4751
        %v4790 = vadd.f32 %v4640, %v4756
        %v4791 = vadd.f32 %v4641, %v4761
        %v4792 = vadd.f32 %v4642, %v4766
        %v4793 = vadd.f32 %v4643, %v4771
        %v4794 = vadd.f32 %v4644, %v4776
        %v4795 = vadd.f32 %v4645, %v4781
        %v4796 = vadd.f32 %v4646, %v4786
        %v4797 = vld [vmem:[%s10] sm:$0x1]
        %v4799 = vlaneseq
        %v4800 = vshrl.u32 %v4799, 7
        %v4801 = vsub.s32 0, %v4800
        %v4802 = vrot.slane %v4797, %v4801
        %v4804 = vadd.f32 %v4789, %v4802
        %v4805 = vadd.f32 %v4790, %v4802
        %v4806 = vadd.f32 %v4791, %v4802
        %v4807 = vadd.f32 %v4792, %v4802
        %v4808 = vadd.f32 %v4793, %v4802
        %v4809 = vadd.f32 %v4794, %v4802
        %v4810 = vadd.f32 %v4795, %v4802
        %v4811 = vadd.f32 %v4796, %v4802
        %v4812 = vmin.f32 %v4804, 20.0
        %v4813 = vmin.f32 %v4805, 20.0
        %v4814 = vmin.f32 %v4806, 20.0
        %v4815 = vmin.f32 %v4807, 20.0
        %v4816 = vmin.f32 %v4808, 20.0
        %v4817 = vmin.f32 %v4809, 20.0
        %v4818 = vmin.f32 %v4810, 20.0
        %v4819 = vmin.f32 %v4811, 20.0
        %v4820 = vmul.f32 %v4812, 1.442695
        %v4821 = vpow.pop %v4820
        %v4822 = vmul.f32 %v4813, 1.442695
        %v4823 = vpow.pop %v4822
        %v4824 = vmul.f32 %v4814, 1.442695
        %v4825 = vpow.pop %v4824
        %v4826 = vmul.f32 %v4815, 1.442695
        %v4827 = vpow.pop %v4826
        %v4828 = vmul.f32 %v4816, 1.442695
        %v4829 = vpow.pop %v4828
        %v4830 = vmul.f32 %v4817, 1.442695
        %v4831 = vpow.pop %v4830
        %v4832 = vmul.f32 %v4818, 1.442695
        %v4833 = vpow.pop %v4832
        %v4834 = vmul.f32 %v4819, 1.442695
        %v4835 = vpow.pop %v4834
        %v4836 = vadd.f32 %v4821, 1.0
        %v4837 = vadd.f32 %v4823, 1.0
        %v4838 = vadd.f32 %v4825, 1.0
        %v4839 = vadd.f32 %v4827, 1.0
        %v4840 = vadd.f32 %v4829, 1.0
        %v4841 = vadd.f32 %v4831, 1.0
        %v4842 = vadd.f32 %v4833, 1.0
        %v4843 = vadd.f32 %v4835, 1.0
        %v4844 = vmul.f32 %v4836, %v4836
        %v4845 = vmul.f32 %v4837, %v4837
        %v4846 = vmul.f32 %v4838, %v4838
        %v4847 = vmul.f32 %v4839, %v4839
        %v4848 = vmul.f32 %v4840, %v4840
        %v4849 = vmul.f32 %v4841, %v4841
        %v4850 = vmul.f32 %v4842, %v4842
        %v4851 = vmul.f32 %v4843, %v4843
        %v4852 = vsub.f32 %v4844, 1.0
        %v4853 = vsub.f32 %v4845, 1.0
        %v4854 = vsub.f32 %v4846, 1.0
        %v4855 = vsub.f32 %v4847, 1.0
        %v4856 = vsub.f32 %v4848, 1.0
        %v4857 = vsub.f32 %v4849, 1.0
        %v4858 = vsub.f32 %v4850, 1.0
        %v4859 = vsub.f32 %v4851, 1.0
        %v4860 = vmul.f32 %v4804, %v4852
        %v4861 = vmul.f32 %v4805, %v4853
        %v4862 = vmul.f32 %v4806, %v4854
        %v4863 = vmul.f32 %v4807, %v4855
        %v4864 = vmul.f32 %v4808, %v4856
        %v4865 = vmul.f32 %v4809, %v4857
        %v4866 = vmul.f32 %v4810, %v4858
        %v4867 = vmul.f32 %v4811, %v4859
        %v4868 = vadd.f32 %v4844, 1.0
        %v4869 = vadd.f32 %v4845, 1.0
        %v4870 = vadd.f32 %v4846, 1.0
        %v4871 = vadd.f32 %v4847, 1.0
        %v4872 = vadd.f32 %v4848, 1.0
        %v4873 = vadd.f32 %v4849, 1.0
        %v4874 = vadd.f32 %v4850, 1.0
        %v4875 = vadd.f32 %v4851, 1.0
        %v4876 = vrcp.pop %v4868
        %v4877 = vrcp.pop %v4869
        %v4878 = vrcp.pop %v4870
        %v4879 = vrcp.pop %v4871
        %v4880 = vrcp.pop %v4872
        %v4881 = vrcp.pop %v4873
        %v4882 = vrcp.pop %v4874
        %v4883 = vrcp.pop %v4875
        %v4884 = vmul.f32 %v4860, %v4876
        %v4885 = vmul.f32 %v4861, %v4877
        %v4886 = vmul.f32 %v4862, %v4878
        %v4887 = vmul.f32 %v4863, %v4879
        %v4888 = vmul.f32 %v4864, %v4880
        %v4889 = vmul.f32 %v4865, %v4881
        %v4890 = vmul.f32 %v4866, %v4882
        %v4891 = vmul.f32 %v4867, %v4883
        %v4900 = vadd.f32 %v4884, %v3238
        %v4901 = vadd.f32 %v4885, %v3240
        %v4902 = vadd.f32 %v4886, %v3242
        %v4903 = vadd.f32 %v4887, %v3244
        %v4904 = vadd.f32 %v4888, %v3246
        %v4905 = vadd.f32 %v4889, %v3248
        %v4906 = vadd.f32 %v4890, %v3250
        %v4907 = vadd.f32 %v4891, %v3252
        %v4908 = vld [vmem:[%s11] sm:$0xff]
        %v4909 = vld [vmem:[%s11 + $0x8] sm:$0xff]
        %v4910 = vld [vmem:[%s11 + $0x10] sm:$0xff]
        %v4911 = vld [vmem:[%s11 + $0x18] sm:$0xff]
        %v4912 = vld [vmem:[%s11 + $0x20] sm:$0xff]
        %v4913 = vld [vmem:[%s11 + $0x28] sm:$0xff]
        %v4914 = vld [vmem:[%s11 + $0x30] sm:$0xff]
        %v4915 = vld [vmem:[%s11 + $0x38] sm:$0xff]
        %v4916 = vld [vmem:[%s12] sm:$0x1]
        %v4918 = vlaneseq
        %v4919 = vshrl.u32 %v4918, 7
        %v4920 = vsub.s32 0, %v4919
        %v4921 = vrot.slane %v4916, %v4920
        %v4924 = vsel %vm3004, %v4900, 0
        %v4927 = vsel %vm3004, %v4901, 0
        %v4930 = vsel %vm3004, %v4902, 0
        %v4933 = vsel %vm3004, %v4903, 0
        %v4936 = vsel %vm3004, %v4904, 0
        %v4939 = vsel %vm3004, %v4905, 0
        %v4942 = vsel %vm3004, %v4906, 0
        %v4945 = vsel %vm3004, %v4907, 0
        %4947 = vmatprep.subr.mxu0 0.0
        %4948 = vmatpush1.msra.mxu0 %v4908
        %4949 = vmatprep.subr.mxu0 0.0
        %4950 = vmatpush1.msra.mxu0 %v4909
        %4951 = vmatprep.subr.mxu0 0.0
        %4952 = vmatpush1.msra.mxu0 %v4910
        %4953 = vmatprep.subr.mxu0 0.0
        %4954 = vmatpush1.msra.mxu0 %v4911
        %4955 = vmatprep.subr.mxu0 0.0
        %4956 = vmatpush1.msra.mxu0 %v4912
        %4957 = vmatprep.subr.mxu0 0.0
        %4958 = vmatpush1.msra.mxu0 %v4913
        %4959 = vmatprep.subr.mxu0 0.0
        %4960 = vmatpush1.msra.mxu0 %v4914
        %4961 = vmatprep.subr.mxu0 0.0
        %4962 = vmatpush1.msra.mxu0 %v4915
        %4963 = vmatprep.subr.mxu0 0.0
        %4964 = vmatpush1.msra.mxu0 0.0
        %4965 = vmatprep.subr.mxu0 0.0
        %4966 = vmatpush1.msra.mxu0 0.0
        %4967 = vmatprep.subr.mxu0 0.0
        %4968 = vmatpush1.msra.mxu0 0.0
        %4969 = vmatprep.subr.mxu0 0.0
        %4970 = vmatpush1.msra.mxu0 0.0
        %4971 = vmatprep.subr.mxu0 0.0
        %4972 = vmatpush1.msra.mxu0 0.0
        %4973 = vmatprep.subr.mxu0 0.0
        %4974 = vmatpush1.msra.mxu0 0.0
        %4975 = vmatprep.subr.mxu0 0.0
        %4976 = vmatpush1.msra.mxu0 0.0
        %4977 = vmatprep.subr.mxu0 0.0
        %4978 = vmatpush1.msra.mxu0 0.0
        %4979 = vmatprep.subr.mxu0 0.0
        %4980 = vmatpush1.msra.mxu0 0.0
        %4981 = vmatprep.subr.mxu0 0.0
        %4982 = vmatpush1.msra.mxu0 0.0
        %4983 = vmatprep.subr.mxu0 0.0
        %4984 = vmatpush1.msra.mxu0 0.0
        %4985 = vmatprep.subr.mxu0 0.0
        %4986 = vmatpush1.msra.mxu0 0.0
        %4987 = vmatprep.subr.mxu0 0.0
        %4988 = vmatpush1.msra.mxu0 0.0
        %4989 = vmatprep.subr.mxu0 0.0
        %4990 = vmatpush1.msra.mxu0 0.0
        %4991 = vmatprep.subr.mxu0 0.0
        %4992 = vmatpush1.msra.mxu0 0.0
        %4993 = vmatprep.subr.mxu0 0.0
        %4994 = vmatpush1.msra.mxu0 0.0
        %4995 = vmatprep.subr.mxu0 0.0
        %4996 = vmatpush1.msra.mxu0 0.0
        %4997 = vmatprep.subr.mxu0 0.0
        %4998 = vmatpush1.msra.mxu0 0.0
        %4999 = vmatprep.subr.mxu0 0.0
        %5000 = vmatpush1.msra.mxu0 0.0
        %5001 = vmatprep.subr.mxu0 0.0
        %5002 = vmatpush1.msra.mxu0 0.0
        %5003 = vmatprep.subr.mxu0 0.0
        %5004 = vmatpush1.msra.mxu0 0.0
        %5005 = vmatprep.subr.mxu0 0.0
        %5006 = vmatpush1.msra.mxu0 0.0
        %5007 = vmatprep.subr.mxu0 0.0
        %5008 = vmatpush1.msra.mxu0 0.0
        %5009 = vmatprep.subr.mxu0 0.0
        %5010 = vmatpush1.msra.mxu0 0.0
        %5011 = vmatprep.mubr.f32.mxu0 0.0
        %5012 = vmatmul.mubr.f32.gmra.mrb[0].mxu0 %v4924
        %v5013 = vpop.f32.mrb[0].mxu0
        %v5014 = vadd.f32 %v4921, %v5013
        %v5015 = vpop.f32.mrb[0].mxu0
        %5016 = vmatprep.mubr.f32.mxu0 0.0
        %5017 = vmatmul.mubr.f32.gmra.mrb[0].mxu0 %v4927
        %v5018 = vpop.f32.mrb[0].mxu0
        %v5019 = vadd.f32 %v4921, %v5018
        %v5020 = vpop.f32.mrb[0].mxu0
        %5021 = vmatprep.mubr.f32.mxu0 0.0
        %5022 = vmatmul.mubr.f32.gmra.mrb[0].mxu0 %v4930
        %v5023 = vpop.f32.mrb[0].mxu0
        %v5024 = vadd.f32 %v4921, %v5023
        %v5025 = vpop.f32.mrb[0].mxu0
        %5026 = vmatprep.mubr.f32.mxu0 0.0
        %5027 = vmatmul.mubr.f32.gmra.mrb[0].mxu0 %v4933
        %v5028 = vpop.f32.mrb[0].mxu0
        %v5029 = vadd.f32 %v4921, %v5028
        %v5030 = vpop.f32.mrb[0].mxu0
        %5031 = vmatprep.mubr.f32.mxu0 0.0
        %5032 = vmatmul.mubr.f32.gmra.mrb[0].mxu0 %v4936
        %v5033 = vpop.f32.mrb[0].mxu0
        %v5034 = vadd.f32 %v4921, %v5033
        %v5035 = vpop.f32.mrb[0].mxu0
        %5036 = vmatprep.mubr.f32.mxu0 0.0
        %5037 = vmatmul.mubr.f32.gmra.mrb[0].mxu0 %v4939
        %v5038 = vpop.f32.mrb[0].mxu0
        %v5039 = vadd.f32 %v4921, %v5038
        %v5040 = vpop.f32.mrb[0].mxu0
        %5041 = vmatprep.mubr.f32.mxu0 0.0
        %5042 = vmatmul.mubr.f32.gmra.mrb[0].mxu0 %v4942
        %v5043 = vpop.f32.mrb[0].mxu0
        %v5044 = vadd.f32 %v4921, %v5043
        %v5045 = vpop.f32.mrb[0].mxu0
        %5046 = vmatprep.mubr.f32.mxu0 0.0
        %5047 = vmatmul.mubr.f32.gmra.mrb[0].mxu0 %v4945
        %v5048 = vpop.f32.mrb[0].mxu0
        %v5049 = vadd.f32 %v4921, %v5048
        %v5050 = vpop.f32.mrb[0].mxu0
        %5051 = vdwg.mxu0
        %v5052 = vmin.f32 %v5014, 20.0
        %v5053 = vmin.f32 %v5019, 20.0
        %v5054 = vmin.f32 %v5024, 20.0
        %v5055 = vmin.f32 %v5029, 20.0
        %v5056 = vmin.f32 %v5034, 20.0
        %v5057 = vmin.f32 %v5039, 20.0
        %v5058 = vmin.f32 %v5044, 20.0
        %v5059 = vmin.f32 %v5049, 20.0
        %v5060 = vmul.f32 %v5052, 1.442695
        %v5061 = vpow.pop %v5060
        %v5062 = vmul.f32 %v5053, 1.442695
        %v5063 = vpow.pop %v5062
        %v5064 = vmul.f32 %v5054, 1.442695
        %v5065 = vpow.pop %v5064
        %v5066 = vmul.f32 %v5055, 1.442695
        %v5067 = vpow.pop %v5066
        %v5068 = vmul.f32 %v5056, 1.442695
        %v5069 = vpow.pop %v5068
        %v5070 = vmul.f32 %v5057, 1.442695
        %v5071 = vpow.pop %v5070
        %v5072 = vmul.f32 %v5058, 1.442695
        %v5073 = vpow.pop %v5072
        %v5074 = vmul.f32 %v5059, 1.442695
        %v5075 = vpow.pop %v5074
        %v5076 = vadd.f32 %v5061, 1.0
        %v5077 = vadd.f32 %v5063, 1.0
        %v5078 = vadd.f32 %v5065, 1.0
        %v5079 = vadd.f32 %v5067, 1.0
        %v5080 = vadd.f32 %v5069, 1.0
        %v5081 = vadd.f32 %v5071, 1.0
        %v5082 = vadd.f32 %v5073, 1.0
        %v5083 = vadd.f32 %v5075, 1.0
        %v5084 = vmul.f32 %v5076, %v5076
        %v5085 = vmul.f32 %v5077, %v5077
        %v5086 = vmul.f32 %v5078, %v5078
        %v5087 = vmul.f32 %v5079, %v5079
        %v5088 = vmul.f32 %v5080, %v5080
        %v5089 = vmul.f32 %v5081, %v5081
        %v5090 = vmul.f32 %v5082, %v5082
        %v5091 = vmul.f32 %v5083, %v5083
        %v5092 = vsub.f32 %v5084, 1.0
        %v5093 = vsub.f32 %v5085, 1.0
        %v5094 = vsub.f32 %v5086, 1.0
        %v5095 = vsub.f32 %v5087, 1.0
        %v5096 = vsub.f32 %v5088, 1.0
        %v5097 = vsub.f32 %v5089, 1.0
        %v5098 = vsub.f32 %v5090, 1.0
        %v5099 = vsub.f32 %v5091, 1.0
        %v5100 = vmul.f32 %v5014, %v5092
        %v5101 = vmul.f32 %v5019, %v5093
        %v5102 = vmul.f32 %v5024, %v5094
        %v5103 = vmul.f32 %v5029, %v5095
        %v5104 = vmul.f32 %v5034, %v5096
        %v5105 = vmul.f32 %v5039, %v5097
        %v5106 = vmul.f32 %v5044, %v5098
        %v5107 = vmul.f32 %v5049, %v5099
        %v5108 = vadd.f32 %v5084, 1.0
        %v5109 = vadd.f32 %v5085, 1.0
        %v5110 = vadd.f32 %v5086, 1.0
        %v5111 = vadd.f32 %v5087, 1.0
        %v5112 = vadd.f32 %v5088, 1.0
        %v5113 = vadd.f32 %v5089, 1.0
        %v5114 = vadd.f32 %v5090, 1.0
        %v5115 = vadd.f32 %v5091, 1.0
        %v5116 = vrcp.pop %v5108
        %v5117 = vrcp.pop %v5109
        %v5118 = vrcp.pop %v5110
        %v5119 = vrcp.pop %v5111
        %v5120 = vrcp.pop %v5112
        %v5121 = vrcp.pop %v5113
        %v5122 = vrcp.pop %v5114
        %v5123 = vrcp.pop %v5115
        %v5124 = vmul.f32 %v5100, %v5116
        %v5125 = vmul.f32 %v5101, %v5117
        %v5126 = vmul.f32 %v5102, %v5118
        %v5127 = vmul.f32 %v5103, %v5119
        %v5128 = vmul.f32 %v5104, %v5120
        %v5129 = vmul.f32 %v5105, %v5121
        %v5130 = vmul.f32 %v5106, %v5122
        %v5131 = vmul.f32 %v5107, %v5123
        %v5132 = vld [vmem:[%s13] sm:$0xff]
        %v5133 = vld [vmem:[%s13 + $0x8] sm:$0xff]
        %v5134 = vld [vmem:[%s13 + $0x10] sm:$0xff]
        %v5135 = vld [vmem:[%s13 + $0x18] sm:$0xff]
        %v5136 = vld [vmem:[%s13 + $0x20] sm:$0xff]
        %v5137 = vld [vmem:[%s13 + $0x28] sm:$0xff]
        %v5138 = vld [vmem:[%s13 + $0x30] sm:$0xff]
        %v5139 = vld [vmem:[%s13 + $0x38] sm:$0xff]
        %v5140 = vld [vmem:[%s14] sm:$0xff]
        %v5141 = vld [vmem:[%s14 + $0x8] sm:$0xff]
        %v5142 = vld [vmem:[%s14 + $0x10] sm:$0xff]
        %v5143 = vld [vmem:[%s14 + $0x18] sm:$0xff]
        %v5144 = vld [vmem:[%s14 + $0x20] sm:$0xff]
        %v5145 = vld [vmem:[%s14 + $0x28] sm:$0xff]
        %v5146 = vld [vmem:[%s14 + $0x30] sm:$0xff]
        %v5147 = vld [vmem:[%s14 + $0x38] sm:$0xff]
        %v5148 = vsel %vm3004, %v3206, 0
        %v5150 = vsel %vm3004, %v3207, 0
        %v5152 = vsel %vm3004, %v3208, 0
        %v5154 = vsel %vm3004, %v3209, 0
        %v5156 = vsel %vm3004, %v3210, 0
        %v5158 = vsel %vm3004, %v3211, 0
        %v5160 = vsel %vm3004, %v3212, 0
        %v5162 = vsel %vm3004, %v3213, 0
        %5164 = vmatprep.subr.mxu0 0.0
        %5165 = vmatpush1.msra.mxu0 %v5140
        %5166 = vmatprep.subr.mxu0 0.0
        %5167 = vmatpush1.msra.mxu0 %v5141
        %5168 = vmatprep.subr.mxu0 0.0
        %5169 = vmatpush1.msra.mxu0 %v5142
        %5170 = vmatprep.subr.mxu0 0.0
        %5171 = vmatpush1.msra.mxu0 %v5143
        %5172 = vmatprep.subr.mxu0 0.0
        %5173 = vmatpush1.msra.mxu0 %v5144
        %5174 = vmatprep.subr.mxu0 0.0
        %5175 = vmatpush1.msra.mxu0 %v5145
        %5176 = vmatprep.subr.mxu0 0.0
        %5177 = vmatpush1.msra.mxu0 %v5146
        %5178 = vmatprep.subr.mxu0 0.0
        %5179 = vmatpush1.msra.mxu0 %v5147
        %5180 = vmatprep.subr.mxu0 0.0
        %5181 = vmatpush1.msra.mxu0 0.0
        %5182 = vmatprep.subr.mxu0 0.0
        %5183 = vmatpush1.msra.mxu0 0.0
        %5184 = vmatprep.subr.mxu0 0.0
        %5185 = vmatpush1.msra.mxu0 0.0
        %5186 = vmatprep.subr.mxu0 0.0
        %5187 = vmatpush1.msra.mxu0 0.0
        %5188 = vmatprep.subr.mxu0 0.0
        %5189 = vmatpush1.msra.mxu0 0.0
        %5190 = vmatprep.subr.mxu0 0.0
        %5191 = vmatpush1.msra.mxu0 0.0
        %5192 = vmatprep.subr.mxu0 0.0
        %5193 = vmatpush1.msra.mxu0 0.0
        %5194 = vmatprep.subr.mxu0 0.0
        %5195 = vmatpush1.msra.mxu0 0.0
        %5196 = vmatprep.subr.mxu0 0.0
        %5197 = vmatpush1.msra.mxu0 0.0
        %5198 = vmatprep.subr.mxu0 0.0
        %5199 = vmatpush1.msra.mxu0 0.0
        %5200 = vmatprep.subr.mxu0 0.0
        %5201 = vmatpush1.msra.mxu0 0.0
        %5202 = vmatprep.subr.mxu0 0.0
        %5203 = vmatpush1.msra.mxu0 0.0
        %5204 = vmatprep.subr.mxu0 0.0
        %5205 = vmatpush1.msra.mxu0 0.0
        %5206 = vmatprep.subr.mxu0 0.0
        %5207 = vmatpush1.msra.mxu0 0.0
        %5208 = vmatprep.subr.mxu0 0.0
        %5209 = vmatpush1.msra.mxu0 0.0
        %5210 = vmatprep.subr.mxu0 0.0
        %5211 = vmatpush1.msra.mxu0 0.0
        %5212 = vmatprep.subr.mxu0 0.0
        %5213 = vmatpush1.msra.mxu0 0.0
        %5214 = vmatprep.subr.mxu0 0.0
        %5215 = vmatpush1.msra.mxu0 0.0
        %5216 = vmatprep.subr.mxu0 0.0
        %5217 = vmatpush1.msra.mxu0 0.0
        %5218 = vmatprep.subr.mxu0 0.0
        %5219 = vmatpush1.msra.mxu0 0.0
        %5220 = vmatprep.subr.mxu0 0.0
        %5221 = vmatpush1.msra.mxu0 0.0
        %5222 = vmatprep.subr.mxu0 0.0
        %5223 = vmatpush1.msra.mxu0 0.0
        %5224 = vmatprep.subr.mxu0 0.0
        %5225 = vmatpush1.msra.mxu0 0.0
        %5226 = vmatprep.subr.mxu0 0.0
        %5227 = vmatpush1.msra.mxu0 0.0
        %5228 = vmatprep.mubr.f32.mxu0 0.0
        %5229 = vmatmul.mubr.f32.gmra.mrb[0].mxu0 %v5148
        %v5230 = vpop.f32.mrb[0].mxu0
        %v5231 = vadd.f32 0.0, %v5230
        %v5232 = vpop.f32.mrb[0].mxu0
        %5233 = vmatprep.mubr.f32.mxu0 0.0
        %5234 = vmatmul.mubr.f32.gmra.mrb[0].mxu0 %v5150
        %v5235 = vpop.f32.mrb[0].mxu0
        %v5236 = vadd.f32 0.0, %v5235
        %v5237 = vpop.f32.mrb[0].mxu0
        %5238 = vmatprep.mubr.f32.mxu0 0.0
        %5239 = vmatmul.mubr.f32.gmra.mrb[0].mxu0 %v5152
        %v5240 = vpop.f32.mrb[0].mxu0
        %v5241 = vadd.f32 0.0, %v5240
        %v5242 = vpop.f32.mrb[0].mxu0
        %5243 = vmatprep.mubr.f32.mxu0 0.0
        %5244 = vmatmul.mubr.f32.gmra.mrb[0].mxu0 %v5154
        %v5245 = vpop.f32.mrb[0].mxu0
        %v5246 = vadd.f32 0.0, %v5245
        %v5247 = vpop.f32.mrb[0].mxu0
        %5248 = vmatprep.mubr.f32.mxu0 0.0
        %5249 = vmatmul.mubr.f32.gmra.mrb[0].mxu0 %v5156
        %v5250 = vpop.f32.mrb[0].mxu0
        %v5251 = vadd.f32 0.0, %v5250
        %v5252 = vpop.f32.mrb[0].mxu0
        %5253 = vmatprep.mubr.f32.mxu0 0.0
        %5254 = vmatmul.mubr.f32.gmra.mrb[0].mxu0 %v5158
        %v5255 = vpop.f32.mrb[0].mxu0
        %v5256 = vadd.f32 0.0, %v5255
        %v5257 = vpop.f32.mrb[0].mxu0
        %5258 = vmatprep.mubr.f32.mxu0 0.0
        %5259 = vmatmul.mubr.f32.gmra.mrb[0].mxu0 %v5160
        %v5260 = vpop.f32.mrb[0].mxu0
        %v5261 = vadd.f32 0.0, %v5260
        %v5262 = vpop.f32.mrb[0].mxu0
        %5263 = vmatprep.mubr.f32.mxu0 0.0
        %5264 = vmatmul.mubr.f32.gmra.mrb[0].mxu0 %v5162
        %v5265 = vpop.f32.mrb[0].mxu0
        %v5266 = vadd.f32 0.0, %v5265
        %v5267 = vpop.f32.mrb[0].mxu0
        %5268 = vdwg.mxu0
        %v5270 = vsel %vm3004, %v5124, 0
        %v5273 = vsel %vm3004, %v5125, 0
        %v5276 = vsel %vm3004, %v5126, 0
        %v5279 = vsel %vm3004, %v5127, 0
        %v5282 = vsel %vm3004, %v5128, 0
        %v5285 = vsel %vm3004, %v5129, 0
        %v5288 = vsel %vm3004, %v5130, 0
        %v5291 = vsel %vm3004, %v5131, 0
        %5293 = vmatprep.subr.mxu0 0.0
        %5294 = vmatpush1.msra.mxu0 %v5132
        %5295 = vmatprep.subr.mxu0 0.0
        %5296 = vmatpush1.msra.mxu0 %v5133
        %5297 = vmatprep.subr.mxu0 0.0
        %5298 = vmatpush1.msra.mxu0 %v5134
        %5299 = vmatprep.subr.mxu0 0.0
        %5300 = vmatpush1.msra.mxu0 %v5135
        %5301 = vmatprep.subr.mxu0 0.0
        %5302 = vmatpush1.msra.mxu0 %v5136
        %5303 = vmatprep.subr.mxu0 0.0
        %5304 = vmatpush1.msra.mxu0 %v5137
        %5305 = vmatprep.subr.mxu0 0.0
        %5306 = vmatpush1.msra.mxu0 %v5138
        %5307 = vmatprep.subr.mxu0 0.0
        %5308 = vmatpush1.msra.mxu0 %v5139
        %5309 = vmatprep.subr.mxu0 0.0
        %5310 = vmatpush1.msra.mxu0 0.0
        %5311 = vmatprep.subr.mxu0 0.0
        %5312 = vmatpush1.msra.mxu0 0.0
        %5313 = vmatprep.subr.mxu0 0.0
        %5314 = vmatpush1.msra.mxu0 0.0
        %5315 = vmatprep.subr.mxu0 0.0
        %5316 = vmatpush1.msra.mxu0 0.0
        %5317 = vmatprep.subr.mxu0 0.0
        %5318 = vmatpush1.msra.mxu0 0.0
        %5319 = vmatprep.subr.mxu0 0.0
        %5320 = vmatpush1.msra.mxu0 0.0
        %5321 = vmatprep.subr.mxu0 0.0
        %5322 = vmatpush1.msra.mxu0 0.0
        %5323 = vmatprep.subr.mxu0 0.0
        %5324 = vmatpush1.msra.mxu0 0.0
        %5325 = vmatprep.subr.mxu0 0.0
        %5326 = vmatpush1.msra.mxu0 0.0
        %5327 = vmatprep.subr.mxu0 0.0
        %5328 = vmatpush1.msra.mxu0 0.0
        %5329 = vmatprep.subr.mxu0 0.0
        %5330 = vmatpush1.msra.mxu0 0.0
        %5331 = vmatprep.subr.mxu0 0.0
        %5332 = vmatpush1.msra.mxu0 0.0
        %5333 = vmatprep.subr.mxu0 0.0
        %5334 = vmatpush1.msra.mxu0 0.0
        %5335 = vmatprep.subr.mxu0 0.0
        %5336 = vmatpush1.msra.mxu0 0.0
        %5337 = vmatprep.subr.mxu0 0.0
        %5338 = vmatpush1.msra.mxu0 0.0
        %5339 = vmatprep.subr.mxu0 0.0
        %5340 = vmatpush1.msra.mxu0 0.0
        %5341 = vmatprep.subr.mxu0 0.0
        %5342 = vmatpush1.msra.mxu0 0.0
        %5343 = vmatprep.subr.mxu0 0.0
        %5344 = vmatpush1.msra.mxu0 0.0
        %5345 = vmatprep.subr.mxu0 0.0
        %5346 = vmatpush1.msra.mxu0 0.0
        %5347 = vmatprep.subr.mxu0 0.0
        %5348 = vmatpush1.msra.mxu0 0.0
        %5349 = vmatprep.subr.mxu0 0.0
        %5350 = vmatpush1.msra.mxu0 0.0
        %5351 = vmatprep.subr.mxu0 0.0
        %5352 = vmatpush1.msra.mxu0 0.0
        %5353 = vmatprep.subr.mxu0 0.0
        %5354 = vmatpush1.msra.mxu0 0.0
        %5355 = vmatprep.subr.mxu0 0.0
        %5356 = vmatpush1.msra.mxu0 0.0
        %5357 = vmatprep.mubr.f32.mxu0 0.0
        %5358 = vmatmul.mubr.f32.gmra.mrb[0].mxu0 %v5270
        %v5359 = vpop.f32.mrb[0].mxu0
        %v5360 = vadd.f32 %v5231, %v5359
        %v5361 = vpop.f32.mrb[0].mxu0
        %5362 = vmatprep.mubr.f32.mxu0 0.0
        %5363 = vmatmul.mubr.f32.gmra.mrb[0].mxu0 %v5273
        %v5364 = vpop.f32.mrb[0].mxu0
        %v5365 = vadd.f32 %v5236, %v5364
        %v5366 = vpop.f32.mrb[0].mxu0
        %5367 = vmatprep.mubr.f32.mxu0 0.0
        %5368 = vmatmul.mubr.f32.gmra.mrb[0].mxu0 %v5276
        %v5369 = vpop.f32.mrb[0].mxu0
        %v5370 = vadd.f32 %v5241, %v5369
        %v5371 = vpop.f32.mrb[0].mxu0
        %5372 = vmatprep.mubr.f32.mxu0 0.0
        %5373 = vmatmul.mubr.f32.gmra.mrb[0].mxu0 %v5279
        %v5374 = vpop.f32.mrb[0].mxu0
        %v5375 = vadd.f32 %v5246, %v5374
        %v5376 = vpop.f32.mrb[0].mxu0
        %5377 = vmatprep.mubr.f32.mxu0 0.0
        %5378 = vmatmul.mubr.f32.gmra.mrb[0].mxu0 %v5282
        %v5379 = vpop.f32.mrb[0].mxu0
        %v5380 = vadd.f32 %v5251, %v5379
        %v5381 = vpop.f32.mrb[0].mxu0
        %5382 = vmatprep.mubr.f32.mxu0 0.0
        %5383 = vmatmul.mubr.f32.gmra.mrb[0].mxu0 %v5285
        %v5384 = vpop.f32.mrb[0].mxu0
        %v5385 = vadd.f32 %v5256, %v5384
        %v5386 = vpop.f32.mrb[0].mxu0
        %5387 = vmatprep.mubr.f32.mxu0 0.0
        %5388 = vmatmul.mubr.f32.gmra.mrb[0].mxu0 %v5288
        %v5389 = vpop.f32.mrb[0].mxu0
        %v5390 = vadd.f32 %v5261, %v5389
        %v5391 = vpop.f32.mrb[0].mxu0
        %5392 = vmatprep.mubr.f32.mxu0 0.0
        %5393 = vmatmul.mubr.f32.gmra.mrb[0].mxu0 %v5291
        %v5394 = vpop.f32.mrb[0].mxu0
        %v5395 = vadd.f32 %v5266, %v5394
        %v5396 = vpop.f32.mrb[0].mxu0
        %5397 = vdwg.mxu0
        %v5398 = vld [vmem:[%s15] sm:$0x1]
        %v5400 = vlaneseq
        %v5401 = vshrl.u32 %v5400, 7
        %v5402 = vsub.s32 0, %v5401
        %v5403 = vrot.slane %v5398, %v5402
        %v5405 = vadd.f32 %v5360, %v5403
        %v5406 = vadd.f32 %v5365, %v5403
        %v5407 = vadd.f32 %v5370, %v5403
        %v5408 = vadd.f32 %v5375, %v5403
        %v5409 = vadd.f32 %v5380, %v5403
        %v5410 = vadd.f32 %v5385, %v5403
        %v5411 = vadd.f32 %v5390, %v5403
        %v5412 = vadd.f32 %v5395, %v5403
        %v5413 = vmin.f32 %v5405, 20.0
        %v5414 = vmin.f32 %v5406, 20.0
        %v5415 = vmin.f32 %v5407, 20.0
        %v5416 = vmin.f32 %v5408, 20.0
        %v5417 = vmin.f32 %v5409, 20.0
        %v5418 = vmin.f32 %v5410, 20.0
        %v5419 = vmin.f32 %v5411, 20.0
        %v5420 = vmin.f32 %v5412, 20.0
        %v5421 = vmul.f32 %v5413, 1.442695
        %v5422 = vpow.pop %v5421
        %v5423 = vmul.f32 %v5414, 1.442695
        %v5424 = vpow.pop %v5423
        %v5425 = vmul.f32 %v5415, 1.442695
        %v5426 = vpow.pop %v5425
        %v5427 = vmul.f32 %v5416, 1.442695
        %v5428 = vpow.pop %v5427
        %v5429 = vmul.f32 %v5417, 1.442695
        %v5430 = vpow.pop %v5429
        %v5431 = vmul.f32 %v5418, 1.442695
        %v5432 = vpow.pop %v5431
        %v5433 = vmul.f32 %v5419, 1.442695
        %v5434 = vpow.pop %v5433
        %v5435 = vmul.f32 %v5420, 1.442695
        %v5436 = vpow.pop %v5435
        %v5437 = vadd.f32 %v5422, 1.0
        %v5438 = vadd.f32 %v5424, 1.0
        %v5439 = vadd.f32 %v5426, 1.0
        %v5440 = vadd.f32 %v5428, 1.0
        %v5441 = vadd.f32 %v5430, 1.0
        %v5442 = vadd.f32 %v5432, 1.0
        %v5443 = vadd.f32 %v5434, 1.0
        %v5444 = vadd.f32 %v5436, 1.0
        %v5445 = vmul.f32 %v5437, %v5437
        %v5446 = vmul.f32 %v5438, %v5438
        %v5447 = vmul.f32 %v5439, %v5439
        %v5448 = vmul.f32 %v5440, %v5440
        %v5449 = vmul.f32 %v5441, %v5441
        %v5450 = vmul.f32 %v5442, %v5442
        %v5451 = vmul.f32 %v5443, %v5443
        %v5452 = vmul.f32 %v5444, %v5444
        %v5453 = vsub.f32 %v5445, 1.0
        %v5454 = vsub.f32 %v5446, 1.0
        %v5455 = vsub.f32 %v5447, 1.0
        %v5456 = vsub.f32 %v5448, 1.0
        %v5457 = vsub.f32 %v5449, 1.0
        %v5458 = vsub.f32 %v5450, 1.0
        %v5459 = vsub.f32 %v5451, 1.0
        %v5460 = vsub.f32 %v5452, 1.0
        %v5461 = vmul.f32 %v5405, %v5453
        %v5462 = vmul.f32 %v5406, %v5454
        %v5463 = vmul.f32 %v5407, %v5455
        %v5464 = vmul.f32 %v5408, %v5456
        %v5465 = vmul.f32 %v5409, %v5457
        %v5466 = vmul.f32 %v5410, %v5458
        %v5467 = vmul.f32 %v5411, %v5459
        %v5468 = vmul.f32 %v5412, %v5460
        %v5469 = vadd.f32 %v5445, 1.0
        %v5470 = vadd.f32 %v5446, 1.0
        %v5471 = vadd.f32 %v5447, 1.0
        %v5472 = vadd.f32 %v5448, 1.0
        %v5473 = vadd.f32 %v5449, 1.0
        %v5474 = vadd.f32 %v5450, 1.0
        %v5475 = vadd.f32 %v5451, 1.0
        %v5476 = vadd.f32 %v5452, 1.0
        %v5477 = vrcp.pop %v5469
        %v5478 = vrcp.pop %v5470
        %v5479 = vrcp.pop %v5471
        %v5480 = vrcp.pop %v5472
        %v5481 = vrcp.pop %v5473
        %v5482 = vrcp.pop %v5474
        %v5483 = vrcp.pop %v5475
        %v5484 = vrcp.pop %v5476
        %v5485 = vmul.f32 %v5461, %v5477
        %v5486 = vmul.f32 %v5462, %v5478
        %v5487 = vmul.f32 %v5463, %v5479
        %v5488 = vmul.f32 %v5464, %v5480
        %v5489 = vmul.f32 %v5465, %v5481
        %v5490 = vmul.f32 %v5466, %v5482
        %v5491 = vmul.f32 %v5467, %v5483
        %v5492 = vmul.f32 %v5468, %v5484
        %5493 = vst.msk [vmem:[%s514] sm:$0xff] %vm3004, %v5485
        %5494 = vst.msk [vmem:[%s514 + $0x8] sm:$0xff] %vm3004, %v5486
        %5495 = vst.msk [vmem:[%s514 + $0x10] sm:$0xff] %vm3004, %v5487
        %5496 = vst.msk [vmem:[%s514 + $0x18] sm:$0xff] %vm3004, %v5488
        %5497 = vst.msk [vmem:[%s514 + $0x20] sm:$0xff] %vm3004, %v5489
        %5498 = vst.msk [vmem:[%s514 + $0x28] sm:$0xff] %vm3004, %v5490
        %5499 = vst.msk [vmem:[%s514 + $0x30] sm:$0xff] %vm3004, %v5491
        %5500 = vst.msk [vmem:[%s514 + $0x38] sm:$0xff] %vm3004, %v5492
        %s5501 = sand.u32 %s379, 1
        %s5502 = scalar_lea.sflag [#allocation5], %s5501
        %s5503 = sand.u32 %s379, 1
        %s5504 = smul.addr %s5503, 64
        %s5505 = scalar_lea.vmem [#allocation4], %s5504
        // Predicated region
        $region85: #{downsample1_forward.1} parent=83 // pred_check
          %p5506 = pneg %p389
        $region86: #{downsample1_forward.1} parent=83 // pred_check_branch
          %5508 = sbr.rel (%p5506) target = $region88
        $region87: #{downsample1_forward.1} parent=83 // pred_region
          %s5510 = ssub.s32 1024, 1024
          %5511 = vsyncadd %s5502, %s5510
          %s5512 = smul.addr %s30, 8
          %s5513 = smul.addr %s5512, 128
          %s5514 = scalar_lea.hbm %s16, %s5513
          %s5515 = sshll.u32 %s5505, 4
          %s5516 = int_to_ptr.vmem [resolvable:$true] %s5515
          %5521 = dma.vmem_to_hbm [thread:$0]  %s5516, 1024, %s5514, %s5502, 128, 128, 8
        $region88: #{downsample1_forward.1} parent=83 // pred_fallthru
          _
      $region84: #{downsample1_forward.1} parent=5 // pred_fallthru
        _
      %p5522 = scmp.le.s32.totalorder 2, %s25
      // Predicated region
      $region89: #{downsample1_forward.1} parent=5 // pred_check
        %p5523 = pneg %p5522
      $region90: #{downsample1_forward.1} parent=5 // pred_check_branch
        %5525 = sbr.rel (%p5523) target = $region92
      $region91: #{downsample1_forward.1} parent=5 // pred_region
        %s5526 = ssub.s32 %s25, 2
        // Predicated region
        $region93: #{downsample1_forward.1} parent=91 // pred_check
          %p5527 = pneg %p395
        $region94: #{downsample1_forward.1} parent=91 // pred_check_branch
          %5529 = sbr.rel (%p5527) target = $region96
        $region95: #{downsample1_forward.1} parent=91 // pred_region
          %s5530 = sand.u32 %s380, 1
          %s5531 = scalar_lea.sflag [#allocation5], %s5530
          %s5532 = sand.u32 %s380, 1
          %s5533 = smul.addr %s5532, 64
          %s5534 = scalar_lea.vmem [#allocation4], %s5533
          %5535 = dma.done %s5531, 1024
        $region96: #{downsample1_forward.1} parent=91 // pred_fallthru
          _
      $region92: #{downsample1_forward.1} parent=5 // pred_fallthru
        _
    $region6: #{downsample1_forward.1} parent=1 // loop_footer
      %s29 = sadd.s32 1, %s25
    $region7: #{downsample1_forward.1} parent=1 // loop_footer_branch
      %24 = sbr.rel target = $region3
    $region8: #{downsample1_forward.1} parent=1 // loop_exit
      _
    %5536 = vsyncpa [#allocation5], 1
    %s5537 = scalar_lea.sflag [#allocation5], 1
    %5538 = vsyncpa %s5537, 1

</llo_original>
